<compile_context>
chip_gen: v6e
topology: v6e:2x2x1
jax: 0.10.0
libtpu: 0.0.40
codegen_flags: <defaults>
</compile_context>

<pallas_src>
from functools import partial

import jax
import jax.numpy as jnp
from jax.experimental import pallas as pl
from jax.experimental.pallas import tpu as pltpu


_INV_SQRT2 = 0.7071067811865476


# ------------------------------ Pallas kernel -------------------------------

def _mlp_channel_kernel(x_ref, w1_ref, b1_ref, w2_ref, b2_ref, o_ref, h_ref):
    # x_ref : (1, C, TT)   channel-major token tile (lanes = tokens, 128-dense)
    # w1_ref: (Hd, C) bf16     b1_ref: (Hd, 1) f32
    # w2_ref: (C, Hd) bf16     b2_ref: (C, 1)  f32
    # h_ref : VMEM scratch (Hd, TT) bf16 -- hidden activation stays on-chip
    x = x_ref[0].astype(jnp.bfloat16)                                  # (C, TT) bf16 MXU operand
    h = jnp.dot(w1_ref[...], x, preferred_element_type=jnp.float32)    # f32 accumulate
    h = h + b1_ref[...]
    # exact (erf) GELU in f32, identical to torch nn.GELU() default
    g = 0.5 * h * (1.0 + jax.lax.erf(h * _INV_SQRT2))
    h_ref[...] = g.astype(jnp.bfloat16)                                # bf16 hidden scratch
    o = jnp.dot(w2_ref[...], h_ref[...], preferred_element_type=jnp.float32)
    o_ref[0] = (o + b2_ref[...]).astype(o_ref.dtype)


# ------------------------------ tile selection --------------------------------

def _pick_token_tile(T, B, max_tile=8192):
    """Largest lane-dense (multiple of 128) divisor of T, preferring an even total
    grid-step count (v7x megacore).  Returns None if no lane-dense divisor exists
    (then the wrapper falls back to padding)."""
    cands = [d for d in range(128, min(T, max_tile) + 1, 128) if T % d == 0]
    if not cands:
        return None
    cands.sort(reverse=True)
    for tt in cands:
        if (B * (T // tt)) % 2 == 0:     # keep both TCs busy on v7x
            return tt
    return cands[0]


# ------------------------------ wrapper --------------------------------------

def mlp_channel(x, params, *, token_tile=None):
    """MlpChannel forward. x is NCDHW (B, C, D, H, W), exactly like the PyTorch module."""
    B, C, D, H, W = x.shape
    Hd = params["w1"].shape[0]                    # mlp_dim
    T = D * H * W
    xf = x.reshape(B, C, T)

    if token_tile is None:
        token_tile = _pick_token_tile(T, B)

    if token_tile is not None and T % token_tile == 0:
        TT = token_tile
        Tp = T
    else:
        # ragged fallback: pad tokens up to a lane-dense tile, slice afterwards.
        # (Padded tokens pass through GELU(b1) but are discarded by the slice.)
        TT = token_tile if token_tile is not None else 512
        Tp = ((T + TT - 1) // TT) * TT
        xf = jnp.pad(xf, ((0, 0), (0, 0), (0, Tp - T)))

    # Weights as bf16 MXU operands (f32 accumulation inside the kernel); biases f32.
    w1_bf = params["w1"].astype(jnp.bfloat16)
    w2_bf = params["w2"].astype(jnp.bfloat16)
    b1 = params["b1"].astype(jnp.float32).reshape(Hd, 1)
    b2 = params["b2"].astype(jnp.float32).reshape(C, 1)

    out = pl.pallas_call(
        _mlp_channel_kernel,
        out_shape=jax.ShapeDtypeStruct((B, C, Tp), x.dtype),
        grid=(B, Tp // TT),
        in_specs=[
            pl.BlockSpec((1, C, TT), lambda b, t: (b, 0, t)),
            pl.BlockSpec((Hd, C), lambda b, t: (0, 0)),
            pl.BlockSpec((Hd, 1), lambda b, t: (0, 0)),
            pl.BlockSpec((C, Hd), lambda b, t: (0, 0)),
            pl.BlockSpec((C, 1), lambda b, t: (0, 0)),
        ],
        out_specs=pl.BlockSpec((1, C, TT), lambda b, t: (b, 0, t)),
        scratch_shapes=[pltpu.VMEM((Hd, TT), jnp.bfloat16)],
        compiler_params=pltpu.CompilerParams(
            dimension_semantics=("parallel", "parallel")),
    )(xf, w1_bf, b1, w2_bf, b2)

    if Tp != T:
        out = out[:, :, :T]
    return out.reshape(B, C, D, H, W)


# ------------------------------ pure-JAX reference ---------------------------

def mlp_channel_ref(x, params):
    B, C, D, H, W = x.shape
    xf = x.astype(jnp.float32).reshape(B, C, -1)
    h = jnp.einsum("oc,bct->bot", params["w1"], xf) + params["b1"][None, :, None]
    h = 0.5 * h * (1.0 + jax.lax.erf(h * _INV_SQRT2))
    o = jnp.einsum("co,bot->bct", params["w2"], h) + params["b2"][None, :, None]
    return o.reshape(B, C, D, H, W)


# ------------------------------------ main -----------------------------------

if __name__ == "__main__":
    key = jax.random.PRNGKey(0)
    B, C, Dd, Hh, Ww = 2, 32, 16, 16, 16     # hidden_size=32, T = 4096 tokens
    mlp_dim = 2 * C                          # as used by MambaEncoder (2 * dims[i])

    k1, k2, k3, k4, k5 = jax.random.split(key, 5)
    # weights stored exactly like torch Conv3d(.., 1).weight.squeeze(): (out, in)
    params = dict(
        w1=(jax.random.normal(k1, (mlp_dim, C)) * 0.1).astype(jnp.float32),
        b1=(jax.random.normal(k2, (mlp_dim,)) * 0.1).astype(jnp.float32),
        w2=(jax.random.normal(k3, (C, mlp_dim)) * 0.1).astype(jnp.float32),
        b2=(jax.random.normal(k4, (C,)) * 0.1).astype(jnp.float32),
    )
    x = jax.random.normal(k5, (B, C, Dd, Hh, Ww), dtype=jnp.float32)   # NCDHW

    fwd = jax.jit(mlp_channel)
    out = jax.block_until_ready(fwd(x, params))

    assert out.shape == (B, C, Dd, Hh, Ww), out.shape
    assert out.dtype == x.dtype, out.dtype
    assert bool(jnp.all(jnp.isfinite(out)))
    ref = mlp_channel_ref(x, params)
    # bf16 MXU operands + bf16 hidden scratch (f32 accumulation) -> ~1e-3..1e-2 abs err
    max_err = float(jnp.max(jnp.abs(out - ref)))
    assert max_err < 3e-2, f"max abs err {max_err}"
    print("KERNEL_OK")
</pallas_src>

<mosaic_0001>
module attributes {stable_mosaic.version = 11 : i64} {
  func.func @_mlp_channel_kernel(%arg0: i32, %arg1: i32, %arg2: memref<1x32x4096xf32, #tpu.memory_space<vmem>>, %arg3: memref<64x32xbf16, #tpu.memory_space<vmem>>, %arg4: memref<64x1xf32, #tpu.memory_space<vmem>>, %arg5: memref<32x64xbf16, #tpu.memory_space<vmem>>, %arg6: memref<32x1xf32, #tpu.memory_space<vmem>>, %arg7: memref<1x32x4096xf32, #tpu.memory_space<vmem>>, %arg8: memref<64x4096xbf16, #tpu.memory_space<vmem>>) attributes {dimension_semantics = [#tpu.dimension_semantics<parallel>, #tpu.dimension_semantics<parallel>], iteration_bounds = array<i64: 2, 1>, scalar_prefetch = 0 : i64, scratch_operands = 1 : i64, tpu.core_type = #tpu.core_type<tc>, window_params = [{transform_indices = @transform_0, window_bounds = array<i64: 1, 32, 4096>}, {pipeline_mode = #tpu.pipeline_mode<synchronous>, transform_indices = @transform_1, window_bounds = array<i64: 64, 32>}, {pipeline_mode = #tpu.pipeline_mode<synchronous>, transform_indices = @transform_2, window_bounds = array<i64: 64, 1>}, {pipeline_mode = #tpu.pipeline_mode<synchronous>, transform_indices = @transform_3, window_bounds = array<i64: 32, 64>}, {pipeline_mode = #tpu.pipeline_mode<synchronous>, transform_indices = @transform_4, window_bounds = array<i64: 32, 1>}, {transform_indices = @transform_5, window_bounds = array<i64: 1, 32, 4096>}]} {
    %c0 = arith.constant 0 : index
    %c0_0 = arith.constant 0 : index
    %c0_1 = arith.constant 0 : index
    %0 = vector.load %arg2[%c0, %c0_0, %c0_1] : memref<1x32x4096xf32, #tpu.memory_space<vmem>>, vector<1x32x4096xf32>
    %1 = vector.shape_cast %0 : vector<1x32x4096xf32> to vector<32x4096xf32>
    %2 = arith.truncf %1 : vector<32x4096xf32> to vector<32x4096xbf16>
    %c0_2 = arith.constant 0 : index
    %c0_3 = arith.constant 0 : index
    %3 = vector.load %arg3[%c0_2, %c0_3] : memref<64x32xbf16, #tpu.memory_space<vmem>>, vector<64x32xbf16>
    %cst = arith.constant dense<0.000000e+00> : vector<64x4096xf32>
    %4 = tpu.matmul %3, %2, %cst {dimension_numbers = #tpu.dot_dimension_numbers<[1], [0], [0], [1], [0, 0, 1, 1], [], []>} : vector<64x32xbf16>, vector<32x4096xbf16>, vector<64x4096xf32> -> vector<64x4096xf32>
    %c0_4 = arith.constant 0 : index
    %c0_5 = arith.constant 0 : index
    %5 = vector.load %arg4[%c0_4, %c0_5] : memref<64x1xf32, #tpu.memory_space<vmem>>, vector<64x1xf32>
    %6 = vector.broadcast %5 : vector<64x1xf32> to vector<64x4096xf32>
    %7 = arith.addf %4, %6 : vector<64x4096xf32>
    %cst_6 = arith.constant 5.000000e-01 : f32
    %8 = vector.broadcast %cst_6 : f32 to vector<64x4096xf32>
    %9 = arith.mulf %8, %7 : vector<64x4096xf32>
    %cst_7 = arith.constant 0.707106769 : f32
    %10 = vector.broadcast %cst_7 : f32 to vector<64x4096xf32>
    %11 = arith.mulf %7, %10 : vector<64x4096xf32>
    %12 = math.erf %11 : vector<64x4096xf32>
    %cst_8 = arith.constant 1.000000e+00 : f32
    %13 = vector.broadcast %cst_8 : f32 to vector<64x4096xf32>
    %14 = arith.addf %13, %12 : vector<64x4096xf32>
    %15 = arith.mulf %9, %14 : vector<64x4096xf32>
    %16 = arith.truncf %15 : vector<64x4096xf32> to vector<64x4096xbf16>
    %c0_9 = arith.constant 0 : index
    %c0_10 = arith.constant 0 : index
    %17 = vector.load %arg8[%c0_9, %c0_10] : memref<64x4096xbf16, #tpu.memory_space<vmem>>, vector<64x4096xbf16>
    tpu.vector_store %arg8[%c0_9, %c0_10], %16 {strides = array<i32>} : memref<64x4096xbf16, #tpu.memory_space<vmem>>, vector<64x4096xbf16>,
    %c0_11 = arith.constant 0 : index
    %c0_12 = arith.constant 0 : index
    %18 = vector.load %arg5[%c0_11, %c0_12] : memref<32x64xbf16, #tpu.memory_space<vmem>>, vector<32x64xbf16>
    %c0_13 = arith.constant 0 : index
    %c0_14 = arith.constant 0 : index
    %19 = vector.load %arg8[%c0_13, %c0_14] : memref<64x4096xbf16, #tpu.memory_space<vmem>>, vector<64x4096xbf16>
    %cst_15 = arith.constant dense<0.000000e+00> : vector<32x4096xf32>
    %20 = tpu.matmul %18, %19, %cst_15 {dimension_numbers = #tpu.dot_dimension_numbers<[1], [0], [0], [1], [0, 0, 1, 1], [], []>} : vector<32x64xbf16>, vector<64x4096xbf16>, vector<32x4096xf32> -> vector<32x4096xf32>
    %c0_16 = arith.constant 0 : index
    %c0_17 = arith.constant 0 : index
    %21 = vector.load %arg6[%c0_16, %c0_17] : memref<32x1xf32, #tpu.memory_space<vmem>>, vector<32x1xf32>
    %22 = vector.broadcast %21 : vector<32x1xf32> to vector<32x4096xf32>
    %23 = arith.addf %20, %22 : vector<32x4096xf32>
    %c0_18 = arith.constant 0 : index
    %c0_19 = arith.constant 0 : index
    %c0_20 = arith.constant 0 : index
    %24 = vector.load %arg7[%c0_18, %c0_19, %c0_20] : memref<1x32x4096xf32, #tpu.memory_space<vmem>>, vector<1x32x4096xf32>
    %25 = vector.shape_cast %24 : vector<1x32x4096xf32> to vector<32x4096xf32>
    %26 = vector.shape_cast %23 : vector<32x4096xf32> to vector<1x32x4096xf32>
    tpu.vector_store %arg7[%c0_18, %c0_19, %c0_20], %26 {strides = array<i32>} : memref<1x32x4096xf32, #tpu.memory_space<vmem>>, vector<1x32x4096xf32>,
    return
  }
  func.func @transform_0(%arg0: i32, %arg1: i32) -> (i32, i32, i32) {
    %c0_i32 = arith.constant 0 : i32
    %c0_i32_0 = arith.constant 0 : i32
    return %arg0, %c0_i32, %arg1 : i32, i32, i32
  }
  func.func @transform_1(%arg0: i32, %arg1: i32) -> (i32, i32) {
    %c0_i32 = arith.constant 0 : i32
    %c0_i32_0 = arith.constant 0 : i32
    %c0_i32_1 = arith.constant 0 : i32
    return %c0_i32, %c0_i32_0 : i32, i32
  }
  func.func @transform_2(%arg0: i32, %arg1: i32) -> (i32, i32) {
    %c0_i32 = arith.constant 0 : i32
    %c0_i32_0 = arith.constant 0 : i32
    %c0_i32_1 = arith.constant 0 : i32
    return %c0_i32, %c0_i32_0 : i32, i32
  }
  func.func @transform_3(%arg0: i32, %arg1: i32) -> (i32, i32) {
    %c0_i32 = arith.constant 0 : i32
    %c0_i32_0 = arith.constant 0 : i32
    %c0_i32_1 = arith.constant 0 : i32
    return %c0_i32, %c0_i32_0 : i32, i32
  }
  func.func @transform_4(%arg0: i32, %arg1: i32) -> (i32, i32) {
    %c0_i32 = arith.constant 0 : i32
    %c0_i32_0 = arith.constant 0 : i32
    %c0_i32_1 = arith.constant 0 : i32
    return %c0_i32, %c0_i32_0 : i32, i32
  }
  func.func @transform_5(%arg0: i32, %arg1: i32) -> (i32, i32, i32) {
    %c0_i32 = arith.constant 0 : i32
    %c0_i32_0 = arith.constant 0 : i32
    return %arg0, %c0_i32, %arg1 : i32, i32, i32
  }
}

</mosaic_0001>

<llo_original>
// kernel: mlp_channel.1
$region0: #{mlp_channel.1}
  #allocation0 [shape = 'u32[]', space=smem, size = 0x4, offset = 0x4, fixed_abs, tag = 'smem constant byte address 0x4 - core index']
  #allocation1 [shape = 'u32[144,128]{1,0:T(1,128)}', space=vmem, size = 0x12000, scoped, tag = 'internal scratch']
  #allocation2 [shape = 'bf16[64,4096]{1,0:T(8,128)(2,1)}', space=vmem, size = 0x80000, scoped, tag = 'scratch operand']
  %s0 = inlined_call_operand.vmem [shape: f32[2,32,4096], index: 0, kind: input, shape index: {}]
  %s1 = inlined_call_operand.vmem [shape: bf16[64,32], index: 1, kind: input, shape index: {}]
  %s2 = inlined_call_operand.vmem [shape: f32[64,1], index: 2, kind: input, shape index: {}]
  %s3 = inlined_call_operand.vmem [shape: bf16[32,64], index: 3, kind: input, shape index: {}]
  %s4 = inlined_call_operand.vmem [shape: f32[32,1], index: 4, kind: input, shape index: {}]
  %s5 = inlined_call_operand.vmem [shape: f32[2,32,4096], index: 5, kind: output, shape index: {}]
  %s6 = sld [smem:[#allocation0]]
  $region53: #{mlp_channel.1} parent=0
    _
  %s8 = ssub.s32 1, %s6
  %s9 = scalar_select 0, %s8, %s6
  loop: start=0, step=1, limit=4
  $region2: #{mlp_channel.1} parent=0 // loop_pre_header
    _
  $region3: #{mlp_channel.1} parent=0 // loop_header
    %s11 = sphi 0, %s15
    %p12 = scmp.ge.s32.totalorder %s11, 4
    %s18 = sphi 0, %s30
    %s19 = sphi 0, %s26
    %s20 = sphi 0, %s18
    %s21 = sphi 0, %s19
    %s22 = sphi 0, %s20
    %s23 = sphi 0, %s21
    %s35 = sphi 0, %s37
    %s38 = sphi 0, %s35
    %s39 = sphi 0, %s38
    %s55 = sphi 0, %s39
    %s59 = sphi 0, %s59
    %s61 = sphi 0, %s59
    %s62 = sphi 0, %s61
    %s76 = sphi 0, %s62
    %s80 = sphi 0, %s80
    %s82 = sphi 0, %s80
    %s83 = sphi 0, %s82
    %s97 = sphi 0, %s83
    %s101 = sphi 0, %s101
    %s103 = sphi 0, %s101
    %s104 = sphi 0, %s103
    %s118 = sphi 0, %s104
    %s122 = sphi 0, %s122
    %s124 = sphi 0, %s122
    %s125 = sphi 0, %s124
    %s139 = sphi 0, %s125
    %s147 = sphi 0, %s149
    %s150 = sphi 0, %s147
    %s151 = sphi 0, %s150
    %s167 = sphi 0, %s151
  $region4: #{mlp_channel.1} parent=0 // loop_header_branch
    %14 = sbr.rel (%p12) target = $region8
  $region5: #{mlp_channel.1} parent=0 // loop_body
    %s16 = ssub.s32 %s11, 1
    %s17 = ssub.s32 %s11, 2
    %s24 = sadd.s32 1, %s19
    %p25 = scmp.ge.s32.totalorder %s24, 1
    %s26 = scalar_select %p25, 0, %s24
    %s27 = sadd.s32 1, %s18
    %s28 = scalar_select %p25, %s27, %s18
    %p29 = scmp.ge.s32.totalorder %s28, 2
    %s30 = scalar_select %p29, 0, %s28
    %s31 = ssub.s32 %s18, %s30
    %s32 = ssub.s32 %s19, %s26
    %s33 = sor.u32 %s31, %s32
    %p34 = scmp.eq.s32.totalorder %s33, 0
    %s36 = sadd.s32 %s35, 1
    %s37 = scalar_select %p34, %s35, %s36
    %p40 = pneg %p34
    %p41 = scmp.eq.s32.totalorder %s11, 1
    %p42 = por %p40, %p41
    %p43 = scmp.ne.s32.totalorder %s35, %s38
    %p44 = scmp.eq.s32.totalorder %s11, 0
    %p45 = por %p43, %p44
    %p46 = scmp.ne.s32.totalorder %s35, %s38
    %p47 = scmp.eq.s32.totalorder %s16, 1
    %p48 = por %p46, %p47
    %p49 = scmp.ne.s32.totalorder %s38, %s39
    %p50 = scmp.eq.s32.totalorder %s16, 0
    %p51 = por %p49, %p50
    %p52 = scmp.ne.s32.totalorder %s38, %s39
    %p53 = scmp.eq.s32.totalorder %s17, 1
    %p54 = por %p52, %p53
    %p56 = scmp.ne.s32.totalorder %s39, %s55
    %p57 = scmp.eq.s32.totalorder %s17, 0
    %p58 = por %p56, %p57
    %s60 = sadd.s32 %s59, 1
    %p63 = scmp.eq.s32.totalorder %s11, 1
    %p64 = scmp.ne.s32.totalorder %s59, %s61
    %p65 = scmp.eq.s32.totalorder %s11, 0
    %p66 = por %p64, %p65
    %p67 = scmp.ne.s32.totalorder %s59, %s61
    %p68 = scmp.eq.s32.totalorder %s16, 1
    %p69 = por %p67, %p68
    %p70 = scmp.ne.s32.totalorder %s61, %s62
    %p71 = scmp.eq.s32.totalorder %s16, 0
    %p72 = por %p70, %p71
    %p73 = scmp.ne.s32.totalorder %s61, %s62
    %p74 = scmp.eq.s32.totalorder %s17, 1
    %p75 = por %p73, %p74
    %p77 = scmp.ne.s32.totalorder %s62, %s76
    %p78 = scmp.eq.s32.totalorder %s17, 0
    %p79 = por %p77, %p78
    %s81 = sadd.s32 %s80, 1
    %p84 = scmp.eq.s32.totalorder %s11, 1
    %p85 = scmp.ne.s32.totalorder %s80, %s82
    %p86 = scmp.eq.s32.totalorder %s11, 0
    %p87 = por %p85, %p86
    %p88 = scmp.ne.s32.totalorder %s80, %s82
    %p89 = scmp.eq.s32.totalorder %s16, 1
    %p90 = por %p88, %p89
    %p91 = scmp.ne.s32.totalorder %s82, %s83
    %p92 = scmp.eq.s32.totalorder %s16, 0
    %p93 = por %p91, %p92
    %p94 = scmp.ne.s32.totalorder %s82, %s83
    %p95 = scmp.eq.s32.totalorder %s17, 1
    %p96 = por %p94, %p95
    %p98 = scmp.ne.s32.totalorder %s83, %s97
    %p99 = scmp.eq.s32.totalorder %s17, 0
    %p100 = por %p98, %p99
    %s102 = sadd.s32 %s101, 1
    %p105 = scmp.eq.s32.totalorder %s11, 1
    %p106 = scmp.ne.s32.totalorder %s101, %s103
    %p107 = scmp.eq.s32.totalorder %s11, 0
    %p108 = por %p106, %p107
    %p109 = scmp.ne.s32.totalorder %s101, %s103
    %p110 = scmp.eq.s32.totalorder %s16, 1
    %p111 = por %p109, %p110
    %p112 = scmp.ne.s32.totalorder %s103, %s104
    %p113 = scmp.eq.s32.totalorder %s16, 0
    %p114 = por %p112, %p113
    %p115 = scmp.ne.s32.totalorder %s103, %s104
    %p116 = scmp.eq.s32.totalorder %s17, 1
    %p117 = por %p115, %p116
    %p119 = scmp.ne.s32.totalorder %s104, %s118
    %p120 = scmp.eq.s32.totalorder %s17, 0
    %p121 = por %p119, %p120
    %s123 = sadd.s32 %s122, 1
    %p126 = scmp.eq.s32.totalorder %s11, 1
    %p127 = scmp.ne.s32.totalorder %s122, %s124
    %p128 = scmp.eq.s32.totalorder %s11, 0
    %p129 = por %p127, %p128
    %p130 = scmp.ne.s32.totalorder %s122, %s124
    %p131 = scmp.eq.s32.totalorder %s16, 1
    %p132 = por %p130, %p131
    %p133 = scmp.ne.s32.totalorder %s124, %s125
    %p134 = scmp.eq.s32.totalorder %s16, 0
    %p135 = por %p133, %p134
    %p136 = scmp.ne.s32.totalorder %s124, %s125
    %p137 = scmp.eq.s32.totalorder %s17, 1
    %p138 = por %p136, %p137
    %p140 = scmp.ne.s32.totalorder %s125, %s139
    %p141 = scmp.eq.s32.totalorder %s17, 0
    %p142 = por %p140, %p141
    %s143 = ssub.s32 %s18, %s30
    %s144 = ssub.s32 %s19, %s26
    %s145 = sor.u32 %s143, %s144
    %p146 = scmp.eq.s32.totalorder %s145, 0
    %s148 = sadd.s32 %s147, 1
    %s149 = scalar_select %p146, %s147, %s148
    %p152 = pneg %p146
    %p153 = scmp.eq.s32.totalorder %s11, 1
    %p154 = por %p152, %p153
    %p155 = scmp.ne.s32.totalorder %s147, %s150
    %p156 = scmp.eq.s32.totalorder %s11, 0
    %p157 = por %p155, %p156
    %p158 = scmp.ne.s32.totalorder %s147, %s150
    %p159 = scmp.eq.s32.totalorder %s16, 1
    %p160 = por %p158, %p159
    %p161 = scmp.ne.s32.totalorder %s150, %s151
    %p162 = scmp.eq.s32.totalorder %s16, 0
    %p163 = por %p161, %p162
    %p164 = scmp.ne.s32.totalorder %s150, %s151
    %p165 = scmp.eq.s32.totalorder %s17, 1
    %p166 = por %p164, %p165
    %p168 = scmp.ne.s32.totalorder %s151, %s167
    %p169 = scmp.eq.s32.totalorder %s17, 0
    %p170 = por %p168, %p169
    %p171 = scmp.le.s32.totalorder 1, %s11
    %p172 = scmp.lt.s32.totalorder %s11, 3
    %p173 = pnand %p171, %p172
    %p174 = pneg %p173
    // Predicated region
    $region9: #{mlp_channel.1} parent=5 // pred_check
      _
    $region10: #{mlp_channel.1} parent=5 // pred_check_branch
      %176 = sbr.rel (%p173) target = $region12
    $region11: #{mlp_channel.1} parent=5 // pred_region
      %s177 = ssub.s32 %s11, 1
      // Predicated region
      $region13: #{mlp_channel.1} parent=11 // pred_check
        %p178 = pneg %p72
      $region14: #{mlp_channel.1} parent=11 // pred_check_branch
        %180 = sbr.rel (%p178) target = $region16
      $region15: #{mlp_channel.1} parent=11 // pred_region
        _
      $region16: #{mlp_channel.1} parent=11 // pred_fallthru
        _
      // Predicated region
      $region17: #{mlp_channel.1} parent=11 // pred_check
        %p181 = pneg %p93
      $region18: #{mlp_channel.1} parent=11 // pred_check_branch
        %183 = sbr.rel (%p181) target = $region20
      $region19: #{mlp_channel.1} parent=11 // pred_region
        _
      $region20: #{mlp_channel.1} parent=11 // pred_fallthru
        _
      // Predicated region
      $region21: #{mlp_channel.1} parent=11 // pred_check
        %p184 = pneg %p114
      $region22: #{mlp_channel.1} parent=11 // pred_check_branch
        %186 = sbr.rel (%p184) target = $region24
      $region23: #{mlp_channel.1} parent=11 // pred_region
        _
      $region24: #{mlp_channel.1} parent=11 // pred_fallthru
        _
      // Predicated region
      $region25: #{mlp_channel.1} parent=11 // pred_check
        %p187 = pneg %p135
      $region26: #{mlp_channel.1} parent=11 // pred_check_branch
        %189 = sbr.rel (%p187) target = $region28
      $region27: #{mlp_channel.1} parent=11 // pred_region
        _
      $region28: #{mlp_channel.1} parent=11 // pred_fallthru
        _
    $region12: #{mlp_channel.1} parent=5 // pred_fallthru
      _
    %p190 = scmp.lt.s32.totalorder %s11, 2
    // Predicated region
    $region29: #{mlp_channel.1} parent=5 // pred_check
      %p191 = pneg %p190
    $region30: #{mlp_channel.1} parent=5 // pred_check_branch
      %193 = sbr.rel (%p191) target = $region32
    $region31: #{mlp_channel.1} parent=5 // pred_region
      // Predicated region
      $region33: #{mlp_channel.1} parent=31 // pred_check
        %p194 = pneg %p45
      $region34: #{mlp_channel.1} parent=31 // pred_check_branch
        %196 = sbr.rel (%p194) target = $region36
      $region35: #{mlp_channel.1} parent=31 // pred_region
        %s197 = smul.u32 32, %s19
        %p198 = scmp.lt.s32.totalorder %s18, 1
        %s199 = scalar_select %p198, %s18, 1
        %p200 = scmp.lt.s32.totalorder %s197, 31
        %s201 = scalar_select %p200, %s197, 31
        %s202 = smul.addr %s199, 128
        %s203 = sadd.s32 %s201, %s202
        %s204 = smul.addr %s203, 8
        %s205 = scalar_lea.vmem %s0, %s204
        %s206 = smul.u32 32, %s19
      $region36: #{mlp_channel.1} parent=31 // pred_fallthru
        _
    $region32: #{mlp_channel.1} parent=5 // pred_fallthru
      _
    %p207 = scmp.le.s32.totalorder 1, %s11
    %p208 = scmp.lt.s32.totalorder %s11, 3
    %p209 = pnand %p207, %p208
    %p210 = pneg %p209
    // Predicated region
    $region37: #{mlp_channel.1} parent=5 // pred_check
      _
    $region38: #{mlp_channel.1} parent=5 // pred_check_branch
      %212 = sbr.rel (%p209) target = $region40
    $region39: #{mlp_channel.1} parent=5 // pred_region
      %s213 = ssub.s32 %s11, 1
      %s214 = smul.u32 32, %s21
      %p215 = scmp.lt.s32.totalorder %s20, 1
      %s216 = scalar_select %p215, %s20, 1
      %p217 = scmp.lt.s32.totalorder %s214, 31
      %s218 = scalar_select %p217, %s214, 31
      %s219 = smul.addr %s216, 128
      %s220 = sadd.s32 %s218, %s219
      %s221 = smul.addr %s220, 8
      %s222 = scalar_lea.vmem %s0, %s221
      %p223 = pneg %p51
      %p224 = pneg %p48
      %p225 = pneg %p72
      %p226 = pneg %p69
      %p227 = pneg %p93
      %p228 = pneg %p90
      %p229 = pneg %p114
      %p230 = pneg %p111
      %p231 = pneg %p135
      %p232 = pneg %p132
      %p233 = pneg %p163
      %p234 = pneg %p160
      %s235 = smul.u32 32, %s21
      %p236 = scmp.lt.s32.totalorder %s20, 1
      %s237 = scalar_select %p236, %s20, 1
      %p238 = scmp.lt.s32.totalorder %s235, 31
      %s239 = scalar_select %p238, %s235, 31
      %s240 = smul.addr %s237, 128
      %s241 = sadd.s32 %s239, %s240
      %s242 = smul.addr %s241, 8
      %s243 = scalar_lea.vmem %s5, %s242
      %s244 = smul.u32 32, %s21
      %p245 = scmp.lt.s32.totalorder %s20, 1
      %s246 = scalar_select %p245, %s20, 1
      %p247 = scmp.lt.s32.totalorder %s244, 31
      %s248 = scalar_select %p247, %s244, 31
      %s249 = smul.addr %s246, 128
      %s250 = sadd.s32 %s248, %s249
      %s251 = smul.addr %s250, 8
      %s252 = scalar_lea.vmem %s0, %s251
      %s253 = smul.u32 32, %s21
      %s254 = smul.u32 32, %s21
      %p255 = scmp.lt.s32.totalorder %s20, 1
      %s256 = scalar_select %p255, %s20, 1
      %p257 = scmp.lt.s32.totalorder %s254, 31
      %s258 = scalar_select %p257, %s254, 31
      %s259 = smul.addr %s256, 128
      %s260 = sadd.s32 %s258, %s259
      %s261 = smul.addr %s260, 8
      %s262 = scalar_lea.vmem %s5, %s261
      %s263 = smul.u32 32, %s21
      %v265 = vld [vmem:[%s252] sm:$0xff]
      %v266 = vld [vmem:[%s252 + $0x8] sm:$0xff]
      %v267 = vld [vmem:[%s252 + $0x10] sm:$0xff]
      %v268 = vld [vmem:[%s252 + $0x18] sm:$0xff]
      %v269 = vld [vmem:[%s252 + $0x20] sm:$0xff]
      %v270 = vld [vmem:[%s252 + $0x28] sm:$0xff]
      %v271 = vld [vmem:[%s252 + $0x30] sm:$0xff]
      %v272 = vld [vmem:[%s252 + $0x38] sm:$0xff]
      %v273 = vld [vmem:[%s252 + $0x40] sm:$0xff]
      %v274 = vld [vmem:[%s252 + $0x48] sm:$0xff]
      %v275 = vld [vmem:[%s252 + $0x50] sm:$0xff]
      %v276 = vld [vmem:[%s252 + $0x58] sm:$0xff]
      %v277 = vld [vmem:[%s252 + $0x60] sm:$0xff]
      %v278 = vld [vmem:[%s252 + $0x68] sm:$0xff]
      %v279 = vld [vmem:[%s252 + $0x70] sm:$0xff]
      %v280 = vld [vmem:[%s252 + $0x78] sm:$0xff]
      %v281 = vld [vmem:[%s252 + $0x80] sm:$0xff]
      %v282 = vld [vmem:[%s252 + $0x88] sm:$0xff]
      %v283 = vld [vmem:[%s252 + $0x90] sm:$0xff]
      %v284 = vld [vmem:[%s252 + $0x98] sm:$0xff]
      %v285 = vld [vmem:[%s252 + $0xa0] sm:$0xff]
      %v286 = vld [vmem:[%s252 + $0xa8] sm:$0xff]
      %v287 = vld [vmem:[%s252 + $0xb0] sm:$0xff]
      %v288 = vld [vmem:[%s252 + $0xb8] sm:$0xff]
      %v289 = vld [vmem:[%s252 + $0xc0] sm:$0xff]
      %v290 = vld [vmem:[%s252 + $0xc8] sm:$0xff]
      %v291 = vld [vmem:[%s252 + $0xd0] sm:$0xff]
      %v292 = vld [vmem:[%s252 + $0xd8] sm:$0xff]
      %v293 = vld [vmem:[%s252 + $0xe0] sm:$0xff]
      %v294 = vld [vmem:[%s252 + $0xe8] sm:$0xff]
      %v295 = vld [vmem:[%s252 + $0xf0] sm:$0xff]
      %v296 = vld [vmem:[%s252 + $0xf8] sm:$0xff]
      %v297 = vld [vmem:[%s252 + $0x100] sm:$0xff]
      %v298 = vld [vmem:[%s252 + $0x108] sm:$0xff]
      %v299 = vld [vmem:[%s252 + $0x110] sm:$0xff]
      %v300 = vld [vmem:[%s252 + $0x118] sm:$0xff]
      %v301 = vld [vmem:[%s252 + $0x120] sm:$0xff]
      %v302 = vld [vmem:[%s252 + $0x128] sm:$0xff]
      %v303 = vld [vmem:[%s252 + $0x130] sm:$0xff]
      %v304 = vld [vmem:[%s252 + $0x138] sm:$0xff]
      %v305 = vld [vmem:[%s252 + $0x140] sm:$0xff]
      %v306 = vld [vmem:[%s252 + $0x148] sm:$0xff]
      %v307 = vld [vmem:[%s252 + $0x150] sm:$0xff]
      %v308 = vld [vmem:[%s252 + $0x158] sm:$0xff]
      %v309 = vld [vmem:[%s252 + $0x160] sm:$0xff]
      %v310 = vld [vmem:[%s252 + $0x168] sm:$0xff]
      %v311 = vld [vmem:[%s252 + $0x170] sm:$0xff]
      %v312 = vld [vmem:[%s252 + $0x178] sm:$0xff]
      %v313 = vld [vmem:[%s252 + $0x180] sm:$0xff]
      %v314 = vld [vmem:[%s252 + $0x188] sm:$0xff]
      %v315 = vld [vmem:[%s252 + $0x190] sm:$0xff]
      %v316 = vld [vmem:[%s252 + $0x198] sm:$0xff]
      %v317 = vld [vmem:[%s252 + $0x1a0] sm:$0xff]
      %v318 = vld [vmem:[%s252 + $0x1a8] sm:$0xff]
      %v319 = vld [vmem:[%s252 + $0x1b0] sm:$0xff]
      %v320 = vld [vmem:[%s252 + $0x1b8] sm:$0xff]
      %v321 = vld [vmem:[%s252 + $0x1c0] sm:$0xff]
      %v322 = vld [vmem:[%s252 + $0x1c8] sm:$0xff]
      %v323 = vld [vmem:[%s252 + $0x1d0] sm:$0xff]
      %v324 = vld [vmem:[%s252 + $0x1d8] sm:$0xff]
      %v325 = vld [vmem:[%s252 + $0x1e0] sm:$0xff]
      %v326 = vld [vmem:[%s252 + $0x1e8] sm:$0xff]
      %v327 = vld [vmem:[%s252 + $0x1f0] sm:$0xff]
      %v328 = vld [vmem:[%s252 + $0x1f8] sm:$0xff]
      %v329 = vld [vmem:[%s252 + $0x200] sm:$0xff]
      %v330 = vld [vmem:[%s252 + $0x208] sm:$0xff]
      %v331 = vld [vmem:[%s252 + $0x210] sm:$0xff]
      %v332 = vld [vmem:[%s252 + $0x218] sm:$0xff]
      %v333 = vld [vmem:[%s252 + $0x220] sm:$0xff]
      %v334 = vld [vmem:[%s252 + $0x228] sm:$0xff]
      %v335 = vld [vmem:[%s252 + $0x230] sm:$0xff]
      %v336 = vld [vmem:[%s252 + $0x238] sm:$0xff]
      %v337 = vld [vmem:[%s252 + $0x240] sm:$0xff]
      %v338 = vld [vmem:[%s252 + $0x248] sm:$0xff]
      %v339 = vld [vmem:[%s252 + $0x250] sm:$0xff]
      %v340 = vld [vmem:[%s252 + $0x258] sm:$0xff]
      %v341 = vld [vmem:[%s252 + $0x260] sm:$0xff]
      %v342 = vld [vmem:[%s252 + $0x268] sm:$0xff]
      %v343 = vld [vmem:[%s252 + $0x270] sm:$0xff]
      %v344 = vld [vmem:[%s252 + $0x278] sm:$0xff]
      %v345 = vld [vmem:[%s252 + $0x280] sm:$0xff]
      %v346 = vld [vmem:[%s252 + $0x288] sm:$0xff]
      %v347 = vld [vmem:[%s252 + $0x290] sm:$0xff]
      %v348 = vld [vmem:[%s252 + $0x298] sm:$0xff]
      %v349 = vld [vmem:[%s252 + $0x2a0] sm:$0xff]
      %v350 = vld [vmem:[%s252 + $0x2a8] sm:$0xff]
      %v351 = vld [vmem:[%s252 + $0x2b0] sm:$0xff]
      %v352 = vld [vmem:[%s252 + $0x2b8] sm:$0xff]
      %v353 = vld [vmem:[%s252 + $0x2c0] sm:$0xff]
      %v354 = vld [vmem:[%s252 + $0x2c8] sm:$0xff]
      %v355 = vld [vmem:[%s252 + $0x2d0] sm:$0xff]
      %v356 = vld [vmem:[%s252 + $0x2d8] sm:$0xff]
      %v357 = vld [vmem:[%s252 + $0x2e0] sm:$0xff]
      %v358 = vld [vmem:[%s252 + $0x2e8] sm:$0xff]
      %v359 = vld [vmem:[%s252 + $0x2f0] sm:$0xff]
      %v360 = vld [vmem:[%s252 + $0x2f8] sm:$0xff]
      %v361 = vld [vmem:[%s252 + $0x300] sm:$0xff]
      %v362 = vld [vmem:[%s252 + $0x308] sm:$0xff]
      %v363 = vld [vmem:[%s252 + $0x310] sm:$0xff]
      %v364 = vld [vmem:[%s252 + $0x318] sm:$0xff]
      %v365 = vld [vmem:[%s252 + $0x320] sm:$0xff]
      %v366 = vld [vmem:[%s252 + $0x328] sm:$0xff]
      %v367 = vld [vmem:[%s252 + $0x330] sm:$0xff]
      %v368 = vld [vmem:[%s252 + $0x338] sm:$0xff]
      %v369 = vld [vmem:[%s252 + $0x340] sm:$0xff]
      %v370 = vld [vmem:[%s252 + $0x348] sm:$0xff]
      %v371 = vld [vmem:[%s252 + $0x350] sm:$0xff]
      %v372 = vld [vmem:[%s252 + $0x358] sm:$0xff]
      %v373 = vld [vmem:[%s252 + $0x360] sm:$0xff]
      %v374 = vld [vmem:[%s252 + $0x368] sm:$0xff]
      %v375 = vld [vmem:[%s252 + $0x370] sm:$0xff]
      %v376 = vld [vmem:[%s252 + $0x378] sm:$0xff]
      %v377 = vld [vmem:[%s252 + $0x380] sm:$0xff]
      %v378 = vld [vmem:[%s252 + $0x388] sm:$0xff]
      %v379 = vld [vmem:[%s252 + $0x390] sm:$0xff]
      %v380 = vld [vmem:[%s252 + $0x398] sm:$0xff]
      %v381 = vld [vmem:[%s252 + $0x3a0] sm:$0xff]
      %v382 = vld [vmem:[%s252 + $0x3a8] sm:$0xff]
      %v383 = vld [vmem:[%s252 + $0x3b0] sm:$0xff]
      %v384 = vld [vmem:[%s252 + $0x3b8] sm:$0xff]
      %v385 = vld [vmem:[%s252 + $0x3c0] sm:$0xff]
      %v386 = vld [vmem:[%s252 + $0x3c8] sm:$0xff]
      %v387 = vld [vmem:[%s252 + $0x3d0] sm:$0xff]
      %v388 = vld [vmem:[%s252 + $0x3d8] sm:$0xff]
      %v389 = vld [vmem:[%s252 + $0x3e0] sm:$0xff]
      %v390 = vld [vmem:[%s252 + $0x3e8] sm:$0xff]
      %v391 = vld [vmem:[%s252 + $0x3f0] sm:$0xff]
      %v392 = vld [vmem:[%s252 + $0x3f8] sm:$0xff]
      %v393 = vpack.c.bf16 %v297, %v265
      %v394 = vpack.c.bf16 %v298, %v266
      %v395 = vpack.c.bf16 %v299, %v267
      %v396 = vpack.c.bf16 %v300, %v268
      %v397 = vpack.c.bf16 %v301, %v269
      %v398 = vpack.c.bf16 %v302, %v270
      %v399 = vpack.c.bf16 %v303, %v271
      %v400 = vpack.c.bf16 %v304, %v272
      %v401 = vpack.c.bf16 %v305, %v273
      %v402 = vpack.c.bf16 %v306, %v274
      %v403 = vpack.c.bf16 %v307, %v275
      %v404 = vpack.c.bf16 %v308, %v276
      %v405 = vpack.c.bf16 %v309, %v277
      %v406 = vpack.c.bf16 %v310, %v278
      %v407 = vpack.c.bf16 %v311, %v279
      %v408 = vpack.c.bf16 %v312, %v280
      %v409 = vpack.c.bf16 %v313, %v281
      %v410 = vpack.c.bf16 %v314, %v282
      %v411 = vpack.c.bf16 %v315, %v283
      %v412 = vpack.c.bf16 %v316, %v284
      %v413 = vpack.c.bf16 %v317, %v285
      %v414 = vpack.c.bf16 %v318, %v286
      %v415 = vpack.c.bf16 %v319, %v287
      %v416 = vpack.c.bf16 %v320, %v288
      %v417 = vpack.c.bf16 %v321, %v289
      %v418 = vpack.c.bf16 %v322, %v290
      %v419 = vpack.c.bf16 %v323, %v291
      %v420 = vpack.c.bf16 %v324, %v292
      %v421 = vpack.c.bf16 %v325, %v293
      %v422 = vpack.c.bf16 %v326, %v294
      %v423 = vpack.c.bf16 %v327, %v295
      %v424 = vpack.c.bf16 %v328, %v296
      %v425 = vpack.c.bf16 %v361, %v329
      %v426 = vpack.c.bf16 %v362, %v330
      %v427 = vpack.c.bf16 %v363, %v331
      %v428 = vpack.c.bf16 %v364, %v332
      %v429 = vpack.c.bf16 %v365, %v333
      %v430 = vpack.c.bf16 %v366, %v334
      %v431 = vpack.c.bf16 %v367, %v335
      %v432 = vpack.c.bf16 %v368, %v336
      %v433 = vpack.c.bf16 %v369, %v337
      %v434 = vpack.c.bf16 %v370, %v338
      %v435 = vpack.c.bf16 %v371, %v339
      %v436 = vpack.c.bf16 %v372, %v340
      %v437 = vpack.c.bf16 %v373, %v341
      %v438 = vpack.c.bf16 %v374, %v342
      %v439 = vpack.c.bf16 %v375, %v343
      %v440 = vpack.c.bf16 %v376, %v344
      %v441 = vpack.c.bf16 %v377, %v345
      %v442 = vpack.c.bf16 %v378, %v346
      %v443 = vpack.c.bf16 %v379, %v347
      %v444 = vpack.c.bf16 %v380, %v348
      %v445 = vpack.c.bf16 %v381, %v349
      %v446 = vpack.c.bf16 %v382, %v350
      %v447 = vpack.c.bf16 %v383, %v351
      %v448 = vpack.c.bf16 %v384, %v352
      %v449 = vpack.c.bf16 %v385, %v353
      %v450 = vpack.c.bf16 %v386, %v354
      %v451 = vpack.c.bf16 %v387, %v355
      %v452 = vpack.c.bf16 %v388, %v356
      %v453 = vpack.c.bf16 %v389, %v357
      %v454 = vpack.c.bf16 %v390, %v358
      %v455 = vpack.c.bf16 %v391, %v359
      %v456 = vpack.c.bf16 %v392, %v360
      %v457 = vld [vmem:[%s1] sm:$0xf]
      %v458 = vld [vmem:[%s1 + $0x4] sm:$0xf]
      %v459 = vld [vmem:[%s1 + $0x8] sm:$0xf]
      %v460 = vld [vmem:[%s1 + $0xc] sm:$0xf]
      %v461 = vld [vmem:[%s1 + $0x10] sm:$0xf]
      %v462 = vld [vmem:[%s1 + $0x14] sm:$0xf]
      %v463 = vld [vmem:[%s1 + $0x18] sm:$0xf]
      %v464 = vld [vmem:[%s1 + $0x1c] sm:$0xf]
      %v465 = vld [vmem:[%s2] sm:$0xff]
      %v466 = vld [vmem:[%s2 + $0x8] sm:$0xff]
      %v467 = vld [vmem:[%s2 + $0x10] sm:$0xff]
      %v468 = vld [vmem:[%s2 + $0x18] sm:$0xff]
      %v469 = vld [vmem:[%s2 + $0x20] sm:$0xff]
      %v470 = vld [vmem:[%s2 + $0x28] sm:$0xff]
      %v471 = vld [vmem:[%s2 + $0x30] sm:$0xff]
      %v472 = vld [vmem:[%s2 + $0x38] sm:$0xff]
      %474 = vset.pattern.permute.xlu0 0
      %475 = vperm.xlu0 %474, %v465
      %v476 = vpop.permute.xlu0 %475
      %479 = vset.pattern.permute.xlu0 0
      %480 = vperm.xlu0 %479, %v466
      %v481 = vpop.permute.xlu0 %480
      %484 = vset.pattern.permute.xlu0 0
      %485 = vperm.xlu0 %484, %v467
      %v486 = vpop.permute.xlu0 %485
      %489 = vset.pattern.permute.xlu0 0
      %490 = vperm.xlu0 %489, %v468
      %v491 = vpop.permute.xlu0 %490
      %494 = vset.pattern.permute.xlu0 0
      %495 = vperm.xlu0 %494, %v469
      %v496 = vpop.permute.xlu0 %495
      %499 = vset.pattern.permute.xlu0 0
      %500 = vperm.xlu0 %499, %v470
      %v501 = vpop.permute.xlu0 %500
      %504 = vset.pattern.permute.xlu0 0
      %505 = vperm.xlu0 %504, %v471
      %v506 = vpop.permute.xlu0 %505
      %509 = vset.pattern.permute.xlu0 0
      %510 = vperm.xlu0 %509, %v472
      %v511 = vpop.permute.xlu0 %510
      %v521 = vunpack.c.l.b16 %v457
      %v522 = vunpack.c.l.b16 %v458
      %v523 = vunpack.c.l.b16 %v459
      %v524 = vunpack.c.l.b16 %v460
      %v525 = vunpack.c.l.b16 %v461
      %v526 = vunpack.c.l.b16 %v462
      %v527 = vunpack.c.l.b16 %v463
      %v528 = vunpack.c.l.b16 %v464
      %v529 = vpack.c.b16 %v522, %v521
      %v530 = vpack.c.b16 %v524, %v523
      %v531 = vpack.c.b16 %v526, %v525
      %v532 = vpack.c.b16 %v528, %v527
      %vm533 = vcmask 261120
      %v535 = vsel %vm533, %v529, 0
      %v538 = vsel %vm533, %v530, 0
      %v541 = vsel %vm533, %v531, 0
      %v544 = vsel %vm533, %v532, 0
      %546 = vmatprep.subr.bf16.mxu0 0
      %547 = vmatpush1.bf16.msra.mxu0 0
      %548 = vmatprep.subr.bf16.mxu0 0
      %549 = vmatpush1.bf16.msra.mxu0 0
      %550 = vmatprep.subr.bf16.mxu0 0
      %551 = vmatpush1.bf16.msra.mxu0 0
      %552 = vmatprep.subr.bf16.mxu0 0
      %553 = vmatpush1.bf16.msra.mxu0 0
      %554 = vmatprep.subr.bf16.mxu0 0
      %555 = vmatpush1.bf16.msra.mxu0 0
      %556 = vmatprep.subr.bf16.mxu0 0
      %557 = vmatpush1.bf16.msra.mxu0 0
      %558 = vmatprep.subr.bf16.mxu0 %v426
      %559 = vmatpush1.bf16.msra.mxu0 %v425
      %560 = vmatprep.subr.bf16.mxu0 %v394
      %561 = vmatpush1.bf16.msra.mxu0 %v393
      %562 = vmatprep.subr.bf16.mxu0 0
      %563 = vmatpush2.bf16.msra.mxu0 0
      %564 = vmatprep.subr.bf16.mxu0 0
      %565 = vmatpush2.bf16.msra.mxu0 0
      %566 = vmatprep.subr.bf16.mxu0 0
      %567 = vmatpush2.bf16.msra.mxu0 0
      %568 = vmatprep.subr.bf16.mxu0 0
      %569 = vmatpush2.bf16.msra.mxu0 0
      %570 = vmatprep.subr.bf16.mxu0 0
      %571 = vmatpush2.bf16.msra.mxu0 0
      %572 = vmatprep.subr.bf16.mxu0 0
      %573 = vmatpush2.bf16.msra.mxu0 0
      %574 = vmatprep.subr.bf16.mxu0 0
      %575 = vmatpush2.bf16.msra.mxu0 0
      %576 = vmatprep.subr.bf16.mxu0 0
      %577 = vmatpush2.bf16.msra.mxu0 0
      %578 = vmatprep.mubr.bf16.mxu0 0
      %579 = vmatmul.mubr.bf16.gmra.mxu0 %v535
      %v580 = vpop.f32.mrf.mxu0
      %v581 = vadd.f32 %v476, %v580
      %v582 = vpop.f32.mrf.mxu0
      %v583 = vadd.f32 %v476, %v582
      %v584 = vpop.f32.mrf.mxu0
      %v585 = vadd.f32 %v481, %v584
      %v586 = vpop.f32.mrf.mxu0
      %v587 = vadd.f32 %v481, %v586
      %588 = vmatprep.mubr.bf16.mxu0 0
      %589 = vmatmul.mubr.bf16.gmra.mxu0 %v538
      %v590 = vpop.f32.mrf.mxu0
      %v591 = vadd.f32 %v486, %v590
      %v592 = vpop.f32.mrf.mxu0
      %v593 = vadd.f32 %v486, %v592
      %v594 = vpop.f32.mrf.mxu0
      %v595 = vadd.f32 %v491, %v594
      %v596 = vpop.f32.mrf.mxu0
      %v597 = vadd.f32 %v491, %v596
      %598 = vmatprep.mubr.bf16.mxu0 0
      %599 = vmatmul.mubr.bf16.gmra.mxu0 %v541
      %v600 = vpop.f32.mrf.mxu0
      %v601 = vadd.f32 %v496, %v600
      %v602 = vpop.f32.mrf.mxu0
      %v603 = vadd.f32 %v496, %v602
      %v604 = vpop.f32.mrf.mxu0
      %v605 = vadd.f32 %v501, %v604
      %v606 = vpop.f32.mrf.mxu0
      %v607 = vadd.f32 %v501, %v606
      %608 = vmatprep.mubr.bf16.mxu0 0
      %609 = vmatmul.mubr.bf16.gmra.mxu0 %v544
      %v610 = vpop.f32.mrf.mxu0
      %v611 = vadd.f32 %v506, %v610
      %v612 = vpop.f32.mrf.mxu0
      %v613 = vadd.f32 %v506, %v612
      %v614 = vpop.f32.mrf.mxu0
      %v615 = vadd.f32 %v511, %v614
      %v616 = vpop.f32.mrf.mxu0
      %v617 = vadd.f32 %v511, %v616
      %618 = vdwg.mxu0
      %619 = vmatprep.subr.bf16.mxu0 0
      %620 = vmatpush1.bf16.msra.mxu0 0
      %621 = vmatprep.subr.bf16.mxu0 0
      %622 = vmatpush1.bf16.msra.mxu0 0
      %623 = vmatprep.subr.bf16.mxu0 0
      %624 = vmatpush1.bf16.msra.mxu0 0
      %625 = vmatprep.subr.bf16.mxu0 0
      %626 = vmatpush1.bf16.msra.mxu0 0
      %627 = vmatprep.subr.bf16.mxu0 0
      %628 = vmatpush1.bf16.msra.mxu0 0
      %629 = vmatprep.subr.bf16.mxu0 0
      %630 = vmatpush1.bf16.msra.mxu0 0
      %631 = vmatprep.subr.bf16.mxu0 %v428
      %632 = vmatpush1.bf16.msra.mxu0 %v427
      %633 = vmatprep.subr.bf16.mxu0 %v396
      %634 = vmatpush1.bf16.msra.mxu0 %v395
      %635 = vmatprep.subr.bf16.mxu0 0
      %636 = vmatpush2.bf16.msra.mxu0 0
      %637 = vmatprep.subr.bf16.mxu0 0
      %638 = vmatpush2.bf16.msra.mxu0 0
      %639 = vmatprep.subr.bf16.mxu0 0
      %640 = vmatpush2.bf16.msra.mxu0 0
      %641 = vmatprep.subr.bf16.mxu0 0
      %642 = vmatpush2.bf16.msra.mxu0 0
      %643 = vmatprep.subr.bf16.mxu0 0
      %644 = vmatpush2.bf16.msra.mxu0 0
      %645 = vmatprep.subr.bf16.mxu0 0
      %646 = vmatpush2.bf16.msra.mxu0 0
      %647 = vmatprep.subr.bf16.mxu0 0
      %648 = vmatpush2.bf16.msra.mxu0 0
      %649 = vmatprep.subr.bf16.mxu0 0
      %650 = vmatpush2.bf16.msra.mxu0 0
      %651 = vmatprep.mubr.bf16.mxu0 0
      %652 = vmatmul.mubr.bf16.gmra.mxu0 %v535
      %v653 = vpop.f32.mrf.mxu0
      %v654 = vadd.f32 %v476, %v653
      %v655 = vpop.f32.mrf.mxu0
      %v656 = vadd.f32 %v476, %v655
      %v657 = vpop.f32.mrf.mxu0
      %v658 = vadd.f32 %v481, %v657
      %v659 = vpop.f32.mrf.mxu0
      %v660 = vadd.f32 %v481, %v659
      %661 = vmatprep.mubr.bf16.mxu0 0
      %662 = vmatmul.mubr.bf16.gmra.mxu0 %v538
      %v663 = vpop.f32.mrf.mxu0
      %v664 = vadd.f32 %v486, %v663
      %v665 = vpop.f32.mrf.mxu0
      %v666 = vadd.f32 %v486, %v665
      %v667 = vpop.f32.mrf.mxu0
      %v668 = vadd.f32 %v491, %v667
      %v669 = vpop.f32.mrf.mxu0
      %v670 = vadd.f32 %v491, %v669
      %671 = vmatprep.mubr.bf16.mxu0 0
      %672 = vmatmul.mubr.bf16.gmra.mxu0 %v541
      %v673 = vpop.f32.mrf.mxu0
      %v674 = vadd.f32 %v496, %v673
      %v675 = vpop.f32.mrf.mxu0
      %v676 = vadd.f32 %v496, %v675
      %v677 = vpop.f32.mrf.mxu0
      %v678 = vadd.f32 %v501, %v677
      %v679 = vpop.f32.mrf.mxu0
      %v680 = vadd.f32 %v501, %v679
      %681 = vmatprep.mubr.bf16.mxu0 0
      %682 = vmatmul.mubr.bf16.gmra.mxu0 %v544
      %v683 = vpop.f32.mrf.mxu0
      %v684 = vadd.f32 %v506, %v683
      %v685 = vpop.f32.mrf.mxu0
      %v686 = vadd.f32 %v506, %v685
      %v687 = vpop.f32.mrf.mxu0
      %v688 = vadd.f32 %v511, %v687
      %v689 = vpop.f32.mrf.mxu0
      %v690 = vadd.f32 %v511, %v689
      %691 = vdwg.mxu0
      %692 = vmatprep.subr.bf16.mxu0 0
      %693 = vmatpush1.bf16.msra.mxu0 0
      %694 = vmatprep.subr.bf16.mxu0 0
      %695 = vmatpush1.bf16.msra.mxu0 0
      %696 = vmatprep.subr.bf16.mxu0 0
      %697 = vmatpush1.bf16.msra.mxu0 0
      %698 = vmatprep.subr.bf16.mxu0 0
      %699 = vmatpush1.bf16.msra.mxu0 0
      %700 = vmatprep.subr.bf16.mxu0 0
      %701 = vmatpush1.bf16.msra.mxu0 0
      %702 = vmatprep.subr.bf16.mxu0 0
      %703 = vmatpush1.bf16.msra.mxu0 0
      %704 = vmatprep.subr.bf16.mxu0 %v430
      %705 = vmatpush1.bf16.msra.mxu0 %v429
      %706 = vmatprep.subr.bf16.mxu0 %v398
      %707 = vmatpush1.bf16.msra.mxu0 %v397
      %708 = vmatprep.subr.bf16.mxu0 0
      %709 = vmatpush2.bf16.msra.mxu0 0
      %710 = vmatprep.subr.bf16.mxu0 0
      %711 = vmatpush2.bf16.msra.mxu0 0
      %712 = vmatprep.subr.bf16.mxu0 0
      %713 = vmatpush2.bf16.msra.mxu0 0
      %714 = vmatprep.subr.bf16.mxu0 0
      %715 = vmatpush2.bf16.msra.mxu0 0
      %716 = vmatprep.subr.bf16.mxu0 0
      %717 = vmatpush2.bf16.msra.mxu0 0
      %718 = vmatprep.subr.bf16.mxu0 0
      %719 = vmatpush2.bf16.msra.mxu0 0
      %720 = vmatprep.subr.bf16.mxu0 0
      %721 = vmatpush2.bf16.msra.mxu0 0
      %722 = vmatprep.subr.bf16.mxu0 0
      %723 = vmatpush2.bf16.msra.mxu0 0
      %724 = vmatprep.mubr.bf16.mxu0 0
      %725 = vmatmul.mubr.bf16.gmra.mxu0 %v535
      %v726 = vpop.f32.mrf.mxu0
      %v727 = vadd.f32 %v476, %v726
      %v728 = vpop.f32.mrf.mxu0
      %v729 = vadd.f32 %v476, %v728
      %v730 = vpop.f32.mrf.mxu0
      %v731 = vadd.f32 %v481, %v730
      %v732 = vpop.f32.mrf.mxu0
      %v733 = vadd.f32 %v481, %v732
      %734 = vmatprep.mubr.bf16.mxu0 0
      %735 = vmatmul.mubr.bf16.gmra.mxu0 %v538
      %v736 = vpop.f32.mrf.mxu0
      %v737 = vadd.f32 %v486, %v736
      %v738 = vpop.f32.mrf.mxu0
      %v739 = vadd.f32 %v486, %v738
      %v740 = vpop.f32.mrf.mxu0
      %v741 = vadd.f32 %v491, %v740
      %v742 = vpop.f32.mrf.mxu0
      %v743 = vadd.f32 %v491, %v742
      %744 = vmatprep.mubr.bf16.mxu0 0
      %745 = vmatmul.mubr.bf16.gmra.mxu0 %v541
      %v746 = vpop.f32.mrf.mxu0
      %v747 = vadd.f32 %v496, %v746
      %v748 = vpop.f32.mrf.mxu0
      %v749 = vadd.f32 %v496, %v748
      %v750 = vpop.f32.mrf.mxu0
      %v751 = vadd.f32 %v501, %v750
      %v752 = vpop.f32.mrf.mxu0
      %v753 = vadd.f32 %v501, %v752
      %754 = vmatprep.mubr.bf16.mxu0 0
      %755 = vmatmul.mubr.bf16.gmra.mxu0 %v544
      %v756 = vpop.f32.mrf.mxu0
      %v757 = vadd.f32 %v506, %v756
      %v758 = vpop.f32.mrf.mxu0
      %v759 = vadd.f32 %v506, %v758
      %v760 = vpop.f32.mrf.mxu0
      %v761 = vadd.f32 %v511, %v760
      %v762 = vpop.f32.mrf.mxu0
      %v763 = vadd.f32 %v511, %v762
      %764 = vdwg.mxu0
      %765 = vmatprep.subr.bf16.mxu0 0
      %766 = vmatpush1.bf16.msra.mxu0 0
      %767 = vmatprep.subr.bf16.mxu0 0
      %768 = vmatpush1.bf16.msra.mxu0 0
      %769 = vmatprep.subr.bf16.mxu0 0
      %770 = vmatpush1.bf16.msra.mxu0 0
      %771 = vmatprep.subr.bf16.mxu0 0
      %772 = vmatpush1.bf16.msra.mxu0 0
      %773 = vmatprep.subr.bf16.mxu0 0
      %774 = vmatpush1.bf16.msra.mxu0 0
      %775 = vmatprep.subr.bf16.mxu0 0
      %776 = vmatpush1.bf16.msra.mxu0 0
      %777 = vmatprep.subr.bf16.mxu0 %v432
      %778 = vmatpush1.bf16.msra.mxu0 %v431
      %779 = vmatprep.subr.bf16.mxu0 %v400
      %780 = vmatpush1.bf16.msra.mxu0 %v399
      %781 = vmatprep.subr.bf16.mxu0 0
      %782 = vmatpush2.bf16.msra.mxu0 0
      %783 = vmatprep.subr.bf16.mxu0 0
      %784 = vmatpush2.bf16.msra.mxu0 0
      %785 = vmatprep.subr.bf16.mxu0 0
      %786 = vmatpush2.bf16.msra.mxu0 0
      %787 = vmatprep.subr.bf16.mxu0 0
      %788 = vmatpush2.bf16.msra.mxu0 0
      %789 = vmatprep.subr.bf16.mxu0 0
      %790 = vmatpush2.bf16.msra.mxu0 0
      %791 = vmatprep.subr.bf16.mxu0 0
      %792 = vmatpush2.bf16.msra.mxu0 0
      %793 = vmatprep.subr.bf16.mxu0 0
      %794 = vmatpush2.bf16.msra.mxu0 0
      %795 = vmatprep.subr.bf16.mxu0 0
      %796 = vmatpush2.bf16.msra.mxu0 0
      %797 = vmatprep.mubr.bf16.mxu0 0
      %798 = vmatmul.mubr.bf16.gmra.mxu0 %v535
      %v799 = vpop.f32.mrf.mxu0
      %v800 = vadd.f32 %v476, %v799
      %v801 = vpop.f32.mrf.mxu0
      %v802 = vadd.f32 %v476, %v801
      %v803 = vpop.f32.mrf.mxu0
      %v804 = vadd.f32 %v481, %v803
      %v805 = vpop.f32.mrf.mxu0
      %v806 = vadd.f32 %v481, %v805
      %807 = vmatprep.mubr.bf16.mxu0 0
      %808 = vmatmul.mubr.bf16.gmra.mxu0 %v538
      %v809 = vpop.f32.mrf.mxu0
      %v810 = vadd.f32 %v486, %v809
      %v811 = vpop.f32.mrf.mxu0
      %v812 = vadd.f32 %v486, %v811
      %v813 = vpop.f32.mrf.mxu0
      %v814 = vadd.f32 %v491, %v813
      %v815 = vpop.f32.mrf.mxu0
      %v816 = vadd.f32 %v491, %v815
      %817 = vmatprep.mubr.bf16.mxu0 0
      %818 = vmatmul.mubr.bf16.gmra.mxu0 %v541
      %v819 = vpop.f32.mrf.mxu0
      %v820 = vadd.f32 %v496, %v819
      %v821 = vpop.f32.mrf.mxu0
      %v822 = vadd.f32 %v496, %v821
      %v823 = vpop.f32.mrf.mxu0
      %v824 = vadd.f32 %v501, %v823
      %v825 = vpop.f32.mrf.mxu0
      %v826 = vadd.f32 %v501, %v825
      %827 = vmatprep.mubr.bf16.mxu0 0
      %828 = vmatmul.mubr.bf16.gmra.mxu0 %v544
      %v829 = vpop.f32.mrf.mxu0
      %v830 = vadd.f32 %v506, %v829
      %v831 = vpop.f32.mrf.mxu0
      %v832 = vadd.f32 %v506, %v831
      %v833 = vpop.f32.mrf.mxu0
      %v834 = vadd.f32 %v511, %v833
      %v835 = vpop.f32.mrf.mxu0
      %v836 = vadd.f32 %v511, %v835
      %837 = vdwg.mxu0
      %838 = vmatprep.subr.bf16.mxu0 0
      %839 = vmatpush1.bf16.msra.mxu0 0
      %840 = vmatprep.subr.bf16.mxu0 0
      %841 = vmatpush1.bf16.msra.mxu0 0
      %842 = vmatprep.subr.bf16.mxu0 0
      %843 = vmatpush1.bf16.msra.mxu0 0
      %844 = vmatprep.subr.bf16.mxu0 0
      %845 = vmatpush1.bf16.msra.mxu0 0
      %846 = vmatprep.subr.bf16.mxu0 0
      %847 = vmatpush1.bf16.msra.mxu0 0
      %848 = vmatprep.subr.bf16.mxu0 0
      %849 = vmatpush1.bf16.msra.mxu0 0
      %850 = vmatprep.subr.bf16.mxu0 %v434
      %851 = vmatpush1.bf16.msra.mxu0 %v433
      %852 = vmatprep.subr.bf16.mxu0 %v402
      %853 = vmatpush1.bf16.msra.mxu0 %v401
      %854 = vmatprep.subr.bf16.mxu0 0
      %855 = vmatpush2.bf16.msra.mxu0 0
      %856 = vmatprep.subr.bf16.mxu0 0
      %857 = vmatpush2.bf16.msra.mxu0 0
      %858 = vmatprep.subr.bf16.mxu0 0
      %859 = vmatpush2.bf16.msra.mxu0 0
      %860 = vmatprep.subr.bf16.mxu0 0
      %861 = vmatpush2.bf16.msra.mxu0 0
      %862 = vmatprep.subr.bf16.mxu0 0
      %863 = vmatpush2.bf16.msra.mxu0 0
      %864 = vmatprep.subr.bf16.mxu0 0
      %865 = vmatpush2.bf16.msra.mxu0 0
      %866 = vmatprep.subr.bf16.mxu0 0
      %867 = vmatpush2.bf16.msra.mxu0 0
      %868 = vmatprep.subr.bf16.mxu0 0
      %869 = vmatpush2.bf16.msra.mxu0 0
      %870 = vmatprep.mubr.bf16.mxu0 0
      %871 = vmatmul.mubr.bf16.gmra.mxu0 %v535
      %v872 = vpop.f32.mrf.mxu0
      %v873 = vadd.f32 %v476, %v872
      %v874 = vpop.f32.mrf.mxu0
      %v875 = vadd.f32 %v476, %v874
      %v876 = vpop.f32.mrf.mxu0
      %v877 = vadd.f32 %v481, %v876
      %v878 = vpop.f32.mrf.mxu0
      %v879 = vadd.f32 %v481, %v878
      %880 = vmatprep.mubr.bf16.mxu0 0
      %881 = vmatmul.mubr.bf16.gmra.mxu0 %v538
      %v882 = vpop.f32.mrf.mxu0
      %v883 = vadd.f32 %v486, %v882
      %v884 = vpop.f32.mrf.mxu0
      %v885 = vadd.f32 %v486, %v884
      %v886 = vpop.f32.mrf.mxu0
      %v887 = vadd.f32 %v491, %v886
      %v888 = vpop.f32.mrf.mxu0
      %v889 = vadd.f32 %v491, %v888
      %890 = vmatprep.mubr.bf16.mxu0 0
      %891 = vmatmul.mubr.bf16.gmra.mxu0 %v541
      %v892 = vpop.f32.mrf.mxu0
      %v893 = vadd.f32 %v496, %v892
      %v894 = vpop.f32.mrf.mxu0
      %v895 = vadd.f32 %v496, %v894
      %v896 = vpop.f32.mrf.mxu0
      %v897 = vadd.f32 %v501, %v896
      %v898 = vpop.f32.mrf.mxu0
      %v899 = vadd.f32 %v501, %v898
      %900 = vmatprep.mubr.bf16.mxu0 0
      %901 = vmatmul.mubr.bf16.gmra.mxu0 %v544
      %v902 = vpop.f32.mrf.mxu0
      %v903 = vadd.f32 %v506, %v902
      %v904 = vpop.f32.mrf.mxu0
      %v905 = vadd.f32 %v506, %v904
      %v906 = vpop.f32.mrf.mxu0
      %v907 = vadd.f32 %v511, %v906
      %v908 = vpop.f32.mrf.mxu0
      %v909 = vadd.f32 %v511, %v908
      %910 = vdwg.mxu0
      %911 = vmatprep.subr.bf16.mxu0 0
      %912 = vmatpush1.bf16.msra.mxu0 0
      %913 = vmatprep.subr.bf16.mxu0 0
      %914 = vmatpush1.bf16.msra.mxu0 0
      %915 = vmatprep.subr.bf16.mxu0 0
      %916 = vmatpush1.bf16.msra.mxu0 0
      %917 = vmatprep.subr.bf16.mxu0 0
      %918 = vmatpush1.bf16.msra.mxu0 0
      %919 = vmatprep.subr.bf16.mxu0 0
      %920 = vmatpush1.bf16.msra.mxu0 0
      %921 = vmatprep.subr.bf16.mxu0 0
      %922 = vmatpush1.bf16.msra.mxu0 0
      %923 = vmatprep.subr.bf16.mxu0 %v436
      %924 = vmatpush1.bf16.msra.mxu0 %v435
      %925 = vmatprep.subr.bf16.mxu0 %v404
      %926 = vmatpush1.bf16.msra.mxu0 %v403
      %927 = vmatprep.subr.bf16.mxu0 0
      %928 = vmatpush2.bf16.msra.mxu0 0
      %929 = vmatprep.subr.bf16.mxu0 0
      %930 = vmatpush2.bf16.msra.mxu0 0
      %931 = vmatprep.subr.bf16.mxu0 0
      %932 = vmatpush2.bf16.msra.mxu0 0
      %933 = vmatprep.subr.bf16.mxu0 0
      %934 = vmatpush2.bf16.msra.mxu0 0
      %935 = vmatprep.subr.bf16.mxu0 0
      %936 = vmatpush2.bf16.msra.mxu0 0
      %937 = vmatprep.subr.bf16.mxu0 0
      %938 = vmatpush2.bf16.msra.mxu0 0
      %939 = vmatprep.subr.bf16.mxu0 0
      %940 = vmatpush2.bf16.msra.mxu0 0
      %941 = vmatprep.subr.bf16.mxu0 0
      %942 = vmatpush2.bf16.msra.mxu0 0
      %943 = vmatprep.mubr.bf16.mxu0 0
      %944 = vmatmul.mubr.bf16.gmra.mxu0 %v535
      %v945 = vpop.f32.mrf.mxu0
      %v946 = vadd.f32 %v476, %v945
      %v947 = vpop.f32.mrf.mxu0
      %v948 = vadd.f32 %v476, %v947
      %v949 = vpop.f32.mrf.mxu0
      %v950 = vadd.f32 %v481, %v949
      %v951 = vpop.f32.mrf.mxu0
      %v952 = vadd.f32 %v481, %v951
      %953 = vmatprep.mubr.bf16.mxu0 0
      %954 = vmatmul.mubr.bf16.gmra.mxu0 %v538
      %v955 = vpop.f32.mrf.mxu0
      %v956 = vadd.f32 %v486, %v955
      %v957 = vpop.f32.mrf.mxu0
      %v958 = vadd.f32 %v486, %v957
      %v959 = vpop.f32.mrf.mxu0
      %v960 = vadd.f32 %v491, %v959
      %v961 = vpop.f32.mrf.mxu0
      %v962 = vadd.f32 %v491, %v961
      %963 = vmatprep.mubr.bf16.mxu0 0
      %964 = vmatmul.mubr.bf16.gmra.mxu0 %v541
      %v965 = vpop.f32.mrf.mxu0
      %v966 = vadd.f32 %v496, %v965
      %v967 = vpop.f32.mrf.mxu0
      %v968 = vadd.f32 %v496, %v967
      %v969 = vpop.f32.mrf.mxu0
      %v970 = vadd.f32 %v501, %v969
      %v971 = vpop.f32.mrf.mxu0
      %v972 = vadd.f32 %v501, %v971
      %973 = vmatprep.mubr.bf16.mxu0 0
      %974 = vmatmul.mubr.bf16.gmra.mxu0 %v544
      %v975 = vpop.f32.mrf.mxu0
      %v976 = vadd.f32 %v506, %v975
      %v977 = vpop.f32.mrf.mxu0
      %v978 = vadd.f32 %v506, %v977
      %v979 = vpop.f32.mrf.mxu0
      %v980 = vadd.f32 %v511, %v979
      %v981 = vpop.f32.mrf.mxu0
      %v982 = vadd.f32 %v511, %v981
      %983 = vdwg.mxu0
      %984 = vmatprep.subr.bf16.mxu0 0
      %985 = vmatpush1.bf16.msra.mxu0 0
      %986 = vmatprep.subr.bf16.mxu0 0
      %987 = vmatpush1.bf16.msra.mxu0 0
      %988 = vmatprep.subr.bf16.mxu0 0
      %989 = vmatpush1.bf16.msra.mxu0 0
      %990 = vmatprep.subr.bf16.mxu0 0
      %991 = vmatpush1.bf16.msra.mxu0 0
      %992 = vmatprep.subr.bf16.mxu0 0
      %993 = vmatpush1.bf16.msra.mxu0 0
      %994 = vmatprep.subr.bf16.mxu0 0
      %995 = vmatpush1.bf16.msra.mxu0 0
      %996 = vmatprep.subr.bf16.mxu0 %v438
      %997 = vmatpush1.bf16.msra.mxu0 %v437
      %998 = vmatprep.subr.bf16.mxu0 %v406
      %999 = vmatpush1.bf16.msra.mxu0 %v405
      %1000 = vmatprep.subr.bf16.mxu0 0
      %1001 = vmatpush2.bf16.msra.mxu0 0
      %1002 = vmatprep.subr.bf16.mxu0 0
      %1003 = vmatpush2.bf16.msra.mxu0 0
      %1004 = vmatprep.subr.bf16.mxu0 0
      %1005 = vmatpush2.bf16.msra.mxu0 0
      %1006 = vmatprep.subr.bf16.mxu0 0
      %1007 = vmatpush2.bf16.msra.mxu0 0
      %1008 = vmatprep.subr.bf16.mxu0 0
      %1009 = vmatpush2.bf16.msra.mxu0 0
      %1010 = vmatprep.subr.bf16.mxu0 0
      %1011 = vmatpush2.bf16.msra.mxu0 0
      %1012 = vmatprep.subr.bf16.mxu0 0
      %1013 = vmatpush2.bf16.msra.mxu0 0
      %1014 = vmatprep.subr.bf16.mxu0 0
      %1015 = vmatpush2.bf16.msra.mxu0 0
      %1016 = vmatprep.mubr.bf16.mxu0 0
      %1017 = vmatmul.mubr.bf16.gmra.mxu0 %v535
      %v1018 = vpop.f32.mrf.mxu0
      %v1019 = vadd.f32 %v476, %v1018
      %v1020 = vpop.f32.mrf.mxu0
      %v1021 = vadd.f32 %v476, %v1020
      %v1022 = vpop.f32.mrf.mxu0
      %v1023 = vadd.f32 %v481, %v1022
      %v1024 = vpop.f32.mrf.mxu0
      %v1025 = vadd.f32 %v481, %v1024
      %1026 = vmatprep.mubr.bf16.mxu0 0
      %1027 = vmatmul.mubr.bf16.gmra.mxu0 %v538
      %v1028 = vpop.f32.mrf.mxu0
      %v1029 = vadd.f32 %v486, %v1028
      %v1030 = vpop.f32.mrf.mxu0
      %v1031 = vadd.f32 %v486, %v1030
      %v1032 = vpop.f32.mrf.mxu0
      %v1033 = vadd.f32 %v491, %v1032
      %v1034 = vpop.f32.mrf.mxu0
      %v1035 = vadd.f32 %v491, %v1034
      %1036 = vmatprep.mubr.bf16.mxu0 0
      %1037 = vmatmul.mubr.bf16.gmra.mxu0 %v541
      %v1038 = vpop.f32.mrf.mxu0
      %v1039 = vadd.f32 %v496, %v1038
      %v1040 = vpop.f32.mrf.mxu0
      %v1041 = vadd.f32 %v496, %v1040
      %v1042 = vpop.f32.mrf.mxu0
      %v1043 = vadd.f32 %v501, %v1042
      %v1044 = vpop.f32.mrf.mxu0
      %v1045 = vadd.f32 %v501, %v1044
      %1046 = vmatprep.mubr.bf16.mxu0 0
      %1047 = vmatmul.mubr.bf16.gmra.mxu0 %v544
      %v1048 = vpop.f32.mrf.mxu0
      %v1049 = vadd.f32 %v506, %v1048
      %v1050 = vpop.f32.mrf.mxu0
      %v1051 = vadd.f32 %v506, %v1050
      %v1052 = vpop.f32.mrf.mxu0
      %v1053 = vadd.f32 %v511, %v1052
      %v1054 = vpop.f32.mrf.mxu0
      %v1055 = vadd.f32 %v511, %v1054
      %1056 = vdwg.mxu0
      %1057 = vmatprep.subr.bf16.mxu0 0
      %1058 = vmatpush1.bf16.msra.mxu0 0
      %1059 = vmatprep.subr.bf16.mxu0 0
      %1060 = vmatpush1.bf16.msra.mxu0 0
      %1061 = vmatprep.subr.bf16.mxu0 0
      %1062 = vmatpush1.bf16.msra.mxu0 0
      %1063 = vmatprep.subr.bf16.mxu0 0
      %1064 = vmatpush1.bf16.msra.mxu0 0
      %1065 = vmatprep.subr.bf16.mxu0 0
      %1066 = vmatpush1.bf16.msra.mxu0 0
      %1067 = vmatprep.subr.bf16.mxu0 0
      %1068 = vmatpush1.bf16.msra.mxu0 0
      %1069 = vmatprep.subr.bf16.mxu0 %v440
      %1070 = vmatpush1.bf16.msra.mxu0 %v439
      %1071 = vmatprep.subr.bf16.mxu0 %v408
      %1072 = vmatpush1.bf16.msra.mxu0 %v407
      %1073 = vmatprep.subr.bf16.mxu0 0
      %1074 = vmatpush2.bf16.msra.mxu0 0
      %1075 = vmatprep.subr.bf16.mxu0 0
      %1076 = vmatpush2.bf16.msra.mxu0 0
      %1077 = vmatprep.subr.bf16.mxu0 0
      %1078 = vmatpush2.bf16.msra.mxu0 0
      %1079 = vmatprep.subr.bf16.mxu0 0
      %1080 = vmatpush2.bf16.msra.mxu0 0
      %1081 = vmatprep.subr.bf16.mxu0 0
      %1082 = vmatpush2.bf16.msra.mxu0 0
      %1083 = vmatprep.subr.bf16.mxu0 0
      %1084 = vmatpush2.bf16.msra.mxu0 0
      %1085 = vmatprep.subr.bf16.mxu0 0
      %1086 = vmatpush2.bf16.msra.mxu0 0
      %1087 = vmatprep.subr.bf16.mxu0 0
      %1088 = vmatpush2.bf16.msra.mxu0 0
      %1089 = vmatprep.mubr.bf16.mxu0 0
      %1090 = vmatmul.mubr.bf16.gmra.mxu0 %v535
      %v1091 = vpop.f32.mrf.mxu0
      %v1092 = vadd.f32 %v476, %v1091
      %v1093 = vpop.f32.mrf.mxu0
      %v1094 = vadd.f32 %v476, %v1093
      %v1095 = vpop.f32.mrf.mxu0
      %v1096 = vadd.f32 %v481, %v1095
      %v1097 = vpop.f32.mrf.mxu0
      %v1098 = vadd.f32 %v481, %v1097
      %1099 = vmatprep.mubr.bf16.mxu0 0
      %1100 = vmatmul.mubr.bf16.gmra.mxu0 %v538
      %v1101 = vpop.f32.mrf.mxu0
      %v1102 = vadd.f32 %v486, %v1101
      %v1103 = vpop.f32.mrf.mxu0
      %v1104 = vadd.f32 %v486, %v1103
      %v1105 = vpop.f32.mrf.mxu0
      %v1106 = vadd.f32 %v491, %v1105
      %v1107 = vpop.f32.mrf.mxu0
      %v1108 = vadd.f32 %v491, %v1107
      %1109 = vmatprep.mubr.bf16.mxu0 0
      %1110 = vmatmul.mubr.bf16.gmra.mxu0 %v541
      %v1111 = vpop.f32.mrf.mxu0
      %v1112 = vadd.f32 %v496, %v1111
      %v1113 = vpop.f32.mrf.mxu0
      %v1114 = vadd.f32 %v496, %v1113
      %v1115 = vpop.f32.mrf.mxu0
      %v1116 = vadd.f32 %v501, %v1115
      %v1117 = vpop.f32.mrf.mxu0
      %v1118 = vadd.f32 %v501, %v1117
      %1119 = vmatprep.mubr.bf16.mxu0 0
      %1120 = vmatmul.mubr.bf16.gmra.mxu0 %v544
      %v1121 = vpop.f32.mrf.mxu0
      %v1122 = vadd.f32 %v506, %v1121
      %v1123 = vpop.f32.mrf.mxu0
      %v1124 = vadd.f32 %v506, %v1123
      %v1125 = vpop.f32.mrf.mxu0
      %v1126 = vadd.f32 %v511, %v1125
      %v1127 = vpop.f32.mrf.mxu0
      %v1128 = vadd.f32 %v511, %v1127
      %1129 = vdwg.mxu0
      %1130 = vmatprep.subr.bf16.mxu0 0
      %1131 = vmatpush1.bf16.msra.mxu0 0
      %1132 = vmatprep.subr.bf16.mxu0 0
      %1133 = vmatpush1.bf16.msra.mxu0 0
      %1134 = vmatprep.subr.bf16.mxu0 0
      %1135 = vmatpush1.bf16.msra.mxu0 0
      %1136 = vmatprep.subr.bf16.mxu0 0
      %1137 = vmatpush1.bf16.msra.mxu0 0
      %1138 = vmatprep.subr.bf16.mxu0 0
      %1139 = vmatpush1.bf16.msra.mxu0 0
      %1140 = vmatprep.subr.bf16.mxu0 0
      %1141 = vmatpush1.bf16.msra.mxu0 0
      %1142 = vmatprep.subr.bf16.mxu0 %v442
      %1143 = vmatpush1.bf16.msra.mxu0 %v441
      %1144 = vmatprep.subr.bf16.mxu0 %v410
      %1145 = vmatpush1.bf16.msra.mxu0 %v409
      %1146 = vmatprep.subr.bf16.mxu0 0
      %1147 = vmatpush2.bf16.msra.mxu0 0
      %1148 = vmatprep.subr.bf16.mxu0 0
      %1149 = vmatpush2.bf16.msra.mxu0 0
      %1150 = vmatprep.subr.bf16.mxu0 0
      %1151 = vmatpush2.bf16.msra.mxu0 0
      %1152 = vmatprep.subr.bf16.mxu0 0
      %1153 = vmatpush2.bf16.msra.mxu0 0
      %1154 = vmatprep.subr.bf16.mxu0 0
      %1155 = vmatpush2.bf16.msra.mxu0 0
      %1156 = vmatprep.subr.bf16.mxu0 0
      %1157 = vmatpush2.bf16.msra.mxu0 0
      %1158 = vmatprep.subr.bf16.mxu0 0
      %1159 = vmatpush2.bf16.msra.mxu0 0
      %1160 = vmatprep.subr.bf16.mxu0 0
      %1161 = vmatpush2.bf16.msra.mxu0 0
      %1162 = vmatprep.mubr.bf16.mxu0 0
      %1163 = vmatmul.mubr.bf16.gmra.mxu0 %v535
      %v1164 = vpop.f32.mrf.mxu0
      %v1165 = vadd.f32 %v476, %v1164
      %v1166 = vpop.f32.mrf.mxu0
      %v1167 = vadd.f32 %v476, %v1166
      %v1168 = vpop.f32.mrf.mxu0
      %v1169 = vadd.f32 %v481, %v1168
      %v1170 = vpop.f32.mrf.mxu0
      %v1171 = vadd.f32 %v481, %v1170
      %1172 = vmatprep.mubr.bf16.mxu0 0
      %1173 = vmatmul.mubr.bf16.gmra.mxu0 %v538
      %v1174 = vpop.f32.mrf.mxu0
      %v1175 = vadd.f32 %v486, %v1174
      %v1176 = vpop.f32.mrf.mxu0
      %v1177 = vadd.f32 %v486, %v1176
      %v1178 = vpop.f32.mrf.mxu0
      %v1179 = vadd.f32 %v491, %v1178
      %v1180 = vpop.f32.mrf.mxu0
      %v1181 = vadd.f32 %v491, %v1180
      %1182 = vmatprep.mubr.bf16.mxu0 0
      %1183 = vmatmul.mubr.bf16.gmra.mxu0 %v541
      %v1184 = vpop.f32.mrf.mxu0
      %v1185 = vadd.f32 %v496, %v1184
      %v1186 = vpop.f32.mrf.mxu0
      %v1187 = vadd.f32 %v496, %v1186
      %v1188 = vpop.f32.mrf.mxu0
      %v1189 = vadd.f32 %v501, %v1188
      %v1190 = vpop.f32.mrf.mxu0
      %v1191 = vadd.f32 %v501, %v1190
      %1192 = vmatprep.mubr.bf16.mxu0 0
      %1193 = vmatmul.mubr.bf16.gmra.mxu0 %v544
      %v1194 = vpop.f32.mrf.mxu0
      %v1195 = vadd.f32 %v506, %v1194
      %v1196 = vpop.f32.mrf.mxu0
      %v1197 = vadd.f32 %v506, %v1196
      %v1198 = vpop.f32.mrf.mxu0
      %v1199 = vadd.f32 %v511, %v1198
      %v1200 = vpop.f32.mrf.mxu0
      %v1201 = vadd.f32 %v511, %v1200
      %1202 = vdwg.mxu0
      %1203 = vmatprep.subr.bf16.mxu0 0
      %1204 = vmatpush1.bf16.msra.mxu0 0
      %1205 = vmatprep.subr.bf16.mxu0 0
      %1206 = vmatpush1.bf16.msra.mxu0 0
      %1207 = vmatprep.subr.bf16.mxu0 0
      %1208 = vmatpush1.bf16.msra.mxu0 0
      %1209 = vmatprep.subr.bf16.mxu0 0
      %1210 = vmatpush1.bf16.msra.mxu0 0
      %1211 = vmatprep.subr.bf16.mxu0 0
      %1212 = vmatpush1.bf16.msra.mxu0 0
      %1213 = vmatprep.subr.bf16.mxu0 0
      %1214 = vmatpush1.bf16.msra.mxu0 0
      %1215 = vmatprep.subr.bf16.mxu0 %v444
      %1216 = vmatpush1.bf16.msra.mxu0 %v443
      %1217 = vmatprep.subr.bf16.mxu0 %v412
      %1218 = vmatpush1.bf16.msra.mxu0 %v411
      %1219 = vmatprep.subr.bf16.mxu0 0
      %1220 = vmatpush2.bf16.msra.mxu0 0
      %1221 = vmatprep.subr.bf16.mxu0 0
      %1222 = vmatpush2.bf16.msra.mxu0 0
      %1223 = vmatprep.subr.bf16.mxu0 0
      %1224 = vmatpush2.bf16.msra.mxu0 0
      %1225 = vmatprep.subr.bf16.mxu0 0
      %1226 = vmatpush2.bf16.msra.mxu0 0
      %1227 = vmatprep.subr.bf16.mxu0 0
      %1228 = vmatpush2.bf16.msra.mxu0 0
      %1229 = vmatprep.subr.bf16.mxu0 0
      %1230 = vmatpush2.bf16.msra.mxu0 0
      %1231 = vmatprep.subr.bf16.mxu0 0
      %1232 = vmatpush2.bf16.msra.mxu0 0
      %1233 = vmatprep.subr.bf16.mxu0 0
      %1234 = vmatpush2.bf16.msra.mxu0 0
      %1235 = vmatprep.mubr.bf16.mxu0 0
      %1236 = vmatmul.mubr.bf16.gmra.mxu0 %v535
      %v1237 = vpop.f32.mrf.mxu0
      %v1238 = vadd.f32 %v476, %v1237
      %v1239 = vpop.f32.mrf.mxu0
      %v1240 = vadd.f32 %v476, %v1239
      %v1241 = vpop.f32.mrf.mxu0
      %v1242 = vadd.f32 %v481, %v1241
      %v1243 = vpop.f32.mrf.mxu0
      %v1244 = vadd.f32 %v481, %v1243
      %1245 = vmatprep.mubr.bf16.mxu0 0
      %1246 = vmatmul.mubr.bf16.gmra.mxu0 %v538
      %v1247 = vpop.f32.mrf.mxu0
      %v1248 = vadd.f32 %v486, %v1247
      %v1249 = vpop.f32.mrf.mxu0
      %v1250 = vadd.f32 %v486, %v1249
      %v1251 = vpop.f32.mrf.mxu0
      %v1252 = vadd.f32 %v491, %v1251
      %v1253 = vpop.f32.mrf.mxu0
      %v1254 = vadd.f32 %v491, %v1253
      %1255 = vmatprep.mubr.bf16.mxu0 0
      %1256 = vmatmul.mubr.bf16.gmra.mxu0 %v541
      %v1257 = vpop.f32.mrf.mxu0
      %v1258 = vadd.f32 %v496, %v1257
      %v1259 = vpop.f32.mrf.mxu0
      %v1260 = vadd.f32 %v496, %v1259
      %v1261 = vpop.f32.mrf.mxu0
      %v1262 = vadd.f32 %v501, %v1261
      %v1263 = vpop.f32.mrf.mxu0
      %v1264 = vadd.f32 %v501, %v1263
      %1265 = vmatprep.mubr.bf16.mxu0 0
      %1266 = vmatmul.mubr.bf16.gmra.mxu0 %v544
      %v1267 = vpop.f32.mrf.mxu0
      %v1268 = vadd.f32 %v506, %v1267
      %v1269 = vpop.f32.mrf.mxu0
      %v1270 = vadd.f32 %v506, %v1269
      %v1271 = vpop.f32.mrf.mxu0
      %v1272 = vadd.f32 %v511, %v1271
      %v1273 = vpop.f32.mrf.mxu0
      %v1274 = vadd.f32 %v511, %v1273
      %1275 = vdwg.mxu0
      %1276 = vmatprep.subr.bf16.mxu0 0
      %1277 = vmatpush1.bf16.msra.mxu0 0
      %1278 = vmatprep.subr.bf16.mxu0 0
      %1279 = vmatpush1.bf16.msra.mxu0 0
      %1280 = vmatprep.subr.bf16.mxu0 0
      %1281 = vmatpush1.bf16.msra.mxu0 0
      %1282 = vmatprep.subr.bf16.mxu0 0
      %1283 = vmatpush1.bf16.msra.mxu0 0
      %1284 = vmatprep.subr.bf16.mxu0 0
      %1285 = vmatpush1.bf16.msra.mxu0 0
      %1286 = vmatprep.subr.bf16.mxu0 0
      %1287 = vmatpush1.bf16.msra.mxu0 0
      %1288 = vmatprep.subr.bf16.mxu0 %v446
      %1289 = vmatpush1.bf16.msra.mxu0 %v445
      %1290 = vmatprep.subr.bf16.mxu0 %v414
      %1291 = vmatpush1.bf16.msra.mxu0 %v413
      %1292 = vmatprep.subr.bf16.mxu0 0
      %1293 = vmatpush2.bf16.msra.mxu0 0
      %1294 = vmatprep.subr.bf16.mxu0 0
      %1295 = vmatpush2.bf16.msra.mxu0 0
      %1296 = vmatprep.subr.bf16.mxu0 0
      %1297 = vmatpush2.bf16.msra.mxu0 0
      %1298 = vmatprep.subr.bf16.mxu0 0
      %1299 = vmatpush2.bf16.msra.mxu0 0
      %1300 = vmatprep.subr.bf16.mxu0 0
      %1301 = vmatpush2.bf16.msra.mxu0 0
      %1302 = vmatprep.subr.bf16.mxu0 0
      %1303 = vmatpush2.bf16.msra.mxu0 0
      %1304 = vmatprep.subr.bf16.mxu0 0
      %1305 = vmatpush2.bf16.msra.mxu0 0
      %1306 = vmatprep.subr.bf16.mxu0 0
      %1307 = vmatpush2.bf16.msra.mxu0 0
      %1308 = vmatprep.mubr.bf16.mxu0 0
      %1309 = vmatmul.mubr.bf16.gmra.mxu0 %v535
      %v1310 = vpop.f32.mrf.mxu0
      %v1311 = vadd.f32 %v476, %v1310
      %v1312 = vpop.f32.mrf.mxu0
      %v1313 = vadd.f32 %v476, %v1312
      %v1314 = vpop.f32.mrf.mxu0
      %v1315 = vadd.f32 %v481, %v1314
      %v1316 = vpop.f32.mrf.mxu0
      %v1317 = vadd.f32 %v481, %v1316
      %1318 = vmatprep.mubr.bf16.mxu0 0
      %1319 = vmatmul.mubr.bf16.gmra.mxu0 %v538
      %v1320 = vpop.f32.mrf.mxu0
      %v1321 = vadd.f32 %v486, %v1320
      %v1322 = vpop.f32.mrf.mxu0
      %v1323 = vadd.f32 %v486, %v1322
      %v1324 = vpop.f32.mrf.mxu0
      %v1325 = vadd.f32 %v491, %v1324
      %v1326 = vpop.f32.mrf.mxu0
      %v1327 = vadd.f32 %v491, %v1326
      %1328 = vmatprep.mubr.bf16.mxu0 0
      %1329 = vmatmul.mubr.bf16.gmra.mxu0 %v541
      %v1330 = vpop.f32.mrf.mxu0
      %v1331 = vadd.f32 %v496, %v1330
      %v1332 = vpop.f32.mrf.mxu0
      %v1333 = vadd.f32 %v496, %v1332
      %v1334 = vpop.f32.mrf.mxu0
      %v1335 = vadd.f32 %v501, %v1334
      %v1336 = vpop.f32.mrf.mxu0
      %v1337 = vadd.f32 %v501, %v1336
      %1338 = vmatprep.mubr.bf16.mxu0 0
      %1339 = vmatmul.mubr.bf16.gmra.mxu0 %v544
      %v1340 = vpop.f32.mrf.mxu0
      %v1341 = vadd.f32 %v506, %v1340
      %v1342 = vpop.f32.mrf.mxu0
      %v1343 = vadd.f32 %v506, %v1342
      %v1344 = vpop.f32.mrf.mxu0
      %v1345 = vadd.f32 %v511, %v1344
      %v1346 = vpop.f32.mrf.mxu0
      %v1347 = vadd.f32 %v511, %v1346
      %1348 = vdwg.mxu0
      %1349 = vmatprep.subr.bf16.mxu0 0
      %1350 = vmatpush1.bf16.msra.mxu0 0
      %1351 = vmatprep.subr.bf16.mxu0 0
      %1352 = vmatpush1.bf16.msra.mxu0 0
      %1353 = vmatprep.subr.bf16.mxu0 0
      %1354 = vmatpush1.bf16.msra.mxu0 0
      %1355 = vmatprep.subr.bf16.mxu0 0
      %1356 = vmatpush1.bf16.msra.mxu0 0
      %1357 = vmatprep.subr.bf16.mxu0 0
      %1358 = vmatpush1.bf16.msra.mxu0 0
      %1359 = vmatprep.subr.bf16.mxu0 0
      %1360 = vmatpush1.bf16.msra.mxu0 0
      %1361 = vmatprep.subr.bf16.mxu0 %v448
      %1362 = vmatpush1.bf16.msra.mxu0 %v447
      %1363 = vmatprep.subr.bf16.mxu0 %v416
      %1364 = vmatpush1.bf16.msra.mxu0 %v415
      %1365 = vmatprep.subr.bf16.mxu0 0
      %1366 = vmatpush2.bf16.msra.mxu0 0
      %1367 = vmatprep.subr.bf16.mxu0 0
      %1368 = vmatpush2.bf16.msra.mxu0 0
      %1369 = vmatprep.subr.bf16.mxu0 0
      %1370 = vmatpush2.bf16.msra.mxu0 0
      %1371 = vmatprep.subr.bf16.mxu0 0
      %1372 = vmatpush2.bf16.msra.mxu0 0
      %1373 = vmatprep.subr.bf16.mxu0 0
      %1374 = vmatpush2.bf16.msra.mxu0 0
      %1375 = vmatprep.subr.bf16.mxu0 0
      %1376 = vmatpush2.bf16.msra.mxu0 0
      %1377 = vmatprep.subr.bf16.mxu0 0
      %1378 = vmatpush2.bf16.msra.mxu0 0
      %1379 = vmatprep.subr.bf16.mxu0 0
      %1380 = vmatpush2.bf16.msra.mxu0 0
      %1381 = vmatprep.mubr.bf16.mxu0 0
      %1382 = vmatmul.mubr.bf16.gmra.mxu0 %v535
      %v1383 = vpop.f32.mrf.mxu0
      %v1384 = vadd.f32 %v476, %v1383
      %v1385 = vpop.f32.mrf.mxu0
      %v1386 = vadd.f32 %v476, %v1385
      %v1387 = vpop.f32.mrf.mxu0
      %v1388 = vadd.f32 %v481, %v1387
      %v1389 = vpop.f32.mrf.mxu0
      %v1390 = vadd.f32 %v481, %v1389
      %1391 = vmatprep.mubr.bf16.mxu0 0
      %1392 = vmatmul.mubr.bf16.gmra.mxu0 %v538
      %v1393 = vpop.f32.mrf.mxu0
      %v1394 = vadd.f32 %v486, %v1393
      %v1395 = vpop.f32.mrf.mxu0
      %v1396 = vadd.f32 %v486, %v1395
      %v1397 = vpop.f32.mrf.mxu0
      %v1398 = vadd.f32 %v491, %v1397
      %v1399 = vpop.f32.mrf.mxu0
      %v1400 = vadd.f32 %v491, %v1399
      %1401 = vmatprep.mubr.bf16.mxu0 0
      %1402 = vmatmul.mubr.bf16.gmra.mxu0 %v541
      %v1403 = vpop.f32.mrf.mxu0
      %v1404 = vadd.f32 %v496, %v1403
      %v1405 = vpop.f32.mrf.mxu0
      %v1406 = vadd.f32 %v496, %v1405
      %v1407 = vpop.f32.mrf.mxu0
      %v1408 = vadd.f32 %v501, %v1407
      %v1409 = vpop.f32.mrf.mxu0
      %v1410 = vadd.f32 %v501, %v1409
      %1411 = vmatprep.mubr.bf16.mxu0 0
      %1412 = vmatmul.mubr.bf16.gmra.mxu0 %v544
      %v1413 = vpop.f32.mrf.mxu0
      %v1414 = vadd.f32 %v506, %v1413
      %v1415 = vpop.f32.mrf.mxu0
      %v1416 = vadd.f32 %v506, %v1415
      %v1417 = vpop.f32.mrf.mxu0
      %v1418 = vadd.f32 %v511, %v1417
      %v1419 = vpop.f32.mrf.mxu0
      %v1420 = vadd.f32 %v511, %v1419
      %1421 = vdwg.mxu0
      %1422 = vmatprep.subr.bf16.mxu0 0
      %1423 = vmatpush1.bf16.msra.mxu0 0
      %1424 = vmatprep.subr.bf16.mxu0 0
      %1425 = vmatpush1.bf16.msra.mxu0 0
      %1426 = vmatprep.subr.bf16.mxu0 0
      %1427 = vmatpush1.bf16.msra.mxu0 0
      %1428 = vmatprep.subr.bf16.mxu0 0
      %1429 = vmatpush1.bf16.msra.mxu0 0
      %1430 = vmatprep.subr.bf16.mxu0 0
      %1431 = vmatpush1.bf16.msra.mxu0 0
      %1432 = vmatprep.subr.bf16.mxu0 0
      %1433 = vmatpush1.bf16.msra.mxu0 0
      %1434 = vmatprep.subr.bf16.mxu0 %v450
      %1435 = vmatpush1.bf16.msra.mxu0 %v449
      %1436 = vmatprep.subr.bf16.mxu0 %v418
      %1437 = vmatpush1.bf16.msra.mxu0 %v417
      %1438 = vmatprep.subr.bf16.mxu0 0
      %1439 = vmatpush2.bf16.msra.mxu0 0
      %1440 = vmatprep.subr.bf16.mxu0 0
      %1441 = vmatpush2.bf16.msra.mxu0 0
      %1442 = vmatprep.subr.bf16.mxu0 0
      %1443 = vmatpush2.bf16.msra.mxu0 0
      %1444 = vmatprep.subr.bf16.mxu0 0
      %1445 = vmatpush2.bf16.msra.mxu0 0
      %1446 = vmatprep.subr.bf16.mxu0 0
      %1447 = vmatpush2.bf16.msra.mxu0 0
      %1448 = vmatprep.subr.bf16.mxu0 0
      %1449 = vmatpush2.bf16.msra.mxu0 0
      %1450 = vmatprep.subr.bf16.mxu0 0
      %1451 = vmatpush2.bf16.msra.mxu0 0
      %1452 = vmatprep.subr.bf16.mxu0 0
      %1453 = vmatpush2.bf16.msra.mxu0 0
      %1454 = vmatprep.mubr.bf16.mxu0 0
      %1455 = vmatmul.mubr.bf16.gmra.mxu0 %v535
      %v1456 = vpop.f32.mrf.mxu0
      %v1457 = vadd.f32 %v476, %v1456
      %v1458 = vpop.f32.mrf.mxu0
      %v1459 = vadd.f32 %v476, %v1458
      %v1460 = vpop.f32.mrf.mxu0
      %v1461 = vadd.f32 %v481, %v1460
      %v1462 = vpop.f32.mrf.mxu0
      %v1463 = vadd.f32 %v481, %v1462
      %1464 = vmatprep.mubr.bf16.mxu0 0
      %1465 = vmatmul.mubr.bf16.gmra.mxu0 %v538
      %v1466 = vpop.f32.mrf.mxu0
      %v1467 = vadd.f32 %v486, %v1466
      %v1468 = vpop.f32.mrf.mxu0
      %v1469 = vadd.f32 %v486, %v1468
      %v1470 = vpop.f32.mrf.mxu0
      %v1471 = vadd.f32 %v491, %v1470
      %v1472 = vpop.f32.mrf.mxu0
      %v1473 = vadd.f32 %v491, %v1472
      %1474 = vmatprep.mubr.bf16.mxu0 0
      %1475 = vmatmul.mubr.bf16.gmra.mxu0 %v541
      %v1476 = vpop.f32.mrf.mxu0
      %v1477 = vadd.f32 %v496, %v1476
      %v1478 = vpop.f32.mrf.mxu0
      %v1479 = vadd.f32 %v496, %v1478
      %v1480 = vpop.f32.mrf.mxu0
      %v1481 = vadd.f32 %v501, %v1480
      %v1482 = vpop.f32.mrf.mxu0
      %v1483 = vadd.f32 %v501, %v1482
      %1484 = vmatprep.mubr.bf16.mxu0 0
      %1485 = vmatmul.mubr.bf16.gmra.mxu0 %v544
      %v1486 = vpop.f32.mrf.mxu0
      %v1487 = vadd.f32 %v506, %v1486
      %v1488 = vpop.f32.mrf.mxu0
      %v1489 = vadd.f32 %v506, %v1488
      %v1490 = vpop.f32.mrf.mxu0
      %v1491 = vadd.f32 %v511, %v1490
      %v1492 = vpop.f32.mrf.mxu0
      %v1493 = vadd.f32 %v511, %v1492
      %1494 = vdwg.mxu0
      %1495 = vmatprep.subr.bf16.mxu0 0
      %1496 = vmatpush1.bf16.msra.mxu0 0
      %1497 = vmatprep.subr.bf16.mxu0 0
      %1498 = vmatpush1.bf16.msra.mxu0 0
      %1499 = vmatprep.subr.bf16.mxu0 0
      %1500 = vmatpush1.bf16.msra.mxu0 0
      %1501 = vmatprep.subr.bf16.mxu0 0
      %1502 = vmatpush1.bf16.msra.mxu0 0
      %1503 = vmatprep.subr.bf16.mxu0 0
      %1504 = vmatpush1.bf16.msra.mxu0 0
      %1505 = vmatprep.subr.bf16.mxu0 0
      %1506 = vmatpush1.bf16.msra.mxu0 0
      %1507 = vmatprep.subr.bf16.mxu0 %v452
      %1508 = vmatpush1.bf16.msra.mxu0 %v451
      %1509 = vmatprep.subr.bf16.mxu0 %v420
      %1510 = vmatpush1.bf16.msra.mxu0 %v419
      %1511 = vmatprep.subr.bf16.mxu0 0
      %1512 = vmatpush2.bf16.msra.mxu0 0
      %1513 = vmatprep.subr.bf16.mxu0 0
      %1514 = vmatpush2.bf16.msra.mxu0 0
      %1515 = vmatprep.subr.bf16.mxu0 0
      %1516 = vmatpush2.bf16.msra.mxu0 0
      %1517 = vmatprep.subr.bf16.mxu0 0
      %1518 = vmatpush2.bf16.msra.mxu0 0
      %1519 = vmatprep.subr.bf16.mxu0 0
      %1520 = vmatpush2.bf16.msra.mxu0 0
      %1521 = vmatprep.subr.bf16.mxu0 0
      %1522 = vmatpush2.bf16.msra.mxu0 0
      %1523 = vmatprep.subr.bf16.mxu0 0
      %1524 = vmatpush2.bf16.msra.mxu0 0
      %1525 = vmatprep.subr.bf16.mxu0 0
      %1526 = vmatpush2.bf16.msra.mxu0 0
      %1527 = vmatprep.mubr.bf16.mxu0 0
      %1528 = vmatmul.mubr.bf16.gmra.mxu0 %v535
      %v1529 = vpop.f32.mrf.mxu0
      %v1530 = vadd.f32 %v476, %v1529
      %v1531 = vpop.f32.mrf.mxu0
      %v1532 = vadd.f32 %v476, %v1531
      %v1533 = vpop.f32.mrf.mxu0
      %v1534 = vadd.f32 %v481, %v1533
      %v1535 = vpop.f32.mrf.mxu0
      %v1536 = vadd.f32 %v481, %v1535
      %1537 = vmatprep.mubr.bf16.mxu0 0
      %1538 = vmatmul.mubr.bf16.gmra.mxu0 %v538
      %v1539 = vpop.f32.mrf.mxu0
      %v1540 = vadd.f32 %v486, %v1539
      %v1541 = vpop.f32.mrf.mxu0
      %v1542 = vadd.f32 %v486, %v1541
      %v1543 = vpop.f32.mrf.mxu0
      %v1544 = vadd.f32 %v491, %v1543
      %v1545 = vpop.f32.mrf.mxu0
      %v1546 = vadd.f32 %v491, %v1545
      %1547 = vmatprep.mubr.bf16.mxu0 0
      %1548 = vmatmul.mubr.bf16.gmra.mxu0 %v541
      %v1549 = vpop.f32.mrf.mxu0
      %v1550 = vadd.f32 %v496, %v1549
      %v1551 = vpop.f32.mrf.mxu0
      %v1552 = vadd.f32 %v496, %v1551
      %v1553 = vpop.f32.mrf.mxu0
      %v1554 = vadd.f32 %v501, %v1553
      %v1555 = vpop.f32.mrf.mxu0
      %v1556 = vadd.f32 %v501, %v1555
      %1557 = vmatprep.mubr.bf16.mxu0 0
      %1558 = vmatmul.mubr.bf16.gmra.mxu0 %v544
      %v1559 = vpop.f32.mrf.mxu0
      %v1560 = vadd.f32 %v506, %v1559
      %v1561 = vpop.f32.mrf.mxu0
      %v1562 = vadd.f32 %v506, %v1561
      %v1563 = vpop.f32.mrf.mxu0
      %v1564 = vadd.f32 %v511, %v1563
      %v1565 = vpop.f32.mrf.mxu0
      %v1566 = vadd.f32 %v511, %v1565
      %1567 = vdwg.mxu0
      %1568 = vmatprep.subr.bf16.mxu0 0
      %1569 = vmatpush1.bf16.msra.mxu0 0
      %1570 = vmatprep.subr.bf16.mxu0 0
      %1571 = vmatpush1.bf16.msra.mxu0 0
      %1572 = vmatprep.subr.bf16.mxu0 0
      %1573 = vmatpush1.bf16.msra.mxu0 0
      %1574 = vmatprep.subr.bf16.mxu0 0
      %1575 = vmatpush1.bf16.msra.mxu0 0
      %1576 = vmatprep.subr.bf16.mxu0 0
      %1577 = vmatpush1.bf16.msra.mxu0 0
      %1578 = vmatprep.subr.bf16.mxu0 0
      %1579 = vmatpush1.bf16.msra.mxu0 0
      %1580 = vmatprep.subr.bf16.mxu0 %v454
      %1581 = vmatpush1.bf16.msra.mxu0 %v453
      %1582 = vmatprep.subr.bf16.mxu0 %v422
      %1583 = vmatpush1.bf16.msra.mxu0 %v421
      %1584 = vmatprep.subr.bf16.mxu0 0
      %1585 = vmatpush2.bf16.msra.mxu0 0
      %1586 = vmatprep.subr.bf16.mxu0 0
      %1587 = vmatpush2.bf16.msra.mxu0 0
      %1588 = vmatprep.subr.bf16.mxu0 0
      %1589 = vmatpush2.bf16.msra.mxu0 0
      %1590 = vmatprep.subr.bf16.mxu0 0
      %1591 = vmatpush2.bf16.msra.mxu0 0
      %1592 = vmatprep.subr.bf16.mxu0 0
      %1593 = vmatpush2.bf16.msra.mxu0 0
      %1594 = vmatprep.subr.bf16.mxu0 0
      %1595 = vmatpush2.bf16.msra.mxu0 0
      %1596 = vmatprep.subr.bf16.mxu0 0
      %1597 = vmatpush2.bf16.msra.mxu0 0
      %1598 = vmatprep.subr.bf16.mxu0 0
      %1599 = vmatpush2.bf16.msra.mxu0 0
      %1600 = vmatprep.mubr.bf16.mxu0 0
      %1601 = vmatmul.mubr.bf16.gmra.mxu0 %v535
      %v1602 = vpop.f32.mrf.mxu0
      %v1603 = vadd.f32 %v476, %v1602
      %v1604 = vpop.f32.mrf.mxu0
      %v1605 = vadd.f32 %v476, %v1604
      %v1606 = vpop.f32.mrf.mxu0
      %v1607 = vadd.f32 %v481, %v1606
      %v1608 = vpop.f32.mrf.mxu0
      %v1609 = vadd.f32 %v481, %v1608
      %1610 = vmatprep.mubr.bf16.mxu0 0
      %1611 = vmatmul.mubr.bf16.gmra.mxu0 %v538
      %v1612 = vpop.f32.mrf.mxu0
      %v1613 = vadd.f32 %v486, %v1612
      %v1614 = vpop.f32.mrf.mxu0
      %v1615 = vadd.f32 %v486, %v1614
      %v1616 = vpop.f32.mrf.mxu0
      %v1617 = vadd.f32 %v491, %v1616
      %v1618 = vpop.f32.mrf.mxu0
      %v1619 = vadd.f32 %v491, %v1618
      %1620 = vmatprep.mubr.bf16.mxu0 0
      %1621 = vmatmul.mubr.bf16.gmra.mxu0 %v541
      %v1622 = vpop.f32.mrf.mxu0
      %v1623 = vadd.f32 %v496, %v1622
      %v1624 = vpop.f32.mrf.mxu0
      %v1625 = vadd.f32 %v496, %v1624
      %v1626 = vpop.f32.mrf.mxu0
      %v1627 = vadd.f32 %v501, %v1626
      %v1628 = vpop.f32.mrf.mxu0
      %v1629 = vadd.f32 %v501, %v1628
      %1630 = vmatprep.mubr.bf16.mxu0 0
      %1631 = vmatmul.mubr.bf16.gmra.mxu0 %v544
      %v1632 = vpop.f32.mrf.mxu0
      %v1633 = vadd.f32 %v506, %v1632
      %v1634 = vpop.f32.mrf.mxu0
      %v1635 = vadd.f32 %v506, %v1634
      %v1636 = vpop.f32.mrf.mxu0
      %v1637 = vadd.f32 %v511, %v1636
      %v1638 = vpop.f32.mrf.mxu0
      %v1639 = vadd.f32 %v511, %v1638
      %1640 = vdwg.mxu0
      %1641 = vmatprep.subr.bf16.mxu0 0
      %1642 = vmatpush1.bf16.msra.mxu0 0
      %1643 = vmatprep.subr.bf16.mxu0 0
      %1644 = vmatpush1.bf16.msra.mxu0 0
      %1645 = vmatprep.subr.bf16.mxu0 0
      %1646 = vmatpush1.bf16.msra.mxu0 0
      %1647 = vmatprep.subr.bf16.mxu0 0
      %1648 = vmatpush1.bf16.msra.mxu0 0
      %1649 = vmatprep.subr.bf16.mxu0 0
      %1650 = vmatpush1.bf16.msra.mxu0 0
      %1651 = vmatprep.subr.bf16.mxu0 0
      %1652 = vmatpush1.bf16.msra.mxu0 0
      %1653 = vmatprep.subr.bf16.mxu0 %v456
      %1654 = vmatpush1.bf16.msra.mxu0 %v455
      %1655 = vmatprep.subr.bf16.mxu0 %v424
      %1656 = vmatpush1.bf16.msra.mxu0 %v423
      %1657 = vmatprep.subr.bf16.mxu0 0
      %1658 = vmatpush2.bf16.msra.mxu0 0
      %1659 = vmatprep.subr.bf16.mxu0 0
      %1660 = vmatpush2.bf16.msra.mxu0 0
      %1661 = vmatprep.subr.bf16.mxu0 0
      %1662 = vmatpush2.bf16.msra.mxu0 0
      %1663 = vmatprep.subr.bf16.mxu0 0
      %1664 = vmatpush2.bf16.msra.mxu0 0
      %1665 = vmatprep.subr.bf16.mxu0 0
      %1666 = vmatpush2.bf16.msra.mxu0 0
      %1667 = vmatprep.subr.bf16.mxu0 0
      %1668 = vmatpush2.bf16.msra.mxu0 0
      %1669 = vmatprep.subr.bf16.mxu0 0
      %1670 = vmatpush2.bf16.msra.mxu0 0
      %1671 = vmatprep.subr.bf16.mxu0 0
      %1672 = vmatpush2.bf16.msra.mxu0 0
      %1673 = vmatprep.mubr.bf16.mxu0 0
      %1674 = vmatmul.mubr.bf16.gmra.mxu0 %v535
      %v1675 = vpop.f32.mrf.mxu0
      %v1676 = vadd.f32 %v476, %v1675
      %v1677 = vpop.f32.mrf.mxu0
      %v1678 = vadd.f32 %v476, %v1677
      %v1679 = vpop.f32.mrf.mxu0
      %v1680 = vadd.f32 %v481, %v1679
      %v1681 = vpop.f32.mrf.mxu0
      %v1682 = vadd.f32 %v481, %v1681
      %1683 = vmatprep.mubr.bf16.mxu0 0
      %1684 = vmatmul.mubr.bf16.gmra.mxu0 %v538
      %v1685 = vpop.f32.mrf.mxu0
      %v1686 = vadd.f32 %v486, %v1685
      %v1687 = vpop.f32.mrf.mxu0
      %v1688 = vadd.f32 %v486, %v1687
      %v1689 = vpop.f32.mrf.mxu0
      %v1690 = vadd.f32 %v491, %v1689
      %v1691 = vpop.f32.mrf.mxu0
      %v1692 = vadd.f32 %v491, %v1691
      %1693 = vmatprep.mubr.bf16.mxu0 0
      %1694 = vmatmul.mubr.bf16.gmra.mxu0 %v541
      %v1695 = vpop.f32.mrf.mxu0
      %v1696 = vadd.f32 %v496, %v1695
      %v1697 = vpop.f32.mrf.mxu0
      %v1698 = vadd.f32 %v496, %v1697
      %v1699 = vpop.f32.mrf.mxu0
      %v1700 = vadd.f32 %v501, %v1699
      %v1701 = vpop.f32.mrf.mxu0
      %v1702 = vadd.f32 %v501, %v1701
      %1703 = vmatprep.mubr.bf16.mxu0 0
      %1704 = vmatmul.mubr.bf16.gmra.mxu0 %v544
      %v1705 = vpop.f32.mrf.mxu0
      %v1706 = vadd.f32 %v506, %v1705
      %v1707 = vpop.f32.mrf.mxu0
      %v1708 = vadd.f32 %v506, %v1707
      %v1709 = vpop.f32.mrf.mxu0
      %v1710 = vadd.f32 %v511, %v1709
      %v1711 = vpop.f32.mrf.mxu0
      %v1712 = vadd.f32 %v511, %v1711
      %1713 = vdwg.mxu0
      %v1714 = vmul.f32 %v581, 0.5
      %v1715 = vmul.f32 %v583, 0.5
      %v1716 = vmul.f32 %v654, 0.5
      %v1717 = vmul.f32 %v656, 0.5
      %v1718 = vmul.f32 %v727, 0.5
      %v1719 = vmul.f32 %v729, 0.5
      %v1720 = vmul.f32 %v800, 0.5
      %v1721 = vmul.f32 %v802, 0.5
      %v1722 = vmul.f32 %v873, 0.5
      %v1723 = vmul.f32 %v875, 0.5
      %v1724 = vmul.f32 %v946, 0.5
      %v1725 = vmul.f32 %v948, 0.5
      %v1726 = vmul.f32 %v1019, 0.5
      %v1727 = vmul.f32 %v1021, 0.5
      %v1728 = vmul.f32 %v1092, 0.5
      %v1729 = vmul.f32 %v1094, 0.5
      %v1730 = vmul.f32 %v1165, 0.5
      %v1731 = vmul.f32 %v1167, 0.5
      %v1732 = vmul.f32 %v1238, 0.5
      %v1733 = vmul.f32 %v1240, 0.5
      %v1734 = vmul.f32 %v1311, 0.5
      %v1735 = vmul.f32 %v1313, 0.5
      %v1736 = vmul.f32 %v1384, 0.5
      %v1737 = vmul.f32 %v1386, 0.5
      %v1738 = vmul.f32 %v1457, 0.5
      %v1739 = vmul.f32 %v1459, 0.5
      %v1740 = vmul.f32 %v1530, 0.5
      %v1741 = vmul.f32 %v1532, 0.5
      %v1742 = vmul.f32 %v1603, 0.5
      %v1743 = vmul.f32 %v1605, 0.5
      %v1744 = vmul.f32 %v1676, 0.5
      %v1745 = vmul.f32 %v1678, 0.5
      %v1746 = vmul.f32 %v585, 0.5
      %v1747 = vmul.f32 %v587, 0.5
      %v1748 = vmul.f32 %v658, 0.5
      %v1749 = vmul.f32 %v660, 0.5
      %v1750 = vmul.f32 %v731, 0.5
      %v1751 = vmul.f32 %v733, 0.5
      %v1752 = vmul.f32 %v804, 0.5
      %v1753 = vmul.f32 %v806, 0.5
      %v1754 = vmul.f32 %v877, 0.5
      %v1755 = vmul.f32 %v879, 0.5
      %v1756 = vmul.f32 %v950, 0.5
      %v1757 = vmul.f32 %v952, 0.5
      %v1758 = vmul.f32 %v1023, 0.5
      %v1759 = vmul.f32 %v1025, 0.5
      %v1760 = vmul.f32 %v1096, 0.5
      %v1761 = vmul.f32 %v1098, 0.5
      %v1762 = vmul.f32 %v1169, 0.5
      %v1763 = vmul.f32 %v1171, 0.5
      %v1764 = vmul.f32 %v1242, 0.5
      %v1765 = vmul.f32 %v1244, 0.5
      %v1766 = vmul.f32 %v1315, 0.5
      %v1767 = vmul.f32 %v1317, 0.5
      %v1768 = vmul.f32 %v1388, 0.5
      %v1769 = vmul.f32 %v1390, 0.5
      %v1770 = vmul.f32 %v1461, 0.5
      %v1771 = vmul.f32 %v1463, 0.5
      %v1772 = vmul.f32 %v1534, 0.5
      %v1773 = vmul.f32 %v1536, 0.5
      %v1774 = vmul.f32 %v1607, 0.5
      %v1775 = vmul.f32 %v1609, 0.5
      %v1776 = vmul.f32 %v1680, 0.5
      %v1777 = vmul.f32 %v1682, 0.5
      %v1778 = vmul.f32 %v591, 0.5
      %v1779 = vmul.f32 %v593, 0.5
      %v1780 = vmul.f32 %v664, 0.5
      %v1781 = vmul.f32 %v666, 0.5
      %v1782 = vmul.f32 %v737, 0.5
      %v1783 = vmul.f32 %v739, 0.5
      %v1784 = vmul.f32 %v810, 0.5
      %v1785 = vmul.f32 %v812, 0.5
      %v1786 = vmul.f32 %v883, 0.5
      %v1787 = vmul.f32 %v885, 0.5
      %v1788 = vmul.f32 %v956, 0.5
      %v1789 = vmul.f32 %v958, 0.5
      %v1790 = vmul.f32 %v1029, 0.5
      %v1791 = vmul.f32 %v1031, 0.5
      %v1792 = vmul.f32 %v1102, 0.5
      %v1793 = vmul.f32 %v1104, 0.5
      %v1794 = vmul.f32 %v1175, 0.5
      %v1795 = vmul.f32 %v1177, 0.5
      %v1796 = vmul.f32 %v1248, 0.5
      %v1797 = vmul.f32 %v1250, 0.5
      %v1798 = vmul.f32 %v1321, 0.5
      %v1799 = vmul.f32 %v1323, 0.5
      %v1800 = vmul.f32 %v1394, 0.5
      %v1801 = vmul.f32 %v1396, 0.5
      %v1802 = vmul.f32 %v1467, 0.5
      %v1803 = vmul.f32 %v1469, 0.5
      %v1804 = vmul.f32 %v1540, 0.5
      %v1805 = vmul.f32 %v1542, 0.5
      %v1806 = vmul.f32 %v1613, 0.5
      %v1807 = vmul.f32 %v1615, 0.5
      %v1808 = vmul.f32 %v1686, 0.5
      %v1809 = vmul.f32 %v1688, 0.5
      %v1810 = vmul.f32 %v595, 0.5
      %v1811 = vmul.f32 %v597, 0.5
      %v1812 = vmul.f32 %v668, 0.5
      %v1813 = vmul.f32 %v670, 0.5
      %v1814 = vmul.f32 %v741, 0.5
      %v1815 = vmul.f32 %v743, 0.5
      %v1816 = vmul.f32 %v814, 0.5
      %v1817 = vmul.f32 %v816, 0.5
      %v1818 = vmul.f32 %v887, 0.5
      %v1819 = vmul.f32 %v889, 0.5
      %v1820 = vmul.f32 %v960, 0.5
      %v1821 = vmul.f32 %v962, 0.5
      %v1822 = vmul.f32 %v1033, 0.5
      %v1823 = vmul.f32 %v1035, 0.5
      %v1824 = vmul.f32 %v1106, 0.5
      %v1825 = vmul.f32 %v1108, 0.5
      %v1826 = vmul.f32 %v1179, 0.5
      %v1827 = vmul.f32 %v1181, 0.5
      %v1828 = vmul.f32 %v1252, 0.5
      %v1829 = vmul.f32 %v1254, 0.5
      %v1830 = vmul.f32 %v1325, 0.5
      %v1831 = vmul.f32 %v1327, 0.5
      %v1832 = vmul.f32 %v1398, 0.5
      %v1833 = vmul.f32 %v1400, 0.5
      %v1834 = vmul.f32 %v1471, 0.5
      %v1835 = vmul.f32 %v1473, 0.5
      %v1836 = vmul.f32 %v1544, 0.5
      %v1837 = vmul.f32 %v1546, 0.5
      %v1838 = vmul.f32 %v1617, 0.5
      %v1839 = vmul.f32 %v1619, 0.5
      %v1840 = vmul.f32 %v1690, 0.5
      %v1841 = vmul.f32 %v1692, 0.5
      %v1842 = vmul.f32 %v601, 0.5
      %v1843 = vmul.f32 %v603, 0.5
      %v1844 = vmul.f32 %v674, 0.5
      %v1845 = vmul.f32 %v676, 0.5
      %v1846 = vmul.f32 %v747, 0.5
      %v1847 = vmul.f32 %v749, 0.5
      %v1848 = vmul.f32 %v820, 0.5
      %v1849 = vmul.f32 %v822, 0.5
      %v1850 = vmul.f32 %v893, 0.5
      %v1851 = vmul.f32 %v895, 0.5
      %v1852 = vmul.f32 %v966, 0.5
      %v1853 = vmul.f32 %v968, 0.5
      %v1854 = vmul.f32 %v1039, 0.5
      %v1855 = vmul.f32 %v1041, 0.5
      %v1856 = vmul.f32 %v1112, 0.5
      %v1857 = vmul.f32 %v1114, 0.5
      %v1858 = vmul.f32 %v1185, 0.5
      %v1859 = vmul.f32 %v1187, 0.5
      %v1860 = vmul.f32 %v1258, 0.5
      %v1861 = vmul.f32 %v1260, 0.5
      %v1862 = vmul.f32 %v1331, 0.5
      %v1863 = vmul.f32 %v1333, 0.5
      %v1864 = vmul.f32 %v1404, 0.5
      %v1865 = vmul.f32 %v1406, 0.5
      %v1866 = vmul.f32 %v1477, 0.5
      %v1867 = vmul.f32 %v1479, 0.5
      %v1868 = vmul.f32 %v1550, 0.5
      %v1869 = vmul.f32 %v1552, 0.5
      %v1870 = vmul.f32 %v1623, 0.5
      %v1871 = vmul.f32 %v1625, 0.5
      %v1872 = vmul.f32 %v1696, 0.5
      %v1873 = vmul.f32 %v1698, 0.5
      %v1874 = vmul.f32 %v605, 0.5
      %v1875 = vmul.f32 %v607, 0.5
      %v1876 = vmul.f32 %v678, 0.5
      %v1877 = vmul.f32 %v680, 0.5
      %v1878 = vmul.f32 %v751, 0.5
      %v1879 = vmul.f32 %v753, 0.5
      %v1880 = vmul.f32 %v824, 0.5
      %v1881 = vmul.f32 %v826, 0.5
      %v1882 = vmul.f32 %v897, 0.5
      %v1883 = vmul.f32 %v899, 0.5
      %v1884 = vmul.f32 %v970, 0.5
      %v1885 = vmul.f32 %v972, 0.5
      %v1886 = vmul.f32 %v1043, 0.5
      %v1887 = vmul.f32 %v1045, 0.5
      %v1888 = vmul.f32 %v1116, 0.5
      %v1889 = vmul.f32 %v1118, 0.5
      %v1890 = vmul.f32 %v1189, 0.5
      %v1891 = vmul.f32 %v1191, 0.5
      %v1892 = vmul.f32 %v1262, 0.5
      %v1893 = vmul.f32 %v1264, 0.5
      %v1894 = vmul.f32 %v1335, 0.5
      %v1895 = vmul.f32 %v1337, 0.5
      %v1896 = vmul.f32 %v1408, 0.5
      %v1897 = vmul.f32 %v1410, 0.5
      %v1898 = vmul.f32 %v1481, 0.5
      %v1899 = vmul.f32 %v1483, 0.5
      %v1900 = vmul.f32 %v1554, 0.5
      %v1901 = vmul.f32 %v1556, 0.5
      %v1902 = vmul.f32 %v1627, 0.5
      %v1903 = vmul.f32 %v1629, 0.5
      %v1904 = vmul.f32 %v1700, 0.5
      %v1905 = vmul.f32 %v1702, 0.5
      %v1906 = vmul.f32 %v611, 0.5
      %v1907 = vmul.f32 %v613, 0.5
      %v1908 = vmul.f32 %v684, 0.5
      %v1909 = vmul.f32 %v686, 0.5
      %v1910 = vmul.f32 %v757, 0.5
      %v1911 = vmul.f32 %v759, 0.5
      %v1912 = vmul.f32 %v830, 0.5
      %v1913 = vmul.f32 %v832, 0.5
      %v1914 = vmul.f32 %v903, 0.5
      %v1915 = vmul.f32 %v905, 0.5
      %v1916 = vmul.f32 %v976, 0.5
      %v1917 = vmul.f32 %v978, 0.5
      %v1918 = vmul.f32 %v1049, 0.5
      %v1919 = vmul.f32 %v1051, 0.5
      %v1920 = vmul.f32 %v1122, 0.5
      %v1921 = vmul.f32 %v1124, 0.5
      %v1922 = vmul.f32 %v1195, 0.5
      %v1923 = vmul.f32 %v1197, 0.5
      %v1924 = vmul.f32 %v1268, 0.5
      %v1925 = vmul.f32 %v1270, 0.5
      %v1926 = vmul.f32 %v1341, 0.5
      %v1927 = vmul.f32 %v1343, 0.5
      %v1928 = vmul.f32 %v1414, 0.5
      %v1929 = vmul.f32 %v1416, 0.5
      %v1930 = vmul.f32 %v1487, 0.5
      %v1931 = vmul.f32 %v1489, 0.5
      %v1932 = vmul.f32 %v1560, 0.5
      %v1933 = vmul.f32 %v1562, 0.5
      %v1934 = vmul.f32 %v1633, 0.5
      %v1935 = vmul.f32 %v1635, 0.5
      %v1936 = vmul.f32 %v1706, 0.5
      %v1937 = vmul.f32 %v1708, 0.5
      %v1938 = vmul.f32 %v615, 0.5
      %v1939 = vmul.f32 %v617, 0.5
      %v1940 = vmul.f32 %v688, 0.5
      %v1941 = vmul.f32 %v690, 0.5
      %v1942 = vmul.f32 %v761, 0.5
      %v1943 = vmul.f32 %v763, 0.5
      %v1944 = vmul.f32 %v834, 0.5
      %v1945 = vmul.f32 %v836, 0.5
      %v1946 = vmul.f32 %v907, 0.5
      %v1947 = vmul.f32 %v909, 0.5
      %v1948 = vmul.f32 %v980, 0.5
      %v1949 = vmul.f32 %v982, 0.5
      %v1950 = vmul.f32 %v1053, 0.5
      %v1951 = vmul.f32 %v1055, 0.5
      %v1952 = vmul.f32 %v1126, 0.5
      %v1953 = vmul.f32 %v1128, 0.5
      %v1954 = vmul.f32 %v1199, 0.5
      %v1955 = vmul.f32 %v1201, 0.5
      %v1956 = vmul.f32 %v1272, 0.5
      %v1957 = vmul.f32 %v1274, 0.5
      %v1958 = vmul.f32 %v1345, 0.5
      %v1959 = vmul.f32 %v1347, 0.5
      %v1960 = vmul.f32 %v1418, 0.5
      %v1961 = vmul.f32 %v1420, 0.5
      %v1962 = vmul.f32 %v1491, 0.5
      %v1963 = vmul.f32 %v1493, 0.5
      %v1964 = vmul.f32 %v1564, 0.5
      %v1965 = vmul.f32 %v1566, 0.5
      %v1966 = vmul.f32 %v1637, 0.5
      %v1967 = vmul.f32 %v1639, 0.5
      %v1968 = vmul.f32 %v1710, 0.5
      %v1969 = vmul.f32 %v1712, 0.5
      %v1970 = vmul.f32 %v581, 0.70710677
      %v1971 = vmul.f32 %v583, 0.70710677
      %v1972 = vmul.f32 %v654, 0.70710677
      %v1973 = vmul.f32 %v656, 0.70710677
      %v1974 = vmul.f32 %v727, 0.70710677
      %v1975 = vmul.f32 %v729, 0.70710677
      %v1976 = vmul.f32 %v800, 0.70710677
      %v1977 = vmul.f32 %v802, 0.70710677
      %v1978 = vmul.f32 %v873, 0.70710677
      %v1979 = vmul.f32 %v875, 0.70710677
      %v1980 = vmul.f32 %v946, 0.70710677
      %v1981 = vmul.f32 %v948, 0.70710677
      %v1982 = vmul.f32 %v1019, 0.70710677
      %v1983 = vmul.f32 %v1021, 0.70710677
      %v1984 = vmul.f32 %v1092, 0.70710677
      %v1985 = vmul.f32 %v1094, 0.70710677
      %v1986 = vmul.f32 %v1165, 0.70710677
      %v1987 = vmul.f32 %v1167, 0.70710677
      %v1988 = vmul.f32 %v1238, 0.70710677
      %v1989 = vmul.f32 %v1240, 0.70710677
      %v1990 = vmul.f32 %v1311, 0.70710677
      %v1991 = vmul.f32 %v1313, 0.70710677
      %v1992 = vmul.f32 %v1384, 0.70710677
      %v1993 = vmul.f32 %v1386, 0.70710677
      %v1994 = vmul.f32 %v1457, 0.70710677
      %v1995 = vmul.f32 %v1459, 0.70710677
      %v1996 = vmul.f32 %v1530, 0.70710677
      %v1997 = vmul.f32 %v1532, 0.70710677
      %v1998 = vmul.f32 %v1603, 0.70710677
      %v1999 = vmul.f32 %v1605, 0.70710677
      %v2000 = vmul.f32 %v1676, 0.70710677
      %v2001 = vmul.f32 %v1678, 0.70710677
      %v2002 = vmul.f32 %v585, 0.70710677
      %v2003 = vmul.f32 %v587, 0.70710677
      %v2004 = vmul.f32 %v658, 0.70710677
      %v2005 = vmul.f32 %v660, 0.70710677
      %v2006 = vmul.f32 %v731, 0.70710677
      %v2007 = vmul.f32 %v733, 0.70710677
      %v2008 = vmul.f32 %v804, 0.70710677
      %v2009 = vmul.f32 %v806, 0.70710677
      %v2010 = vmul.f32 %v877, 0.70710677
      %v2011 = vmul.f32 %v879, 0.70710677
      %v2012 = vmul.f32 %v950, 0.70710677
      %v2013 = vmul.f32 %v952, 0.70710677
      %v2014 = vmul.f32 %v1023, 0.70710677
      %v2015 = vmul.f32 %v1025, 0.70710677
      %v2016 = vmul.f32 %v1096, 0.70710677
      %v2017 = vmul.f32 %v1098, 0.70710677
      %v2018 = vmul.f32 %v1169, 0.70710677
      %v2019 = vmul.f32 %v1171, 0.70710677
      %v2020 = vmul.f32 %v1242, 0.70710677
      %v2021 = vmul.f32 %v1244, 0.70710677
      %v2022 = vmul.f32 %v1315, 0.70710677
      %v2023 = vmul.f32 %v1317, 0.70710677
      %v2024 = vmul.f32 %v1388, 0.70710677
      %v2025 = vmul.f32 %v1390, 0.70710677
      %v2026 = vmul.f32 %v1461, 0.70710677
      %v2027 = vmul.f32 %v1463, 0.70710677
      %v2028 = vmul.f32 %v1534, 0.70710677
      %v2029 = vmul.f32 %v1536, 0.70710677
      %v2030 = vmul.f32 %v1607, 0.70710677
      %v2031 = vmul.f32 %v1609, 0.70710677
      %v2032 = vmul.f32 %v1680, 0.70710677
      %v2033 = vmul.f32 %v1682, 0.70710677
      %v2034 = vmul.f32 %v591, 0.70710677
      %v2035 = vmul.f32 %v593, 0.70710677
      %v2036 = vmul.f32 %v664, 0.70710677
      %v2037 = vmul.f32 %v666, 0.70710677
      %v2038 = vmul.f32 %v737, 0.70710677
      %v2039 = vmul.f32 %v739, 0.70710677
      %v2040 = vmul.f32 %v810, 0.70710677
      %v2041 = vmul.f32 %v812, 0.70710677
      %v2042 = vmul.f32 %v883, 0.70710677
      %v2043 = vmul.f32 %v885, 0.70710677
      %v2044 = vmul.f32 %v956, 0.70710677
      %v2045 = vmul.f32 %v958, 0.70710677
      %v2046 = vmul.f32 %v1029, 0.70710677
      %v2047 = vmul.f32 %v1031, 0.70710677
      %v2048 = vmul.f32 %v1102, 0.70710677
      %v2049 = vmul.f32 %v1104, 0.70710677
      %v2050 = vmul.f32 %v1175, 0.70710677
      %v2051 = vmul.f32 %v1177, 0.70710677
      %v2052 = vmul.f32 %v1248, 0.70710677
      %v2053 = vmul.f32 %v1250, 0.70710677
      %v2054 = vmul.f32 %v1321, 0.70710677
      %v2055 = vmul.f32 %v1323, 0.70710677
      %v2056 = vmul.f32 %v1394, 0.70710677
      %v2057 = vmul.f32 %v1396, 0.70710677
      %v2058 = vmul.f32 %v1467, 0.70710677
      %v2059 = vmul.f32 %v1469, 0.70710677
      %v2060 = vmul.f32 %v1540, 0.70710677
      %v2061 = vmul.f32 %v1542, 0.70710677
      %v2062 = vmul.f32 %v1613, 0.70710677
      %v2063 = vmul.f32 %v1615, 0.70710677
      %v2064 = vmul.f32 %v1686, 0.70710677
      %v2065 = vmul.f32 %v1688, 0.70710677
      %v2066 = vmul.f32 %v595, 0.70710677
      %v2067 = vmul.f32 %v597, 0.70710677
      %v2068 = vmul.f32 %v668, 0.70710677
      %v2069 = vmul.f32 %v670, 0.70710677
      %v2070 = vmul.f32 %v741, 0.70710677
      %v2071 = vmul.f32 %v743, 0.70710677
      %v2072 = vmul.f32 %v814, 0.70710677
      %v2073 = vmul.f32 %v816, 0.70710677
      %v2074 = vmul.f32 %v887, 0.70710677
      %v2075 = vmul.f32 %v889, 0.70710677
      %v2076 = vmul.f32 %v960, 0.70710677
      %v2077 = vmul.f32 %v962, 0.70710677
      %v2078 = vmul.f32 %v1033, 0.70710677
      %v2079 = vmul.f32 %v1035, 0.70710677
      %v2080 = vmul.f32 %v1106, 0.70710677
      %v2081 = vmul.f32 %v1108, 0.70710677
      %v2082 = vmul.f32 %v1179, 0.70710677
      %v2083 = vmul.f32 %v1181, 0.70710677
      %v2084 = vmul.f32 %v1252, 0.70710677
      %v2085 = vmul.f32 %v1254, 0.70710677
      %v2086 = vmul.f32 %v1325, 0.70710677
      %v2087 = vmul.f32 %v1327, 0.70710677
      %v2088 = vmul.f32 %v1398, 0.70710677
      %v2089 = vmul.f32 %v1400, 0.70710677
      %v2090 = vmul.f32 %v1471, 0.70710677
      %v2091 = vmul.f32 %v1473, 0.70710677
      %v2092 = vmul.f32 %v1544, 0.70710677
      %v2093 = vmul.f32 %v1546, 0.70710677
      %v2094 = vmul.f32 %v1617, 0.70710677
      %v2095 = vmul.f32 %v1619, 0.70710677
      %v2096 = vmul.f32 %v1690, 0.70710677
      %v2097 = vmul.f32 %v1692, 0.70710677
      %v2098 = vmul.f32 %v601, 0.70710677
      %v2099 = vmul.f32 %v603, 0.70710677
      %v2100 = vmul.f32 %v674, 0.70710677
      %v2101 = vmul.f32 %v676, 0.70710677
      %v2102 = vmul.f32 %v747, 0.70710677
      %v2103 = vmul.f32 %v749, 0.70710677
      %v2104 = vmul.f32 %v820, 0.70710677
      %v2105 = vmul.f32 %v822, 0.70710677
      %v2106 = vmul.f32 %v893, 0.70710677
      %v2107 = vmul.f32 %v895, 0.70710677
      %v2108 = vmul.f32 %v966, 0.70710677
      %v2109 = vmul.f32 %v968, 0.70710677
      %v2110 = vmul.f32 %v1039, 0.70710677
      %v2111 = vmul.f32 %v1041, 0.70710677
      %v2112 = vmul.f32 %v1112, 0.70710677
      %v2113 = vmul.f32 %v1114, 0.70710677
      %v2114 = vmul.f32 %v1185, 0.70710677
      %v2115 = vmul.f32 %v1187, 0.70710677
      %v2116 = vmul.f32 %v1258, 0.70710677
      %v2117 = vmul.f32 %v1260, 0.70710677
      %v2118 = vmul.f32 %v1331, 0.70710677
      %v2119 = vmul.f32 %v1333, 0.70710677
      %v2120 = vmul.f32 %v1404, 0.70710677
      %v2121 = vmul.f32 %v1406, 0.70710677
      %v2122 = vmul.f32 %v1477, 0.70710677
      %v2123 = vmul.f32 %v1479, 0.70710677
      %v2124 = vmul.f32 %v1550, 0.70710677
      %v2125 = vmul.f32 %v1552, 0.70710677
      %v2126 = vmul.f32 %v1623, 0.70710677
      %v2127 = vmul.f32 %v1625, 0.70710677
      %v2128 = vmul.f32 %v1696, 0.70710677
      %v2129 = vmul.f32 %v1698, 0.70710677
      %v2130 = vmul.f32 %v605, 0.70710677
      %v2131 = vmul.f32 %v607, 0.70710677
      %v2132 = vmul.f32 %v678, 0.70710677
      %v2133 = vmul.f32 %v680, 0.70710677
      %v2134 = vmul.f32 %v751, 0.70710677
      %v2135 = vmul.f32 %v753, 0.70710677
      %v2136 = vmul.f32 %v824, 0.70710677
      %v2137 = vmul.f32 %v826, 0.70710677
      %v2138 = vmul.f32 %v897, 0.70710677
      %v2139 = vmul.f32 %v899, 0.70710677
      %v2140 = vmul.f32 %v970, 0.70710677
      %v2141 = vmul.f32 %v972, 0.70710677
      %v2142 = vmul.f32 %v1043, 0.70710677
      %v2143 = vmul.f32 %v1045, 0.70710677
      %v2144 = vmul.f32 %v1116, 0.70710677
      %v2145 = vmul.f32 %v1118, 0.70710677
      %v2146 = vmul.f32 %v1189, 0.70710677
      %v2147 = vmul.f32 %v1191, 0.70710677
      %v2148 = vmul.f32 %v1262, 0.70710677
      %v2149 = vmul.f32 %v1264, 0.70710677
      %v2150 = vmul.f32 %v1335, 0.70710677
      %v2151 = vmul.f32 %v1337, 0.70710677
      %v2152 = vmul.f32 %v1408, 0.70710677
      %v2153 = vmul.f32 %v1410, 0.70710677
      %v2154 = vmul.f32 %v1481, 0.70710677
      %v2155 = vmul.f32 %v1483, 0.70710677
      %v2156 = vmul.f32 %v1554, 0.70710677
      %v2157 = vmul.f32 %v1556, 0.70710677
      %v2158 = vmul.f32 %v1627, 0.70710677
      %v2159 = vmul.f32 %v1629, 0.70710677
      %v2160 = vmul.f32 %v1700, 0.70710677
      %v2161 = vmul.f32 %v1702, 0.70710677
      %v2162 = vmul.f32 %v611, 0.70710677
      %v2163 = vmul.f32 %v613, 0.70710677
      %v2164 = vmul.f32 %v684, 0.70710677
      %v2165 = vmul.f32 %v686, 0.70710677
      %v2166 = vmul.f32 %v757, 0.70710677
      %v2167 = vmul.f32 %v759, 0.70710677
      %v2168 = vmul.f32 %v830, 0.70710677
      %v2169 = vmul.f32 %v832, 0.70710677
      %v2170 = vmul.f32 %v903, 0.70710677
      %v2171 = vmul.f32 %v905, 0.70710677
      %v2172 = vmul.f32 %v976, 0.70710677
      %v2173 = vmul.f32 %v978, 0.70710677
      %v2174 = vmul.f32 %v1049, 0.70710677
      %v2175 = vmul.f32 %v1051, 0.70710677
      %v2176 = vmul.f32 %v1122, 0.70710677
      %v2177 = vmul.f32 %v1124, 0.70710677
      %v2178 = vmul.f32 %v1195, 0.70710677
      %v2179 = vmul.f32 %v1197, 0.70710677
      %v2180 = vmul.f32 %v1268, 0.70710677
      %v2181 = vmul.f32 %v1270, 0.70710677
      %v2182 = vmul.f32 %v1341, 0.70710677
      %v2183 = vmul.f32 %v1343, 0.70710677
      %v2184 = vmul.f32 %v1414, 0.70710677
      %v2185 = vmul.f32 %v1416, 0.70710677
      %v2186 = vmul.f32 %v1487, 0.70710677
      %v2187 = vmul.f32 %v1489, 0.70710677
      %v2188 = vmul.f32 %v1560, 0.70710677
      %v2189 = vmul.f32 %v1562, 0.70710677
      %v2190 = vmul.f32 %v1633, 0.70710677
      %v2191 = vmul.f32 %v1635, 0.70710677
      %v2192 = vmul.f32 %v1706, 0.70710677
      %v2193 = vmul.f32 %v1708, 0.70710677
      %v2194 = vmul.f32 %v615, 0.70710677
      %v2195 = vmul.f32 %v617, 0.70710677
      %v2196 = vmul.f32 %v688, 0.70710677
      %v2197 = vmul.f32 %v690, 0.70710677
      %v2198 = vmul.f32 %v761, 0.70710677
      %v2199 = vmul.f32 %v763, 0.70710677
      %v2200 = vmul.f32 %v834, 0.70710677
      %v2201 = vmul.f32 %v836, 0.70710677
      %v2202 = vmul.f32 %v907, 0.70710677
      %v2203 = vmul.f32 %v909, 0.70710677
      %v2204 = vmul.f32 %v980, 0.70710677
      %v2205 = vmul.f32 %v982, 0.70710677
      %v2206 = vmul.f32 %v1053, 0.70710677
      %v2207 = vmul.f32 %v1055, 0.70710677
      %v2208 = vmul.f32 %v1126, 0.70710677
      %v2209 = vmul.f32 %v1128, 0.70710677
      %v2210 = vmul.f32 %v1199, 0.70710677
      %v2211 = vmul.f32 %v1201, 0.70710677
      %v2212 = vmul.f32 %v1272, 0.70710677
      %v2213 = vmul.f32 %v1274, 0.70710677
      %v2214 = vmul.f32 %v1345, 0.70710677
      %v2215 = vmul.f32 %v1347, 0.70710677
      %v2216 = vmul.f32 %v1418, 0.70710677
      %v2217 = vmul.f32 %v1420, 0.70710677
      %v2218 = vmul.f32 %v1491, 0.70710677
      %v2219 = vmul.f32 %v1493, 0.70710677
      %v2220 = vmul.f32 %v1564, 0.70710677
      %v2221 = vmul.f32 %v1566, 0.70710677
      %v2222 = vmul.f32 %v1637, 0.70710677
      %v2223 = vmul.f32 %v1639, 0.70710677
      %v2224 = vmul.f32 %v1710, 0.70710677
      %v2225 = vmul.f32 %v1712, 0.70710677
      %v2226 = verf.f32.pop %v1970
      %v2227 = verf.f32.pop %v1971
      %v2228 = verf.f32.pop %v1972
      %v2229 = verf.f32.pop %v1973
      %v2230 = verf.f32.pop %v1974
      %v2231 = verf.f32.pop %v1975
      %v2232 = verf.f32.pop %v1976
      %v2233 = verf.f32.pop %v1977
      %v2234 = verf.f32.pop %v1978
      %v2235 = verf.f32.pop %v1979
      %v2236 = verf.f32.pop %v1980
      %v2237 = verf.f32.pop %v1981
      %v2238 = verf.f32.pop %v1982
      %v2239 = verf.f32.pop %v1983
      %v2240 = verf.f32.pop %v1984
      %v2241 = verf.f32.pop %v1985
      %v2242 = verf.f32.pop %v1986
      %v2243 = verf.f32.pop %v1987
      %v2244 = verf.f32.pop %v1988
      %v2245 = verf.f32.pop %v1989
      %v2246 = verf.f32.pop %v1990
      %v2247 = verf.f32.pop %v1991
      %v2248 = verf.f32.pop %v1992
      %v2249 = verf.f32.pop %v1993
      %v2250 = verf.f32.pop %v1994
      %v2251 = verf.f32.pop %v1995
      %v2252 = verf.f32.pop %v1996
      %v2253 = verf.f32.pop %v1997
      %v2254 = verf.f32.pop %v1998
      %v2255 = verf.f32.pop %v1999
      %v2256 = verf.f32.pop %v2000
      %v2257 = verf.f32.pop %v2001
      %v2258 = verf.f32.pop %v2002
      %v2259 = verf.f32.pop %v2003
      %v2260 = verf.f32.pop %v2004
      %v2261 = verf.f32.pop %v2005
      %v2262 = verf.f32.pop %v2006
      %v2263 = verf.f32.pop %v2007
      %v2264 = verf.f32.pop %v2008
      %v2265 = verf.f32.pop %v2009
      %v2266 = verf.f32.pop %v2010
      %v2267 = verf.f32.pop %v2011
      %v2268 = verf.f32.pop %v2012
      %v2269 = verf.f32.pop %v2013
      %v2270 = verf.f32.pop %v2014
      %v2271 = verf.f32.pop %v2015
      %v2272 = verf.f32.pop %v2016
      %v2273 = verf.f32.pop %v2017
      %v2274 = verf.f32.pop %v2018
      %v2275 = verf.f32.pop %v2019
      %v2276 = verf.f32.pop %v2020
      %v2277 = verf.f32.pop %v2021
      %v2278 = verf.f32.pop %v2022
      %v2279 = verf.f32.pop %v2023
      %v2280 = verf.f32.pop %v2024
      %v2281 = verf.f32.pop %v2025
      %v2282 = verf.f32.pop %v2026
      %v2283 = verf.f32.pop %v2027
      %v2284 = verf.f32.pop %v2028
      %v2285 = verf.f32.pop %v2029
      %v2286 = verf.f32.pop %v2030
      %v2287 = verf.f32.pop %v2031
      %v2288 = verf.f32.pop %v2032
      %v2289 = verf.f32.pop %v2033
      %v2290 = verf.f32.pop %v2034
      %v2291 = verf.f32.pop %v2035
      %v2292 = verf.f32.pop %v2036
      %v2293 = verf.f32.pop %v2037
      %v2294 = verf.f32.pop %v2038
      %v2295 = verf.f32.pop %v2039
      %v2296 = verf.f32.pop %v2040
      %v2297 = verf.f32.pop %v2041
      %v2298 = verf.f32.pop %v2042
      %v2299 = verf.f32.pop %v2043
      %v2300 = verf.f32.pop %v2044
      %v2301 = verf.f32.pop %v2045
      %v2302 = verf.f32.pop %v2046
      %v2303 = verf.f32.pop %v2047
      %v2304 = verf.f32.pop %v2048
      %v2305 = verf.f32.pop %v2049
      %v2306 = verf.f32.pop %v2050
      %v2307 = verf.f32.pop %v2051
      %v2308 = verf.f32.pop %v2052
      %v2309 = verf.f32.pop %v2053
      %v2310 = verf.f32.pop %v2054
      %v2311 = verf.f32.pop %v2055
      %v2312 = verf.f32.pop %v2056
      %v2313 = verf.f32.pop %v2057
      %v2314 = verf.f32.pop %v2058
      %v2315 = verf.f32.pop %v2059
      %v2316 = verf.f32.pop %v2060
      %v2317 = verf.f32.pop %v2061
      %v2318 = verf.f32.pop %v2062
      %v2319 = verf.f32.pop %v2063
      %v2320 = verf.f32.pop %v2064
      %v2321 = verf.f32.pop %v2065
      %v2322 = verf.f32.pop %v2066
      %v2323 = verf.f32.pop %v2067
      %v2324 = verf.f32.pop %v2068
      %v2325 = verf.f32.pop %v2069
      %v2326 = verf.f32.pop %v2070
      %v2327 = verf.f32.pop %v2071
      %v2328 = verf.f32.pop %v2072
      %v2329 = verf.f32.pop %v2073
      %v2330 = verf.f32.pop %v2074
      %v2331 = verf.f32.pop %v2075
      %v2332 = verf.f32.pop %v2076
      %v2333 = verf.f32.pop %v2077
      %v2334 = verf.f32.pop %v2078
      %v2335 = verf.f32.pop %v2079
      %v2336 = verf.f32.pop %v2080
      %v2337 = verf.f32.pop %v2081
      %v2338 = verf.f32.pop %v2082
      %v2339 = verf.f32.pop %v2083
      %v2340 = verf.f32.pop %v2084
      %v2341 = verf.f32.pop %v2085
      %v2342 = verf.f32.pop %v2086
      %v2343 = verf.f32.pop %v2087
      %v2344 = verf.f32.pop %v2088
      %v2345 = verf.f32.pop %v2089
      %v2346 = verf.f32.pop %v2090
      %v2347 = verf.f32.pop %v2091
      %v2348 = verf.f32.pop %v2092
      %v2349 = verf.f32.pop %v2093
      %v2350 = verf.f32.pop %v2094
      %v2351 = verf.f32.pop %v2095
      %v2352 = verf.f32.pop %v2096
      %v2353 = verf.f32.pop %v2097
      %v2354 = verf.f32.pop %v2098
      %v2355 = verf.f32.pop %v2099
      %v2356 = verf.f32.pop %v2100
      %v2357 = verf.f32.pop %v2101
      %v2358 = verf.f32.pop %v2102
      %v2359 = verf.f32.pop %v2103
      %v2360 = verf.f32.pop %v2104
      %v2361 = verf.f32.pop %v2105
      %v2362 = verf.f32.pop %v2106
      %v2363 = verf.f32.pop %v2107
      %v2364 = verf.f32.pop %v2108
      %v2365 = verf.f32.pop %v2109
      %v2366 = verf.f32.pop %v2110
      %v2367 = verf.f32.pop %v2111
      %v2368 = verf.f32.pop %v2112
      %v2369 = verf.f32.pop %v2113
      %v2370 = verf.f32.pop %v2114
      %v2371 = verf.f32.pop %v2115
      %v2372 = verf.f32.pop %v2116
      %v2373 = verf.f32.pop %v2117
      %v2374 = verf.f32.pop %v2118
      %v2375 = verf.f32.pop %v2119
      %v2376 = verf.f32.pop %v2120
      %v2377 = verf.f32.pop %v2121
      %v2378 = verf.f32.pop %v2122
      %v2379 = verf.f32.pop %v2123
      %v2380 = verf.f32.pop %v2124
      %v2381 = verf.f32.pop %v2125
      %v2382 = verf.f32.pop %v2126
      %v2383 = verf.f32.pop %v2127
      %v2384 = verf.f32.pop %v2128
      %v2385 = verf.f32.pop %v2129
      %v2386 = verf.f32.pop %v2130
      %v2387 = verf.f32.pop %v2131
      %v2388 = verf.f32.pop %v2132
      %v2389 = verf.f32.pop %v2133
      %v2390 = verf.f32.pop %v2134
      %v2391 = verf.f32.pop %v2135
      %v2392 = verf.f32.pop %v2136
      %v2393 = verf.f32.pop %v2137
      %v2394 = verf.f32.pop %v2138
      %v2395 = verf.f32.pop %v2139
      %v2396 = verf.f32.pop %v2140
      %v2397 = verf.f32.pop %v2141
      %v2398 = verf.f32.pop %v2142
      %v2399 = verf.f32.pop %v2143
      %v2400 = verf.f32.pop %v2144
      %v2401 = verf.f32.pop %v2145
      %v2402 = verf.f32.pop %v2146
      %v2403 = verf.f32.pop %v2147
      %v2404 = verf.f32.pop %v2148
      %v2405 = verf.f32.pop %v2149
      %v2406 = verf.f32.pop %v2150
      %v2407 = verf.f32.pop %v2151
      %v2408 = verf.f32.pop %v2152
      %v2409 = verf.f32.pop %v2153
      %v2410 = verf.f32.pop %v2154
      %v2411 = verf.f32.pop %v2155
      %v2412 = verf.f32.pop %v2156
      %v2413 = verf.f32.pop %v2157
      %v2414 = verf.f32.pop %v2158
      %v2415 = verf.f32.pop %v2159
      %v2416 = verf.f32.pop %v2160
      %v2417 = verf.f32.pop %v2161
      %v2418 = verf.f32.pop %v2162
      %v2419 = verf.f32.pop %v2163
      %v2420 = verf.f32.pop %v2164
      %v2421 = verf.f32.pop %v2165
      %v2422 = verf.f32.pop %v2166
      %v2423 = verf.f32.pop %v2167
      %v2424 = verf.f32.pop %v2168
      %v2425 = verf.f32.pop %v2169
      %v2426 = verf.f32.pop %v2170
      %v2427 = verf.f32.pop %v2171
      %v2428 = verf.f32.pop %v2172
      %v2429 = verf.f32.pop %v2173
      %v2430 = verf.f32.pop %v2174
      %v2431 = verf.f32.pop %v2175
      %v2432 = verf.f32.pop %v2176
      %v2433 = verf.f32.pop %v2177
      %v2434 = verf.f32.pop %v2178
      %v2435 = verf.f32.pop %v2179
      %v2436 = verf.f32.pop %v2180
      %v2437 = verf.f32.pop %v2181
      %v2438 = verf.f32.pop %v2182
      %v2439 = verf.f32.pop %v2183
      %v2440 = verf.f32.pop %v2184
      %v2441 = verf.f32.pop %v2185
      %v2442 = verf.f32.pop %v2186
      %v2443 = verf.f32.pop %v2187
      %v2444 = verf.f32.pop %v2188
      %v2445 = verf.f32.pop %v2189
      %v2446 = verf.f32.pop %v2190
      %v2447 = verf.f32.pop %v2191
      %v2448 = verf.f32.pop %v2192
      %v2449 = verf.f32.pop %v2193
      %v2450 = verf.f32.pop %v2194
      %v2451 = verf.f32.pop %v2195
      %v2452 = verf.f32.pop %v2196
      %v2453 = verf.f32.pop %v2197
      %v2454 = verf.f32.pop %v2198
      %v2455 = verf.f32.pop %v2199
      %v2456 = verf.f32.pop %v2200
      %v2457 = verf.f32.pop %v2201
      %v2458 = verf.f32.pop %v2202
      %v2459 = verf.f32.pop %v2203
      %v2460 = verf.f32.pop %v2204
      %v2461 = verf.f32.pop %v2205
      %v2462 = verf.f32.pop %v2206
      %v2463 = verf.f32.pop %v2207
      %v2464 = verf.f32.pop %v2208
      %v2465 = verf.f32.pop %v2209
      %v2466 = verf.f32.pop %v2210
      %v2467 = verf.f32.pop %v2211
      %v2468 = verf.f32.pop %v2212
      %v2469 = verf.f32.pop %v2213
      %v2470 = verf.f32.pop %v2214
      %v2471 = verf.f32.pop %v2215
      %v2472 = verf.f32.pop %v2216
      %v2473 = verf.f32.pop %v2217
      %v2474 = verf.f32.pop %v2218
      %v2475 = verf.f32.pop %v2219
      %v2476 = verf.f32.pop %v2220
      %v2477 = verf.f32.pop %v2221
      %v2478 = verf.f32.pop %v2222
      %v2479 = verf.f32.pop %v2223
      %v2480 = verf.f32.pop %v2224
      %v2481 = verf.f32.pop %v2225
      %v2482 = vadd.f32 %v2226, 1.0
      %v2483 = vadd.f32 %v2227, 1.0
      %v2484 = vadd.f32 %v2228, 1.0
      %v2485 = vadd.f32 %v2229, 1.0
      %v2486 = vadd.f32 %v2230, 1.0
      %v2487 = vadd.f32 %v2231, 1.0
      %v2488 = vadd.f32 %v2232, 1.0
      %v2489 = vadd.f32 %v2233, 1.0
      %v2490 = vadd.f32 %v2234, 1.0
      %v2491 = vadd.f32 %v2235, 1.0
      %v2492 = vadd.f32 %v2236, 1.0
      %v2493 = vadd.f32 %v2237, 1.0
      %v2494 = vadd.f32 %v2238, 1.0
      %v2495 = vadd.f32 %v2239, 1.0
      %v2496 = vadd.f32 %v2240, 1.0
      %v2497 = vadd.f32 %v2241, 1.0
      %v2498 = vadd.f32 %v2242, 1.0
      %v2499 = vadd.f32 %v2243, 1.0
      %v2500 = vadd.f32 %v2244, 1.0
      %v2501 = vadd.f32 %v2245, 1.0
      %v2502 = vadd.f32 %v2246, 1.0
      %v2503 = vadd.f32 %v2247, 1.0
      %v2504 = vadd.f32 %v2248, 1.0
      %v2505 = vadd.f32 %v2249, 1.0
      %v2506 = vadd.f32 %v2250, 1.0
      %v2507 = vadd.f32 %v2251, 1.0
      %v2508 = vadd.f32 %v2252, 1.0
      %v2509 = vadd.f32 %v2253, 1.0
      %v2510 = vadd.f32 %v2254, 1.0
      %v2511 = vadd.f32 %v2255, 1.0
      %v2512 = vadd.f32 %v2256, 1.0
      %v2513 = vadd.f32 %v2257, 1.0
      %v2514 = vadd.f32 %v2258, 1.0
      %v2515 = vadd.f32 %v2259, 1.0
      %v2516 = vadd.f32 %v2260, 1.0
      %v2517 = vadd.f32 %v2261, 1.0
      %v2518 = vadd.f32 %v2262, 1.0
      %v2519 = vadd.f32 %v2263, 1.0
      %v2520 = vadd.f32 %v2264, 1.0
      %v2521 = vadd.f32 %v2265, 1.0
      %v2522 = vadd.f32 %v2266, 1.0
      %v2523 = vadd.f32 %v2267, 1.0
      %v2524 = vadd.f32 %v2268, 1.0
      %v2525 = vadd.f32 %v2269, 1.0
      %v2526 = vadd.f32 %v2270, 1.0
      %v2527 = vadd.f32 %v2271, 1.0
      %v2528 = vadd.f32 %v2272, 1.0
      %v2529 = vadd.f32 %v2273, 1.0
      %v2530 = vadd.f32 %v2274, 1.0
      %v2531 = vadd.f32 %v2275, 1.0
      %v2532 = vadd.f32 %v2276, 1.0
      %v2533 = vadd.f32 %v2277, 1.0
      %v2534 = vadd.f32 %v2278, 1.0
      %v2535 = vadd.f32 %v2279, 1.0
      %v2536 = vadd.f32 %v2280, 1.0
      %v2537 = vadd.f32 %v2281, 1.0
      %v2538 = vadd.f32 %v2282, 1.0
      %v2539 = vadd.f32 %v2283, 1.0
      %v2540 = vadd.f32 %v2284, 1.0
      %v2541 = vadd.f32 %v2285, 1.0
      %v2542 = vadd.f32 %v2286, 1.0
      %v2543 = vadd.f32 %v2287, 1.0
      %v2544 = vadd.f32 %v2288, 1.0
      %v2545 = vadd.f32 %v2289, 1.0
      %v2546 = vadd.f32 %v2290, 1.0
      %v2547 = vadd.f32 %v2291, 1.0
      %v2548 = vadd.f32 %v2292, 1.0
      %v2549 = vadd.f32 %v2293, 1.0
      %v2550 = vadd.f32 %v2294, 1.0
      %v2551 = vadd.f32 %v2295, 1.0
      %v2552 = vadd.f32 %v2296, 1.0
      %v2553 = vadd.f32 %v2297, 1.0
      %v2554 = vadd.f32 %v2298, 1.0
      %v2555 = vadd.f32 %v2299, 1.0
      %v2556 = vadd.f32 %v2300, 1.0
      %v2557 = vadd.f32 %v2301, 1.0
      %v2558 = vadd.f32 %v2302, 1.0
      %v2559 = vadd.f32 %v2303, 1.0
      %v2560 = vadd.f32 %v2304, 1.0
      %v2561 = vadd.f32 %v2305, 1.0
      %v2562 = vadd.f32 %v2306, 1.0
      %v2563 = vadd.f32 %v2307, 1.0
      %v2564 = vadd.f32 %v2308, 1.0
      %v2565 = vadd.f32 %v2309, 1.0
      %v2566 = vadd.f32 %v2310, 1.0
      %v2567 = vadd.f32 %v2311, 1.0
      %v2568 = vadd.f32 %v2312, 1.0
      %v2569 = vadd.f32 %v2313, 1.0
      %v2570 = vadd.f32 %v2314, 1.0
      %v2571 = vadd.f32 %v2315, 1.0
      %v2572 = vadd.f32 %v2316, 1.0
      %v2573 = vadd.f32 %v2317, 1.0
      %v2574 = vadd.f32 %v2318, 1.0
      %v2575 = vadd.f32 %v2319, 1.0
      %v2576 = vadd.f32 %v2320, 1.0
      %v2577 = vadd.f32 %v2321, 1.0
      %v2578 = vadd.f32 %v2322, 1.0
      %v2579 = vadd.f32 %v2323, 1.0
      %v2580 = vadd.f32 %v2324, 1.0
      %v2581 = vadd.f32 %v2325, 1.0
      %v2582 = vadd.f32 %v2326, 1.0
      %v2583 = vadd.f32 %v2327, 1.0
      %v2584 = vadd.f32 %v2328, 1.0
      %v2585 = vadd.f32 %v2329, 1.0
      %v2586 = vadd.f32 %v2330, 1.0
      %v2587 = vadd.f32 %v2331, 1.0
      %v2588 = vadd.f32 %v2332, 1.0
      %v2589 = vadd.f32 %v2333, 1.0
      %v2590 = vadd.f32 %v2334, 1.0
      %v2591 = vadd.f32 %v2335, 1.0
      %v2592 = vadd.f32 %v2336, 1.0
      %v2593 = vadd.f32 %v2337, 1.0
      %v2594 = vadd.f32 %v2338, 1.0
      %v2595 = vadd.f32 %v2339, 1.0
      %v2596 = vadd.f32 %v2340, 1.0
      %v2597 = vadd.f32 %v2341, 1.0
      %v2598 = vadd.f32 %v2342, 1.0
      %v2599 = vadd.f32 %v2343, 1.0
      %v2600 = vadd.f32 %v2344, 1.0
      %v2601 = vadd.f32 %v2345, 1.0
      %v2602 = vadd.f32 %v2346, 1.0
      %v2603 = vadd.f32 %v2347, 1.0
      %v2604 = vadd.f32 %v2348, 1.0
      %v2605 = vadd.f32 %v2349, 1.0
      %v2606 = vadd.f32 %v2350, 1.0
      %v2607 = vadd.f32 %v2351, 1.0
      %v2608 = vadd.f32 %v2352, 1.0
      %v2609 = vadd.f32 %v2353, 1.0
      %v2610 = vadd.f32 %v2354, 1.0
      %v2611 = vadd.f32 %v2355, 1.0
      %v2612 = vadd.f32 %v2356, 1.0
      %v2613 = vadd.f32 %v2357, 1.0
      %v2614 = vadd.f32 %v2358, 1.0
      %v2615 = vadd.f32 %v2359, 1.0
      %v2616 = vadd.f32 %v2360, 1.0
      %v2617 = vadd.f32 %v2361, 1.0
      %v2618 = vadd.f32 %v2362, 1.0
      %v2619 = vadd.f32 %v2363, 1.0
      %v2620 = vadd.f32 %v2364, 1.0
      %v2621 = vadd.f32 %v2365, 1.0
      %v2622 = vadd.f32 %v2366, 1.0
      %v2623 = vadd.f32 %v2367, 1.0
      %v2624 = vadd.f32 %v2368, 1.0
      %v2625 = vadd.f32 %v2369, 1.0
      %v2626 = vadd.f32 %v2370, 1.0
      %v2627 = vadd.f32 %v2371, 1.0
      %v2628 = vadd.f32 %v2372, 1.0
      %v2629 = vadd.f32 %v2373, 1.0
      %v2630 = vadd.f32 %v2374, 1.0
      %v2631 = vadd.f32 %v2375, 1.0
      %v2632 = vadd.f32 %v2376, 1.0
      %v2633 = vadd.f32 %v2377, 1.0
      %v2634 = vadd.f32 %v2378, 1.0
      %v2635 = vadd.f32 %v2379, 1.0
      %v2636 = vadd.f32 %v2380, 1.0
      %v2637 = vadd.f32 %v2381, 1.0
      %v2638 = vadd.f32 %v2382, 1.0
      %v2639 = vadd.f32 %v2383, 1.0
      %v2640 = vadd.f32 %v2384, 1.0
      %v2641 = vadd.f32 %v2385, 1.0
      %v2642 = vadd.f32 %v2386, 1.0
      %v2643 = vadd.f32 %v2387, 1.0
      %v2644 = vadd.f32 %v2388, 1.0
      %v2645 = vadd.f32 %v2389, 1.0
      %v2646 = vadd.f32 %v2390, 1.0
      %v2647 = vadd.f32 %v2391, 1.0
      %v2648 = vadd.f32 %v2392, 1.0
      %v2649 = vadd.f32 %v2393, 1.0
      %v2650 = vadd.f32 %v2394, 1.0
      %v2651 = vadd.f32 %v2395, 1.0
      %v2652 = vadd.f32 %v2396, 1.0
      %v2653 = vadd.f32 %v2397, 1.0
      %v2654 = vadd.f32 %v2398, 1.0
      %v2655 = vadd.f32 %v2399, 1.0
      %v2656 = vadd.f32 %v2400, 1.0
      %v2657 = vadd.f32 %v2401, 1.0
      %v2658 = vadd.f32 %v2402, 1.0
      %v2659 = vadd.f32 %v2403, 1.0
      %v2660 = vadd.f32 %v2404, 1.0
      %v2661 = vadd.f32 %v2405, 1.0
      %v2662 = vadd.f32 %v2406, 1.0
      %v2663 = vadd.f32 %v2407, 1.0
      %v2664 = vadd.f32 %v2408, 1.0
      %v2665 = vadd.f32 %v2409, 1.0
      %v2666 = vadd.f32 %v2410, 1.0
      %v2667 = vadd.f32 %v2411, 1.0
      %v2668 = vadd.f32 %v2412, 1.0
      %v2669 = vadd.f32 %v2413, 1.0
      %v2670 = vadd.f32 %v2414, 1.0
      %v2671 = vadd.f32 %v2415, 1.0
      %v2672 = vadd.f32 %v2416, 1.0
      %v2673 = vadd.f32 %v2417, 1.0
      %v2674 = vadd.f32 %v2418, 1.0
      %v2675 = vadd.f32 %v2419, 1.0
      %v2676 = vadd.f32 %v2420, 1.0
      %v2677 = vadd.f32 %v2421, 1.0
      %v2678 = vadd.f32 %v2422, 1.0
      %v2679 = vadd.f32 %v2423, 1.0
      %v2680 = vadd.f32 %v2424, 1.0
      %v2681 = vadd.f32 %v2425, 1.0
      %v2682 = vadd.f32 %v2426, 1.0
      %v2683 = vadd.f32 %v2427, 1.0
      %v2684 = vadd.f32 %v2428, 1.0
      %v2685 = vadd.f32 %v2429, 1.0
      %v2686 = vadd.f32 %v2430, 1.0
      %v2687 = vadd.f32 %v2431, 1.0
      %v2688 = vadd.f32 %v2432, 1.0
      %v2689 = vadd.f32 %v2433, 1.0
      %v2690 = vadd.f32 %v2434, 1.0
      %v2691 = vadd.f32 %v2435, 1.0
      %v2692 = vadd.f32 %v2436, 1.0
      %v2693 = vadd.f32 %v2437, 1.0
      %v2694 = vadd.f32 %v2438, 1.0
      %v2695 = vadd.f32 %v2439, 1.0
      %v2696 = vadd.f32 %v2440, 1.0
      %v2697 = vadd.f32 %v2441, 1.0
      %v2698 = vadd.f32 %v2442, 1.0
      %v2699 = vadd.f32 %v2443, 1.0
      %v2700 = vadd.f32 %v2444, 1.0
      %v2701 = vadd.f32 %v2445, 1.0
      %v2702 = vadd.f32 %v2446, 1.0
      %v2703 = vadd.f32 %v2447, 1.0
      %v2704 = vadd.f32 %v2448, 1.0
      %v2705 = vadd.f32 %v2449, 1.0
      %v2706 = vadd.f32 %v2450, 1.0
      %v2707 = vadd.f32 %v2451, 1.0
      %v2708 = vadd.f32 %v2452, 1.0
      %v2709 = vadd.f32 %v2453, 1.0
      %v2710 = vadd.f32 %v2454, 1.0
      %v2711 = vadd.f32 %v2455, 1.0
      %v2712 = vadd.f32 %v2456, 1.0
      %v2713 = vadd.f32 %v2457, 1.0
      %v2714 = vadd.f32 %v2458, 1.0
      %v2715 = vadd.f32 %v2459, 1.0
      %v2716 = vadd.f32 %v2460, 1.0
      %v2717 = vadd.f32 %v2461, 1.0
      %v2718 = vadd.f32 %v2462, 1.0
      %v2719 = vadd.f32 %v2463, 1.0
      %v2720 = vadd.f32 %v2464, 1.0
      %v2721 = vadd.f32 %v2465, 1.0
      %v2722 = vadd.f32 %v2466, 1.0
      %v2723 = vadd.f32 %v2467, 1.0
      %v2724 = vadd.f32 %v2468, 1.0
      %v2725 = vadd.f32 %v2469, 1.0
      %v2726 = vadd.f32 %v2470, 1.0
      %v2727 = vadd.f32 %v2471, 1.0
      %v2728 = vadd.f32 %v2472, 1.0
      %v2729 = vadd.f32 %v2473, 1.0
      %v2730 = vadd.f32 %v2474, 1.0
      %v2731 = vadd.f32 %v2475, 1.0
      %v2732 = vadd.f32 %v2476, 1.0
      %v2733 = vadd.f32 %v2477, 1.0
      %v2734 = vadd.f32 %v2478, 1.0
      %v2735 = vadd.f32 %v2479, 1.0
      %v2736 = vadd.f32 %v2480, 1.0
      %v2737 = vadd.f32 %v2481, 1.0
      %v2738 = vmul.f32 %v1714, %v2482
      %v2739 = vmul.f32 %v1715, %v2483
      %v2740 = vmul.f32 %v1716, %v2484
      %v2741 = vmul.f32 %v1717, %v2485
      %v2742 = vmul.f32 %v1718, %v2486
      %v2743 = vmul.f32 %v1719, %v2487
      %v2744 = vmul.f32 %v1720, %v2488
      %v2745 = vmul.f32 %v1721, %v2489
      %v2746 = vmul.f32 %v1722, %v2490
      %v2747 = vmul.f32 %v1723, %v2491
      %v2748 = vmul.f32 %v1724, %v2492
      %v2749 = vmul.f32 %v1725, %v2493
      %v2750 = vmul.f32 %v1726, %v2494
      %v2751 = vmul.f32 %v1727, %v2495
      %v2752 = vmul.f32 %v1728, %v2496
      %v2753 = vmul.f32 %v1729, %v2497
      %v2754 = vmul.f32 %v1730, %v2498
      %v2755 = vmul.f32 %v1731, %v2499
      %v2756 = vmul.f32 %v1732, %v2500
      %v2757 = vmul.f32 %v1733, %v2501
      %v2758 = vmul.f32 %v1734, %v2502
      %v2759 = vmul.f32 %v1735, %v2503
      %v2760 = vmul.f32 %v1736, %v2504
      %v2761 = vmul.f32 %v1737, %v2505
      %v2762 = vmul.f32 %v1738, %v2506
      %v2763 = vmul.f32 %v1739, %v2507
      %v2764 = vmul.f32 %v1740, %v2508
      %v2765 = vmul.f32 %v1741, %v2509
      %v2766 = vmul.f32 %v1742, %v2510
      %v2767 = vmul.f32 %v1743, %v2511
      %v2768 = vmul.f32 %v1744, %v2512
      %v2769 = vmul.f32 %v1745, %v2513
      %v2770 = vmul.f32 %v1746, %v2514
      %v2771 = vmul.f32 %v1747, %v2515
      %v2772 = vmul.f32 %v1748, %v2516
      %v2773 = vmul.f32 %v1749, %v2517
      %v2774 = vmul.f32 %v1750, %v2518
      %v2775 = vmul.f32 %v1751, %v2519
      %v2776 = vmul.f32 %v1752, %v2520
      %v2777 = vmul.f32 %v1753, %v2521
      %v2778 = vmul.f32 %v1754, %v2522
      %v2779 = vmul.f32 %v1755, %v2523
      %v2780 = vmul.f32 %v1756, %v2524
      %v2781 = vmul.f32 %v1757, %v2525
      %v2782 = vmul.f32 %v1758, %v2526
      %v2783 = vmul.f32 %v1759, %v2527
      %v2784 = vmul.f32 %v1760, %v2528
      %v2785 = vmul.f32 %v1761, %v2529
      %v2786 = vmul.f32 %v1762, %v2530
      %v2787 = vmul.f32 %v1763, %v2531
      %v2788 = vmul.f32 %v1764, %v2532
      %v2789 = vmul.f32 %v1765, %v2533
      %v2790 = vmul.f32 %v1766, %v2534
      %v2791 = vmul.f32 %v1767, %v2535
      %v2792 = vmul.f32 %v1768, %v2536
      %v2793 = vmul.f32 %v1769, %v2537
      %v2794 = vmul.f32 %v1770, %v2538
      %v2795 = vmul.f32 %v1771, %v2539
      %v2796 = vmul.f32 %v1772, %v2540
      %v2797 = vmul.f32 %v1773, %v2541
      %v2798 = vmul.f32 %v1774, %v2542
      %v2799 = vmul.f32 %v1775, %v2543
      %v2800 = vmul.f32 %v1776, %v2544
      %v2801 = vmul.f32 %v1777, %v2545
      %v2802 = vmul.f32 %v1778, %v2546
      %v2803 = vmul.f32 %v1779, %v2547
      %v2804 = vmul.f32 %v1780, %v2548
      %v2805 = vmul.f32 %v1781, %v2549
      %v2806 = vmul.f32 %v1782, %v2550
      %v2807 = vmul.f32 %v1783, %v2551
      %v2808 = vmul.f32 %v1784, %v2552
      %v2809 = vmul.f32 %v1785, %v2553
      %v2810 = vmul.f32 %v1786, %v2554
      %v2811 = vmul.f32 %v1787, %v2555
      %v2812 = vmul.f32 %v1788, %v2556
      %v2813 = vmul.f32 %v1789, %v2557
      %v2814 = vmul.f32 %v1790, %v2558
      %v2815 = vmul.f32 %v1791, %v2559
      %v2816 = vmul.f32 %v1792, %v2560
      %v2817 = vmul.f32 %v1793, %v2561
      %v2818 = vmul.f32 %v1794, %v2562
      %v2819 = vmul.f32 %v1795, %v2563
      %v2820 = vmul.f32 %v1796, %v2564
      %v2821 = vmul.f32 %v1797, %v2565
      %v2822 = vmul.f32 %v1798, %v2566
      %v2823 = vmul.f32 %v1799, %v2567
      %v2824 = vmul.f32 %v1800, %v2568
      %v2825 = vmul.f32 %v1801, %v2569
      %v2826 = vmul.f32 %v1802, %v2570
      %v2827 = vmul.f32 %v1803, %v2571
      %v2828 = vmul.f32 %v1804, %v2572
      %v2829 = vmul.f32 %v1805, %v2573
      %v2830 = vmul.f32 %v1806, %v2574
      %v2831 = vmul.f32 %v1807, %v2575
      %v2832 = vmul.f32 %v1808, %v2576
      %v2833 = vmul.f32 %v1809, %v2577
      %v2834 = vmul.f32 %v1810, %v2578
      %v2835 = vmul.f32 %v1811, %v2579
      %v2836 = vmul.f32 %v1812, %v2580
      %v2837 = vmul.f32 %v1813, %v2581
      %v2838 = vmul.f32 %v1814, %v2582
      %v2839 = vmul.f32 %v1815, %v2583
      %v2840 = vmul.f32 %v1816, %v2584
      %v2841 = vmul.f32 %v1817, %v2585
      %v2842 = vmul.f32 %v1818, %v2586
      %v2843 = vmul.f32 %v1819, %v2587
      %v2844 = vmul.f32 %v1820, %v2588
      %v2845 = vmul.f32 %v1821, %v2589
      %v2846 = vmul.f32 %v1822, %v2590
      %v2847 = vmul.f32 %v1823, %v2591
      %v2848 = vmul.f32 %v1824, %v2592
      %v2849 = vmul.f32 %v1825, %v2593
      %v2850 = vmul.f32 %v1826, %v2594
      %v2851 = vmul.f32 %v1827, %v2595
      %v2852 = vmul.f32 %v1828, %v2596
      %v2853 = vmul.f32 %v1829, %v2597
      %v2854 = vmul.f32 %v1830, %v2598
      %v2855 = vmul.f32 %v1831, %v2599
      %v2856 = vmul.f32 %v1832, %v2600
      %v2857 = vmul.f32 %v1833, %v2601
      %v2858 = vmul.f32 %v1834, %v2602
      %v2859 = vmul.f32 %v1835, %v2603
      %v2860 = vmul.f32 %v1836, %v2604
      %v2861 = vmul.f32 %v1837, %v2605
      %v2862 = vmul.f32 %v1838, %v2606
      %v2863 = vmul.f32 %v1839, %v2607
      %v2864 = vmul.f32 %v1840, %v2608
      %v2865 = vmul.f32 %v1841, %v2609
      %v2866 = vmul.f32 %v1842, %v2610
      %v2867 = vmul.f32 %v1843, %v2611
      %v2868 = vmul.f32 %v1844, %v2612
      %v2869 = vmul.f32 %v1845, %v2613
      %v2870 = vmul.f32 %v1846, %v2614
      %v2871 = vmul.f32 %v1847, %v2615
      %v2872 = vmul.f32 %v1848, %v2616
      %v2873 = vmul.f32 %v1849, %v2617
      %v2874 = vmul.f32 %v1850, %v2618
      %v2875 = vmul.f32 %v1851, %v2619
      %v2876 = vmul.f32 %v1852, %v2620
      %v2877 = vmul.f32 %v1853, %v2621
      %v2878 = vmul.f32 %v1854, %v2622
      %v2879 = vmul.f32 %v1855, %v2623
      %v2880 = vmul.f32 %v1856, %v2624
      %v2881 = vmul.f32 %v1857, %v2625
      %v2882 = vmul.f32 %v1858, %v2626
      %v2883 = vmul.f32 %v1859, %v2627
      %v2884 = vmul.f32 %v1860, %v2628
      %v2885 = vmul.f32 %v1861, %v2629
      %v2886 = vmul.f32 %v1862, %v2630
      %v2887 = vmul.f32 %v1863, %v2631
      %v2888 = vmul.f32 %v1864, %v2632
      %v2889 = vmul.f32 %v1865, %v2633
      %v2890 = vmul.f32 %v1866, %v2634
      %v2891 = vmul.f32 %v1867, %v2635
      %v2892 = vmul.f32 %v1868, %v2636
      %v2893 = vmul.f32 %v1869, %v2637
      %v2894 = vmul.f32 %v1870, %v2638
      %v2895 = vmul.f32 %v1871, %v2639
      %v2896 = vmul.f32 %v1872, %v2640
      %v2897 = vmul.f32 %v1873, %v2641
      %v2898 = vmul.f32 %v1874, %v2642
      %v2899 = vmul.f32 %v1875, %v2643
      %v2900 = vmul.f32 %v1876, %v2644
      %v2901 = vmul.f32 %v1877, %v2645
      %v2902 = vmul.f32 %v1878, %v2646
      %v2903 = vmul.f32 %v1879, %v2647
      %v2904 = vmul.f32 %v1880, %v2648
      %v2905 = vmul.f32 %v1881, %v2649
      %v2906 = vmul.f32 %v1882, %v2650
      %v2907 = vmul.f32 %v1883, %v2651
      %v2908 = vmul.f32 %v1884, %v2652
      %v2909 = vmul.f32 %v1885, %v2653
      %v2910 = vmul.f32 %v1886, %v2654
      %v2911 = vmul.f32 %v1887, %v2655
      %v2912 = vmul.f32 %v1888, %v2656
      %v2913 = vmul.f32 %v1889, %v2657
      %v2914 = vmul.f32 %v1890, %v2658
      %v2915 = vmul.f32 %v1891, %v2659
      %v2916 = vmul.f32 %v1892, %v2660
      %v2917 = vmul.f32 %v1893, %v2661
      %v2918 = vmul.f32 %v1894, %v2662
      %v2919 = vmul.f32 %v1895, %v2663
      %v2920 = vmul.f32 %v1896, %v2664
      %v2921 = vmul.f32 %v1897, %v2665
      %v2922 = vmul.f32 %v1898, %v2666
      %v2923 = vmul.f32 %v1899, %v2667
      %v2924 = vmul.f32 %v1900, %v2668
      %v2925 = vmul.f32 %v1901, %v2669
      %v2926 = vmul.f32 %v1902, %v2670
      %v2927 = vmul.f32 %v1903, %v2671
      %v2928 = vmul.f32 %v1904, %v2672
      %v2929 = vmul.f32 %v1905, %v2673
      %v2930 = vmul.f32 %v1906, %v2674
      %v2931 = vmul.f32 %v1907, %v2675
      %v2932 = vmul.f32 %v1908, %v2676
      %v2933 = vmul.f32 %v1909, %v2677
      %v2934 = vmul.f32 %v1910, %v2678
      %v2935 = vmul.f32 %v1911, %v2679
      %v2936 = vmul.f32 %v1912, %v2680
      %v2937 = vmul.f32 %v1913, %v2681
      %v2938 = vmul.f32 %v1914, %v2682
      %v2939 = vmul.f32 %v1915, %v2683
      %v2940 = vmul.f32 %v1916, %v2684
      %v2941 = vmul.f32 %v1917, %v2685
      %v2942 = vmul.f32 %v1918, %v2686
      %v2943 = vmul.f32 %v1919, %v2687
      %v2944 = vmul.f32 %v1920, %v2688
      %v2945 = vmul.f32 %v1921, %v2689
      %v2946 = vmul.f32 %v1922, %v2690
      %v2947 = vmul.f32 %v1923, %v2691
      %v2948 = vmul.f32 %v1924, %v2692
      %v2949 = vmul.f32 %v1925, %v2693
      %v2950 = vmul.f32 %v1926, %v2694
      %v2951 = vmul.f32 %v1927, %v2695
      %v2952 = vmul.f32 %v1928, %v2696
      %v2953 = vmul.f32 %v1929, %v2697
      %v2954 = vmul.f32 %v1930, %v2698
      %v2955 = vmul.f32 %v1931, %v2699
      %v2956 = vmul.f32 %v1932, %v2700
      %v2957 = vmul.f32 %v1933, %v2701
      %v2958 = vmul.f32 %v1934, %v2702
      %v2959 = vmul.f32 %v1935, %v2703
      %v2960 = vmul.f32 %v1936, %v2704
      %v2961 = vmul.f32 %v1937, %v2705
      %v2962 = vmul.f32 %v1938, %v2706
      %v2963 = vmul.f32 %v1939, %v2707
      %v2964 = vmul.f32 %v1940, %v2708
      %v2965 = vmul.f32 %v1941, %v2709
      %v2966 = vmul.f32 %v1942, %v2710
      %v2967 = vmul.f32 %v1943, %v2711
      %v2968 = vmul.f32 %v1944, %v2712
      %v2969 = vmul.f32 %v1945, %v2713
      %v2970 = vmul.f32 %v1946, %v2714
      %v2971 = vmul.f32 %v1947, %v2715
      %v2972 = vmul.f32 %v1948, %v2716
      %v2973 = vmul.f32 %v1949, %v2717
      %v2974 = vmul.f32 %v1950, %v2718
      %v2975 = vmul.f32 %v1951, %v2719
      %v2976 = vmul.f32 %v1952, %v2720
      %v2977 = vmul.f32 %v1953, %v2721
      %v2978 = vmul.f32 %v1954, %v2722
      %v2979 = vmul.f32 %v1955, %v2723
      %v2980 = vmul.f32 %v1956, %v2724
      %v2981 = vmul.f32 %v1957, %v2725
      %v2982 = vmul.f32 %v1958, %v2726
      %v2983 = vmul.f32 %v1959, %v2727
      %v2984 = vmul.f32 %v1960, %v2728
      %v2985 = vmul.f32 %v1961, %v2729
      %v2986 = vmul.f32 %v1962, %v2730
      %v2987 = vmul.f32 %v1963, %v2731
      %v2988 = vmul.f32 %v1964, %v2732
      %v2989 = vmul.f32 %v1965, %v2733
      %v2990 = vmul.f32 %v1966, %v2734
      %v2991 = vmul.f32 %v1967, %v2735
      %v2992 = vmul.f32 %v1968, %v2736
      %v2993 = vmul.f32 %v1969, %v2737
      %v2994 = vpack.c.bf16 %v2770, %v2738
      %v2995 = vpack.c.bf16 %v2771, %v2739
      %v2996 = vpack.c.bf16 %v2772, %v2740
      %v2997 = vpack.c.bf16 %v2773, %v2741
      %v2998 = vpack.c.bf16 %v2774, %v2742
      %v2999 = vpack.c.bf16 %v2775, %v2743
      %v3000 = vpack.c.bf16 %v2776, %v2744
      %v3001 = vpack.c.bf16 %v2777, %v2745
      %v3002 = vpack.c.bf16 %v2778, %v2746
      %v3003 = vpack.c.bf16 %v2779, %v2747
      %v3004 = vpack.c.bf16 %v2780, %v2748
      %v3005 = vpack.c.bf16 %v2781, %v2749
      %v3006 = vpack.c.bf16 %v2782, %v2750
      %v3007 = vpack.c.bf16 %v2783, %v2751
      %v3008 = vpack.c.bf16 %v2784, %v2752
      %v3009 = vpack.c.bf16 %v2785, %v2753
      %v3010 = vpack.c.bf16 %v2786, %v2754
      %v3011 = vpack.c.bf16 %v2787, %v2755
      %v3012 = vpack.c.bf16 %v2788, %v2756
      %v3013 = vpack.c.bf16 %v2789, %v2757
      %v3014 = vpack.c.bf16 %v2790, %v2758
      %v3015 = vpack.c.bf16 %v2791, %v2759
      %v3016 = vpack.c.bf16 %v2792, %v2760
      %v3017 = vpack.c.bf16 %v2793, %v2761
      %v3018 = vpack.c.bf16 %v2794, %v2762
      %v3019 = vpack.c.bf16 %v2795, %v2763
      %v3020 = vpack.c.bf16 %v2796, %v2764
      %v3021 = vpack.c.bf16 %v2797, %v2765
      %v3022 = vpack.c.bf16 %v2798, %v2766
      %v3023 = vpack.c.bf16 %v2799, %v2767
      %v3024 = vpack.c.bf16 %v2800, %v2768
      %v3025 = vpack.c.bf16 %v2801, %v2769
      %v3026 = vpack.c.bf16 %v2834, %v2802
      %v3027 = vpack.c.bf16 %v2835, %v2803
      %v3028 = vpack.c.bf16 %v2836, %v2804
      %v3029 = vpack.c.bf16 %v2837, %v2805
      %v3030 = vpack.c.bf16 %v2838, %v2806
      %v3031 = vpack.c.bf16 %v2839, %v2807
      %v3032 = vpack.c.bf16 %v2840, %v2808
      %v3033 = vpack.c.bf16 %v2841, %v2809
      %v3034 = vpack.c.bf16 %v2842, %v2810
      %v3035 = vpack.c.bf16 %v2843, %v2811
      %v3036 = vpack.c.bf16 %v2844, %v2812
      %v3037 = vpack.c.bf16 %v2845, %v2813
      %v3038 = vpack.c.bf16 %v2846, %v2814
      %v3039 = vpack.c.bf16 %v2847, %v2815
      %v3040 = vpack.c.bf16 %v2848, %v2816
      %v3041 = vpack.c.bf16 %v2849, %v2817
      %v3042 = vpack.c.bf16 %v2850, %v2818
      %v3043 = vpack.c.bf16 %v2851, %v2819
      %v3044 = vpack.c.bf16 %v2852, %v2820
      %v3045 = vpack.c.bf16 %v2853, %v2821
      %v3046 = vpack.c.bf16 %v2854, %v2822
      %v3047 = vpack.c.bf16 %v2855, %v2823
      %v3048 = vpack.c.bf16 %v2856, %v2824
      %v3049 = vpack.c.bf16 %v2857, %v2825
      %v3050 = vpack.c.bf16 %v2858, %v2826
      %v3051 = vpack.c.bf16 %v2859, %v2827
      %v3052 = vpack.c.bf16 %v2860, %v2828
      %v3053 = vpack.c.bf16 %v2861, %v2829
      %v3054 = vpack.c.bf16 %v2862, %v2830
      %v3055 = vpack.c.bf16 %v2863, %v2831
      %v3056 = vpack.c.bf16 %v2864, %v2832
      %v3057 = vpack.c.bf16 %v2865, %v2833
      %v3058 = vpack.c.bf16 %v2898, %v2866
      %v3059 = vpack.c.bf16 %v2899, %v2867
      %v3060 = vpack.c.bf16 %v2900, %v2868
      %v3061 = vpack.c.bf16 %v2901, %v2869
      %v3062 = vpack.c.bf16 %v2902, %v2870
      %v3063 = vpack.c.bf16 %v2903, %v2871
      %v3064 = vpack.c.bf16 %v2904, %v2872
      %v3065 = vpack.c.bf16 %v2905, %v2873
      %v3066 = vpack.c.bf16 %v2906, %v2874
      %v3067 = vpack.c.bf16 %v2907, %v2875
      %v3068 = vpack.c.bf16 %v2908, %v2876
      %v3069 = vpack.c.bf16 %v2909, %v2877
      %v3070 = vpack.c.bf16 %v2910, %v2878
      %v3071 = vpack.c.bf16 %v2911, %v2879
      %v3072 = vpack.c.bf16 %v2912, %v2880
      %v3073 = vpack.c.bf16 %v2913, %v2881
      %v3074 = vpack.c.bf16 %v2914, %v2882
      %v3075 = vpack.c.bf16 %v2915, %v2883
      %v3076 = vpack.c.bf16 %v2916, %v2884
      %v3077 = vpack.c.bf16 %v2917, %v2885
      %v3078 = vpack.c.bf16 %v2918, %v2886
      %v3079 = vpack.c.bf16 %v2919, %v2887
      %v3080 = vpack.c.bf16 %v2920, %v2888
      %v3081 = vpack.c.bf16 %v2921, %v2889
      %v3082 = vpack.c.bf16 %v2922, %v2890
      %v3083 = vpack.c.bf16 %v2923, %v2891
      %v3084 = vpack.c.bf16 %v2924, %v2892
      %v3085 = vpack.c.bf16 %v2925, %v2893
      %v3086 = vpack.c.bf16 %v2926, %v2894
      %v3087 = vpack.c.bf16 %v2927, %v2895
      %v3088 = vpack.c.bf16 %v2928, %v2896
      %v3089 = vpack.c.bf16 %v2929, %v2897
      %v3090 = vpack.c.bf16 %v2962, %v2930
      %v3091 = vpack.c.bf16 %v2963, %v2931
      %v3092 = vpack.c.bf16 %v2964, %v2932
      %v3093 = vpack.c.bf16 %v2965, %v2933
      %v3094 = vpack.c.bf16 %v2966, %v2934
      %v3095 = vpack.c.bf16 %v2967, %v2935
      %v3096 = vpack.c.bf16 %v2968, %v2936
      %v3097 = vpack.c.bf16 %v2969, %v2937
      %v3098 = vpack.c.bf16 %v2970, %v2938
      %v3099 = vpack.c.bf16 %v2971, %v2939
      %v3100 = vpack.c.bf16 %v2972, %v2940
      %v3101 = vpack.c.bf16 %v2973, %v2941
      %v3102 = vpack.c.bf16 %v2974, %v2942
      %v3103 = vpack.c.bf16 %v2975, %v2943
      %v3104 = vpack.c.bf16 %v2976, %v2944
      %v3105 = vpack.c.bf16 %v2977, %v2945
      %v3106 = vpack.c.bf16 %v2978, %v2946
      %v3107 = vpack.c.bf16 %v2979, %v2947
      %v3108 = vpack.c.bf16 %v2980, %v2948
      %v3109 = vpack.c.bf16 %v2981, %v2949
      %v3110 = vpack.c.bf16 %v2982, %v2950
      %v3111 = vpack.c.bf16 %v2983, %v2951
      %v3112 = vpack.c.bf16 %v2984, %v2952
      %v3113 = vpack.c.bf16 %v2985, %v2953
      %v3114 = vpack.c.bf16 %v2986, %v2954
      %v3115 = vpack.c.bf16 %v2987, %v2955
      %v3116 = vpack.c.bf16 %v2988, %v2956
      %v3117 = vpack.c.bf16 %v2989, %v2957
      %v3118 = vpack.c.bf16 %v2990, %v2958
      %v3119 = vpack.c.bf16 %v2991, %v2959
      %v3120 = vpack.c.bf16 %v2992, %v2960
      %v3121 = vpack.c.bf16 %v2993, %v2961
      %v3250 = vunpack.c.l.b16 %v2994
      %v3251 = vunpack.c.l.b16 %v2995
      %v3252 = vunpack.c.l.b16 %v2996
      %v3253 = vunpack.c.l.b16 %v2997
      %v3254 = vunpack.c.l.b16 %v2998
      %v3255 = vunpack.c.l.b16 %v2999
      %v3256 = vunpack.c.l.b16 %v3000
      %v3257 = vunpack.c.l.b16 %v3001
      %v3258 = vunpack.c.l.b16 %v3002
      %v3259 = vunpack.c.l.b16 %v3003
      %v3260 = vunpack.c.l.b16 %v3004
      %v3261 = vunpack.c.l.b16 %v3005
      %v3262 = vunpack.c.l.b16 %v3006
      %v3263 = vunpack.c.l.b16 %v3007
      %v3264 = vunpack.c.l.b16 %v3008
      %v3265 = vunpack.c.l.b16 %v3009
      %v3266 = vunpack.c.l.b16 %v3010
      %v3267 = vunpack.c.l.b16 %v3011
      %v3268 = vunpack.c.l.b16 %v3012
      %v3269 = vunpack.c.l.b16 %v3013
      %v3270 = vunpack.c.l.b16 %v3014
      %v3271 = vunpack.c.l.b16 %v3015
      %v3272 = vunpack.c.l.b16 %v3016
      %v3273 = vunpack.c.l.b16 %v3017
      %v3274 = vunpack.c.l.b16 %v3018
      %v3275 = vunpack.c.l.b16 %v3019
      %v3276 = vunpack.c.l.b16 %v3020
      %v3277 = vunpack.c.l.b16 %v3021
      %v3278 = vunpack.c.l.b16 %v3022
      %v3279 = vunpack.c.l.b16 %v3023
      %v3280 = vunpack.c.l.b16 %v3024
      %v3281 = vunpack.c.l.b16 %v3025
      %v3282 = vunpack.c.h.b16 %v2994
      %v3283 = vunpack.c.h.b16 %v2995
      %v3284 = vunpack.c.h.b16 %v2996
      %v3285 = vunpack.c.h.b16 %v2997
      %v3286 = vunpack.c.h.b16 %v2998
      %v3287 = vunpack.c.h.b16 %v2999
      %v3288 = vunpack.c.h.b16 %v3000
      %v3289 = vunpack.c.h.b16 %v3001
      %v3290 = vunpack.c.h.b16 %v3002
      %v3291 = vunpack.c.h.b16 %v3003
      %v3292 = vunpack.c.h.b16 %v3004
      %v3293 = vunpack.c.h.b16 %v3005
      %v3294 = vunpack.c.h.b16 %v3006
      %v3295 = vunpack.c.h.b16 %v3007
      %v3296 = vunpack.c.h.b16 %v3008
      %v3297 = vunpack.c.h.b16 %v3009
      %v3298 = vunpack.c.h.b16 %v3010
      %v3299 = vunpack.c.h.b16 %v3011
      %v3300 = vunpack.c.h.b16 %v3012
      %v3301 = vunpack.c.h.b16 %v3013
      %v3302 = vunpack.c.h.b16 %v3014
      %v3303 = vunpack.c.h.b16 %v3015
      %v3304 = vunpack.c.h.b16 %v3016
      %v3305 = vunpack.c.h.b16 %v3017
      %v3306 = vunpack.c.h.b16 %v3018
      %v3307 = vunpack.c.h.b16 %v3019
      %v3308 = vunpack.c.h.b16 %v3020
      %v3309 = vunpack.c.h.b16 %v3021
      %v3310 = vunpack.c.h.b16 %v3022
      %v3311 = vunpack.c.h.b16 %v3023
      %v3312 = vunpack.c.h.b16 %v3024
      %v3313 = vunpack.c.h.b16 %v3025
      %v3314 = vunpack.c.l.b16 %v3026
      %v3315 = vunpack.c.l.b16 %v3027
      %v3316 = vunpack.c.l.b16 %v3028
      %v3317 = vunpack.c.l.b16 %v3029
      %v3318 = vunpack.c.l.b16 %v3030
      %v3319 = vunpack.c.l.b16 %v3031
      %v3320 = vunpack.c.l.b16 %v3032
      %v3321 = vunpack.c.l.b16 %v3033
      %v3322 = vunpack.c.l.b16 %v3034
      %v3323 = vunpack.c.l.b16 %v3035
      %v3324 = vunpack.c.l.b16 %v3036
      %v3325 = vunpack.c.l.b16 %v3037
      %v3326 = vunpack.c.l.b16 %v3038
      %v3327 = vunpack.c.l.b16 %v3039
      %v3328 = vunpack.c.l.b16 %v3040
      %v3329 = vunpack.c.l.b16 %v3041
      %v3330 = vunpack.c.l.b16 %v3042
      %v3331 = vunpack.c.l.b16 %v3043
      %v3332 = vunpack.c.l.b16 %v3044
      %v3333 = vunpack.c.l.b16 %v3045
      %v3334 = vunpack.c.l.b16 %v3046
      %v3335 = vunpack.c.l.b16 %v3047
      %v3336 = vunpack.c.l.b16 %v3048
      %v3337 = vunpack.c.l.b16 %v3049
      %v3338 = vunpack.c.l.b16 %v3050
      %v3339 = vunpack.c.l.b16 %v3051
      %v3340 = vunpack.c.l.b16 %v3052
      %v3341 = vunpack.c.l.b16 %v3053
      %v3342 = vunpack.c.l.b16 %v3054
      %v3343 = vunpack.c.l.b16 %v3055
      %v3344 = vunpack.c.l.b16 %v3056
      %v3345 = vunpack.c.l.b16 %v3057
      %v3346 = vunpack.c.h.b16 %v3026
      %v3347 = vunpack.c.h.b16 %v3027
      %v3348 = vunpack.c.h.b16 %v3028
      %v3349 = vunpack.c.h.b16 %v3029
      %v3350 = vunpack.c.h.b16 %v3030
      %v3351 = vunpack.c.h.b16 %v3031
      %v3352 = vunpack.c.h.b16 %v3032
      %v3353 = vunpack.c.h.b16 %v3033
      %v3354 = vunpack.c.h.b16 %v3034
      %v3355 = vunpack.c.h.b16 %v3035
      %v3356 = vunpack.c.h.b16 %v3036
      %v3357 = vunpack.c.h.b16 %v3037
      %v3358 = vunpack.c.h.b16 %v3038
      %v3359 = vunpack.c.h.b16 %v3039
      %v3360 = vunpack.c.h.b16 %v3040
      %v3361 = vunpack.c.h.b16 %v3041
      %v3362 = vunpack.c.h.b16 %v3042
      %v3363 = vunpack.c.h.b16 %v3043
      %v3364 = vunpack.c.h.b16 %v3044
      %v3365 = vunpack.c.h.b16 %v3045
      %v3366 = vunpack.c.h.b16 %v3046
      %v3367 = vunpack.c.h.b16 %v3047
      %v3368 = vunpack.c.h.b16 %v3048
      %v3369 = vunpack.c.h.b16 %v3049
      %v3370 = vunpack.c.h.b16 %v3050
      %v3371 = vunpack.c.h.b16 %v3051
      %v3372 = vunpack.c.h.b16 %v3052
      %v3373 = vunpack.c.h.b16 %v3053
      %v3374 = vunpack.c.h.b16 %v3054
      %v3375 = vunpack.c.h.b16 %v3055
      %v3376 = vunpack.c.h.b16 %v3056
      %v3377 = vunpack.c.h.b16 %v3057
      %v3378 = vunpack.c.l.b16 %v3058
      %v3379 = vunpack.c.l.b16 %v3059
      %v3380 = vunpack.c.l.b16 %v3060
      %v3381 = vunpack.c.l.b16 %v3061
      %v3382 = vunpack.c.l.b16 %v3062
      %v3383 = vunpack.c.l.b16 %v3063
      %v3384 = vunpack.c.l.b16 %v3064
      %v3385 = vunpack.c.l.b16 %v3065
      %v3386 = vunpack.c.l.b16 %v3066
      %v3387 = vunpack.c.l.b16 %v3067
      %v3388 = vunpack.c.l.b16 %v3068
      %v3389 = vunpack.c.l.b16 %v3069
      %v3390 = vunpack.c.l.b16 %v3070
      %v3391 = vunpack.c.l.b16 %v3071
      %v3392 = vunpack.c.l.b16 %v3072
      %v3393 = vunpack.c.l.b16 %v3073
      %v3394 = vunpack.c.l.b16 %v3074
      %v3395 = vunpack.c.l.b16 %v3075
      %v3396 = vunpack.c.l.b16 %v3076
      %v3397 = vunpack.c.l.b16 %v3077
      %v3398 = vunpack.c.l.b16 %v3078
      %v3399 = vunpack.c.l.b16 %v3079
      %v3400 = vunpack.c.l.b16 %v3080
      %v3401 = vunpack.c.l.b16 %v3081
      %v3402 = vunpack.c.l.b16 %v3082
      %v3403 = vunpack.c.l.b16 %v3083
      %v3404 = vunpack.c.l.b16 %v3084
      %v3405 = vunpack.c.l.b16 %v3085
      %v3406 = vunpack.c.l.b16 %v3086
      %v3407 = vunpack.c.l.b16 %v3087
      %v3408 = vunpack.c.l.b16 %v3088
      %v3409 = vunpack.c.l.b16 %v3089
      %v3410 = vunpack.c.h.b16 %v3058
      %v3411 = vunpack.c.h.b16 %v3059
      %v3412 = vunpack.c.h.b16 %v3060
      %v3413 = vunpack.c.h.b16 %v3061
      %v3414 = vunpack.c.h.b16 %v3062
      %v3415 = vunpack.c.h.b16 %v3063
      %v3416 = vunpack.c.h.b16 %v3064
      %v3417 = vunpack.c.h.b16 %v3065
      %v3418 = vunpack.c.h.b16 %v3066
      %v3419 = vunpack.c.h.b16 %v3067
      %v3420 = vunpack.c.h.b16 %v3068
      %v3421 = vunpack.c.h.b16 %v3069
      %v3422 = vunpack.c.h.b16 %v3070
      %v3423 = vunpack.c.h.b16 %v3071
      %v3424 = vunpack.c.h.b16 %v3072
      %v3425 = vunpack.c.h.b16 %v3073
      %v3426 = vunpack.c.h.b16 %v3074
      %v3427 = vunpack.c.h.b16 %v3075
      %v3428 = vunpack.c.h.b16 %v3076
      %v3429 = vunpack.c.h.b16 %v3077
      %v3430 = vunpack.c.h.b16 %v3078
      %v3431 = vunpack.c.h.b16 %v3079
      %v3432 = vunpack.c.h.b16 %v3080
      %v3433 = vunpack.c.h.b16 %v3081
      %v3434 = vunpack.c.h.b16 %v3082
      %v3435 = vunpack.c.h.b16 %v3083
      %v3436 = vunpack.c.h.b16 %v3084
      %v3437 = vunpack.c.h.b16 %v3085
      %v3438 = vunpack.c.h.b16 %v3086
      %v3439 = vunpack.c.h.b16 %v3087
      %v3440 = vunpack.c.h.b16 %v3088
      %v3441 = vunpack.c.h.b16 %v3089
      %v3442 = vunpack.c.l.b16 %v3090
      %v3443 = vunpack.c.l.b16 %v3091
      %v3444 = vunpack.c.l.b16 %v3092
      %v3445 = vunpack.c.l.b16 %v3093
      %v3446 = vunpack.c.l.b16 %v3094
      %v3447 = vunpack.c.l.b16 %v3095
      %v3448 = vunpack.c.l.b16 %v3096
      %v3449 = vunpack.c.l.b16 %v3097
      %v3450 = vunpack.c.l.b16 %v3098
      %v3451 = vunpack.c.l.b16 %v3099
      %v3452 = vunpack.c.l.b16 %v3100
      %v3453 = vunpack.c.l.b16 %v3101
      %v3454 = vunpack.c.l.b16 %v3102
      %v3455 = vunpack.c.l.b16 %v3103
      %v3456 = vunpack.c.l.b16 %v3104
      %v3457 = vunpack.c.l.b16 %v3105
      %v3458 = vunpack.c.l.b16 %v3106
      %v3459 = vunpack.c.l.b16 %v3107
      %v3460 = vunpack.c.l.b16 %v3108
      %v3461 = vunpack.c.l.b16 %v3109
      %v3462 = vunpack.c.l.b16 %v3110
      %v3463 = vunpack.c.l.b16 %v3111
      %v3464 = vunpack.c.l.b16 %v3112
      %v3465 = vunpack.c.l.b16 %v3113
      %v3466 = vunpack.c.l.b16 %v3114
      %v3467 = vunpack.c.l.b16 %v3115
      %v3468 = vunpack.c.l.b16 %v3116
      %v3469 = vunpack.c.l.b16 %v3117
      %v3470 = vunpack.c.l.b16 %v3118
      %v3471 = vunpack.c.l.b16 %v3119
      %v3472 = vunpack.c.l.b16 %v3120
      %v3473 = vunpack.c.l.b16 %v3121
      %v3474 = vunpack.c.h.b16 %v3090
      %v3475 = vunpack.c.h.b16 %v3091
      %v3476 = vunpack.c.h.b16 %v3092
      %v3477 = vunpack.c.h.b16 %v3093
      %v3478 = vunpack.c.h.b16 %v3094
      %v3479 = vunpack.c.h.b16 %v3095
      %v3480 = vunpack.c.h.b16 %v3096
      %v3481 = vunpack.c.h.b16 %v3097
      %v3482 = vunpack.c.h.b16 %v3098
      %v3483 = vunpack.c.h.b16 %v3099
      %v3484 = vunpack.c.h.b16 %v3100
      %v3485 = vunpack.c.h.b16 %v3101
      %v3486 = vunpack.c.h.b16 %v3102
      %v3487 = vunpack.c.h.b16 %v3103
      %v3488 = vunpack.c.h.b16 %v3104
      %v3489 = vunpack.c.h.b16 %v3105
      %v3490 = vunpack.c.h.b16 %v3106
      %v3491 = vunpack.c.h.b16 %v3107
      %v3492 = vunpack.c.h.b16 %v3108
      %v3493 = vunpack.c.h.b16 %v3109
      %v3494 = vunpack.c.h.b16 %v3110
      %v3495 = vunpack.c.h.b16 %v3111
      %v3496 = vunpack.c.h.b16 %v3112
      %v3497 = vunpack.c.h.b16 %v3113
      %v3498 = vunpack.c.h.b16 %v3114
      %v3499 = vunpack.c.h.b16 %v3115
      %v3500 = vunpack.c.h.b16 %v3116
      %v3501 = vunpack.c.h.b16 %v3117
      %v3502 = vunpack.c.h.b16 %v3118
      %v3503 = vunpack.c.h.b16 %v3119
      %v3504 = vunpack.c.h.b16 %v3120
      %v3505 = vunpack.c.h.b16 %v3121
      %v3506 = vpack.c.b16 %v3251, %v3250
      %v3507 = vpack.c.b16 %v3253, %v3252
      %v3508 = vpack.c.b16 %v3255, %v3254
      %v3509 = vpack.c.b16 %v3257, %v3256
      %v3510 = vpack.c.b16 %v3259, %v3258
      %v3511 = vpack.c.b16 %v3261, %v3260
      %v3512 = vpack.c.b16 %v3263, %v3262
      %v3513 = vpack.c.b16 %v3265, %v3264
      %v3514 = vpack.c.b16 %v3267, %v3266
      %v3515 = vpack.c.b16 %v3269, %v3268
      %v3516 = vpack.c.b16 %v3271, %v3270
      %v3517 = vpack.c.b16 %v3273, %v3272
      %v3518 = vpack.c.b16 %v3275, %v3274
      %v3519 = vpack.c.b16 %v3277, %v3276
      %v3520 = vpack.c.b16 %v3279, %v3278
      %v3521 = vpack.c.b16 %v3281, %v3280
      %v3522 = vpack.c.b16 %v3283, %v3282
      %v3523 = vpack.c.b16 %v3285, %v3284
      %v3524 = vpack.c.b16 %v3287, %v3286
      %v3525 = vpack.c.b16 %v3289, %v3288
      %v3526 = vpack.c.b16 %v3291, %v3290
      %v3527 = vpack.c.b16 %v3293, %v3292
      %v3528 = vpack.c.b16 %v3295, %v3294
      %v3529 = vpack.c.b16 %v3297, %v3296
      %v3530 = vpack.c.b16 %v3299, %v3298
      %v3531 = vpack.c.b16 %v3301, %v3300
      %v3532 = vpack.c.b16 %v3303, %v3302
      %v3533 = vpack.c.b16 %v3305, %v3304
      %v3534 = vpack.c.b16 %v3307, %v3306
      %v3535 = vpack.c.b16 %v3309, %v3308
      %v3536 = vpack.c.b16 %v3311, %v3310
      %v3537 = vpack.c.b16 %v3313, %v3312
      %v3538 = vpack.c.b16 %v3315, %v3314
      %v3539 = vpack.c.b16 %v3317, %v3316
      %v3540 = vpack.c.b16 %v3319, %v3318
      %v3541 = vpack.c.b16 %v3321, %v3320
      %v3542 = vpack.c.b16 %v3323, %v3322
      %v3543 = vpack.c.b16 %v3325, %v3324
      %v3544 = vpack.c.b16 %v3327, %v3326
      %v3545 = vpack.c.b16 %v3329, %v3328
      %v3546 = vpack.c.b16 %v3331, %v3330
      %v3547 = vpack.c.b16 %v3333, %v3332
      %v3548 = vpack.c.b16 %v3335, %v3334
      %v3549 = vpack.c.b16 %v3337, %v3336
      %v3550 = vpack.c.b16 %v3339, %v3338
      %v3551 = vpack.c.b16 %v3341, %v3340
      %v3552 = vpack.c.b16 %v3343, %v3342
      %v3553 = vpack.c.b16 %v3345, %v3344
      %v3554 = vpack.c.b16 %v3347, %v3346
      %v3555 = vpack.c.b16 %v3349, %v3348
      %v3556 = vpack.c.b16 %v3351, %v3350
      %v3557 = vpack.c.b16 %v3353, %v3352
      %v3558 = vpack.c.b16 %v3355, %v3354
      %v3559 = vpack.c.b16 %v3357, %v3356
      %v3560 = vpack.c.b16 %v3359, %v3358
      %v3561 = vpack.c.b16 %v3361, %v3360
      %v3562 = vpack.c.b16 %v3363, %v3362
      %v3563 = vpack.c.b16 %v3365, %v3364
      %v3564 = vpack.c.b16 %v3367, %v3366
      %v3565 = vpack.c.b16 %v3369, %v3368
      %v3566 = vpack.c.b16 %v3371, %v3370
      %v3567 = vpack.c.b16 %v3373, %v3372
      %v3568 = vpack.c.b16 %v3375, %v3374
      %v3569 = vpack.c.b16 %v3377, %v3376
      %v3570 = vpack.c.b16 %v3379, %v3378
      %v3571 = vpack.c.b16 %v3381, %v3380
      %v3572 = vpack.c.b16 %v3383, %v3382
      %v3573 = vpack.c.b16 %v3385, %v3384
      %v3574 = vpack.c.b16 %v3387, %v3386
      %v3575 = vpack.c.b16 %v3389, %v3388
      %v3576 = vpack.c.b16 %v3391, %v3390
      %v3577 = vpack.c.b16 %v3393, %v3392
      %v3578 = vpack.c.b16 %v3395, %v3394
      %v3579 = vpack.c.b16 %v3397, %v3396
      %v3580 = vpack.c.b16 %v3399, %v3398
      %v3581 = vpack.c.b16 %v3401, %v3400
      %v3582 = vpack.c.b16 %v3403, %v3402
      %v3583 = vpack.c.b16 %v3405, %v3404
      %v3584 = vpack.c.b16 %v3407, %v3406
      %v3585 = vpack.c.b16 %v3409, %v3408
      %v3586 = vpack.c.b16 %v3411, %v3410
      %v3587 = vpack.c.b16 %v3413, %v3412
      %v3588 = vpack.c.b16 %v3415, %v3414
      %v3589 = vpack.c.b16 %v3417, %v3416
      %v3590 = vpack.c.b16 %v3419, %v3418
      %v3591 = vpack.c.b16 %v3421, %v3420
      %v3592 = vpack.c.b16 %v3423, %v3422
      %v3593 = vpack.c.b16 %v3425, %v3424
      %v3594 = vpack.c.b16 %v3427, %v3426
      %v3595 = vpack.c.b16 %v3429, %v3428
      %v3596 = vpack.c.b16 %v3431, %v3430
      %v3597 = vpack.c.b16 %v3433, %v3432
      %v3598 = vpack.c.b16 %v3435, %v3434
      %v3599 = vpack.c.b16 %v3437, %v3436
      %v3600 = vpack.c.b16 %v3439, %v3438
      %v3601 = vpack.c.b16 %v3441, %v3440
      %v3602 = vpack.c.b16 %v3443, %v3442
      %v3603 = vpack.c.b16 %v3445, %v3444
      %v3604 = vpack.c.b16 %v3447, %v3446
      %v3605 = vpack.c.b16 %v3449, %v3448
      %v3606 = vpack.c.b16 %v3451, %v3450
      %v3607 = vpack.c.b16 %v3453, %v3452
      %v3608 = vpack.c.b16 %v3455, %v3454
      %v3609 = vpack.c.b16 %v3457, %v3456
      %v3610 = vpack.c.b16 %v3459, %v3458
      %v3611 = vpack.c.b16 %v3461, %v3460
      %v3612 = vpack.c.b16 %v3463, %v3462
      %v3613 = vpack.c.b16 %v3465, %v3464
      %v3614 = vpack.c.b16 %v3467, %v3466
      %v3615 = vpack.c.b16 %v3469, %v3468
      %v3616 = vpack.c.b16 %v3471, %v3470
      %v3617 = vpack.c.b16 %v3473, %v3472
      %v3618 = vpack.c.b16 %v3475, %v3474
      %v3619 = vpack.c.b16 %v3477, %v3476
      %v3620 = vpack.c.b16 %v3479, %v3478
      %v3621 = vpack.c.b16 %v3481, %v3480
      %v3622 = vpack.c.b16 %v3483, %v3482
      %v3623 = vpack.c.b16 %v3485, %v3484
      %v3624 = vpack.c.b16 %v3487, %v3486
      %v3625 = vpack.c.b16 %v3489, %v3488
      %v3626 = vpack.c.b16 %v3491, %v3490
      %v3627 = vpack.c.b16 %v3493, %v3492
      %v3628 = vpack.c.b16 %v3495, %v3494
      %v3629 = vpack.c.b16 %v3497, %v3496
      %v3630 = vpack.c.b16 %v3499, %v3498
      %v3631 = vpack.c.b16 %v3501, %v3500
      %v3632 = vpack.c.b16 %v3503, %v3502
      %v3633 = vpack.c.b16 %v3505, %v3504
      %3762 = vst [vmem:[#allocation2] sm:$0xff] %v3506
      %3763 = vst [vmem:[#allocation2 + $0x8] sm:$0xff] %v3507
      %3764 = vst [vmem:[#allocation2 + $0x10] sm:$0xff] %v3508
      %3765 = vst [vmem:[#allocation2 + $0x18] sm:$0xff] %v3509
      %3766 = vst [vmem:[#allocation2 + $0x20] sm:$0xff] %v3510
      %3767 = vst [vmem:[#allocation2 + $0x28] sm:$0xff] %v3511
      %3768 = vst [vmem:[#allocation2 + $0x30] sm:$0xff] %v3512
      %3769 = vst [vmem:[#allocation2 + $0x38] sm:$0xff] %v3513
      %3770 = vst [vmem:[#allocation2 + $0x40] sm:$0xff] %v3514
      %3771 = vst [vmem:[#allocation2 + $0x48] sm:$0xff] %v3515
      %3772 = vst [vmem:[#allocation2 + $0x50] sm:$0xff] %v3516
      %3773 = vst [vmem:[#allocation2 + $0x58] sm:$0xff] %v3517
      %3774 = vst [vmem:[#allocation2 + $0x60] sm:$0xff] %v3518
      %3775 = vst [vmem:[#allocation2 + $0x68] sm:$0xff] %v3519
      %3776 = vst [vmem:[#allocation2 + $0x70] sm:$0xff] %v3520
      %3777 = vst [vmem:[#allocation2 + $0x78] sm:$0xff] %v3521
      %3778 = vst [vmem:[#allocation2 + $0x80] sm:$0xff] %v3522
      %3779 = vst [vmem:[#allocation2 + $0x88] sm:$0xff] %v3523
      %3780 = vst [vmem:[#allocation2 + $0x90] sm:$0xff] %v3524
      %3781 = vst [vmem:[#allocation2 + $0x98] sm:$0xff] %v3525
      %3782 = vst [vmem:[#allocation2 + $0xa0] sm:$0xff] %v3526
      %3783 = vst [vmem:[#allocation2 + $0xa8] sm:$0xff] %v3527
      %3784 = vst [vmem:[#allocation2 + $0xb0] sm:$0xff] %v3528
      %3785 = vst [vmem:[#allocation2 + $0xb8] sm:$0xff] %v3529
      %3786 = vst [vmem:[#allocation2 + $0xc0] sm:$0xff] %v3530
      %3787 = vst [vmem:[#allocation2 + $0xc8] sm:$0xff] %v3531
      %3788 = vst [vmem:[#allocation2 + $0xd0] sm:$0xff] %v3532
      %3789 = vst [vmem:[#allocation2 + $0xd8] sm:$0xff] %v3533
      %3790 = vst [vmem:[#allocation2 + $0xe0] sm:$0xff] %v3534
      %3791 = vst [vmem:[#allocation2 + $0xe8] sm:$0xff] %v3535
      %3792 = vst [vmem:[#allocation2 + $0xf0] sm:$0xff] %v3536
      %3793 = vst [vmem:[#allocation2 + $0xf8] sm:$0xff] %v3537
      %3794 = vst [vmem:[#allocation2 + $0x100] sm:$0xff] %v3538
      %3795 = vst [vmem:[#allocation2 + $0x108] sm:$0xff] %v3539
      %3796 = vst [vmem:[#allocation2 + $0x110] sm:$0xff] %v3540
      %3797 = vst [vmem:[#allocation2 + $0x118] sm:$0xff] %v3541
      %3798 = vst [vmem:[#allocation2 + $0x120] sm:$0xff] %v3542
      %3799 = vst [vmem:[#allocation2 + $0x128] sm:$0xff] %v3543
      %3800 = vst [vmem:[#allocation2 + $0x130] sm:$0xff] %v3544
      %3801 = vst [vmem:[#allocation2 + $0x138] sm:$0xff] %v3545
      %3802 = vst [vmem:[#allocation2 + $0x140] sm:$0xff] %v3546
      %3803 = vst [vmem:[#allocation2 + $0x148] sm:$0xff] %v3547
      %3804 = vst [vmem:[#allocation2 + $0x150] sm:$0xff] %v3548
      %3805 = vst [vmem:[#allocation2 + $0x158] sm:$0xff] %v3549
      %3806 = vst [vmem:[#allocation2 + $0x160] sm:$0xff] %v3550
      %3807 = vst [vmem:[#allocation2 + $0x168] sm:$0xff] %v3551
      %3808 = vst [vmem:[#allocation2 + $0x170] sm:$0xff] %v3552
      %3809 = vst [vmem:[#allocation2 + $0x178] sm:$0xff] %v3553
      %3810 = vst [vmem:[#allocation2 + $0x180] sm:$0xff] %v3554
      %3811 = vst [vmem:[#allocation2 + $0x188] sm:$0xff] %v3555
      %3812 = vst [vmem:[#allocation2 + $0x190] sm:$0xff] %v3556
      %3813 = vst [vmem:[#allocation2 + $0x198] sm:$0xff] %v3557
      %3814 = vst [vmem:[#allocation2 + $0x1a0] sm:$0xff] %v3558
      %3815 = vst [vmem:[#allocation2 + $0x1a8] sm:$0xff] %v3559
      %3816 = vst [vmem:[#allocation2 + $0x1b0] sm:$0xff] %v3560
      %3817 = vst [vmem:[#allocation2 + $0x1b8] sm:$0xff] %v3561
      %3818 = vst [vmem:[#allocation2 + $0x1c0] sm:$0xff] %v3562
      %3819 = vst [vmem:[#allocation2 + $0x1c8] sm:$0xff] %v3563
      %3820 = vst [vmem:[#allocation2 + $0x1d0] sm:$0xff] %v3564
      %3821 = vst [vmem:[#allocation2 + $0x1d8] sm:$0xff] %v3565
      %3822 = vst [vmem:[#allocation2 + $0x1e0] sm:$0xff] %v3566
      %3823 = vst [vmem:[#allocation2 + $0x1e8] sm:$0xff] %v3567
      %3824 = vst [vmem:[#allocation2 + $0x1f0] sm:$0xff] %v3568
      %3825 = vst [vmem:[#allocation2 + $0x1f8] sm:$0xff] %v3569
      %3826 = vst [vmem:[#allocation2 + $0x200] sm:$0xff] %v3570
      %3827 = vst [vmem:[#allocation2 + $0x208] sm:$0xff] %v3571
      %3828 = vst [vmem:[#allocation2 + $0x210] sm:$0xff] %v3572
      %3829 = vst [vmem:[#allocation2 + $0x218] sm:$0xff] %v3573
      %3830 = vst [vmem:[#allocation2 + $0x220] sm:$0xff] %v3574
      %3831 = vst [vmem:[#allocation2 + $0x228] sm:$0xff] %v3575
      %3832 = vst [vmem:[#allocation2 + $0x230] sm:$0xff] %v3576
      %3833 = vst [vmem:[#allocation2 + $0x238] sm:$0xff] %v3577
      %3834 = vst [vmem:[#allocation2 + $0x240] sm:$0xff] %v3578
      %3835 = vst [vmem:[#allocation2 + $0x248] sm:$0xff] %v3579
      %3836 = vst [vmem:[#allocation2 + $0x250] sm:$0xff] %v3580
      %3837 = vst [vmem:[#allocation2 + $0x258] sm:$0xff] %v3581
      %3838 = vst [vmem:[#allocation2 + $0x260] sm:$0xff] %v3582
      %3839 = vst [vmem:[#allocation2 + $0x268] sm:$0xff] %v3583
      %3840 = vst [vmem:[#allocation2 + $0x270] sm:$0xff] %v3584
      %3841 = vst [vmem:[#allocation2 + $0x278] sm:$0xff] %v3585
      %3842 = vst [vmem:[#allocation2 + $0x280] sm:$0xff] %v3586
      %3843 = vst [vmem:[#allocation2 + $0x288] sm:$0xff] %v3587
      %3844 = vst [vmem:[#allocation2 + $0x290] sm:$0xff] %v3588
      %3845 = vst [vmem:[#allocation2 + $0x298] sm:$0xff] %v3589
      %3846 = vst [vmem:[#allocation2 + $0x2a0] sm:$0xff] %v3590
      %3847 = vst [vmem:[#allocation2 + $0x2a8] sm:$0xff] %v3591
      %3848 = vst [vmem:[#allocation2 + $0x2b0] sm:$0xff] %v3592
      %3849 = vst [vmem:[#allocation2 + $0x2b8] sm:$0xff] %v3593
      %3850 = vst [vmem:[#allocation2 + $0x2c0] sm:$0xff] %v3594
      %3851 = vst [vmem:[#allocation2 + $0x2c8] sm:$0xff] %v3595
      %3852 = vst [vmem:[#allocation2 + $0x2d0] sm:$0xff] %v3596
      %3853 = vst [vmem:[#allocation2 + $0x2d8] sm:$0xff] %v3597
      %3854 = vst [vmem:[#allocation2 + $0x2e0] sm:$0xff] %v3598
      %3855 = vst [vmem:[#allocation2 + $0x2e8] sm:$0xff] %v3599
      %3856 = vst [vmem:[#allocation2 + $0x2f0] sm:$0xff] %v3600
      %3857 = vst [vmem:[#allocation2 + $0x2f8] sm:$0xff] %v3601
      %3858 = vst [vmem:[#allocation2 + $0x300] sm:$0xff] %v3602
      %3859 = vst [vmem:[#allocation2 + $0x308] sm:$0xff] %v3603
      %3860 = vst [vmem:[#allocation2 + $0x310] sm:$0xff] %v3604
      %3861 = vst [vmem:[#allocation2 + $0x318] sm:$0xff] %v3605
      %3862 = vst [vmem:[#allocation2 + $0x320] sm:$0xff] %v3606
      %3863 = vst [vmem:[#allocation2 + $0x328] sm:$0xff] %v3607
      %3864 = vst [vmem:[#allocation2 + $0x330] sm:$0xff] %v3608
      %3865 = vst [vmem:[#allocation2 + $0x338] sm:$0xff] %v3609
      %3866 = vst [vmem:[#allocation2 + $0x340] sm:$0xff] %v3610
      %3867 = vst [vmem:[#allocation2 + $0x348] sm:$0xff] %v3611
      %3868 = vst [vmem:[#allocation2 + $0x350] sm:$0xff] %v3612
      %3869 = vst [vmem:[#allocation2 + $0x358] sm:$0xff] %v3613
      %3870 = vst [vmem:[#allocation2 + $0x360] sm:$0xff] %v3614
      %3871 = vst [vmem:[#allocation2 + $0x368] sm:$0xff] %v3615
      %3872 = vst [vmem:[#allocation2 + $0x370] sm:$0xff] %v3616
      %3873 = vst [vmem:[#allocation2 + $0x378] sm:$0xff] %v3617
      %3874 = vst [vmem:[#allocation2 + $0x380] sm:$0xff] %v3618
      %3875 = vst [vmem:[#allocation2 + $0x388] sm:$0xff] %v3619
      %3876 = vst [vmem:[#allocation2 + $0x390] sm:$0xff] %v3620
      %3877 = vst [vmem:[#allocation2 + $0x398] sm:$0xff] %v3621
      %3878 = vst [vmem:[#allocation2 + $0x3a0] sm:$0xff] %v3622
      %3879 = vst [vmem:[#allocation2 + $0x3a8] sm:$0xff] %v3623
      %3880 = vst [vmem:[#allocation2 + $0x3b0] sm:$0xff] %v3624
      %3881 = vst [vmem:[#allocation2 + $0x3b8] sm:$0xff] %v3625
      %3882 = vst [vmem:[#allocation2 + $0x3c0] sm:$0xff] %v3626
      %3883 = vst [vmem:[#allocation2 + $0x3c8] sm:$0xff] %v3627
      %3884 = vst [vmem:[#allocation2 + $0x3d0] sm:$0xff] %v3628
      %3885 = vst [vmem:[#allocation2 + $0x3d8] sm:$0xff] %v3629
      %3886 = vst [vmem:[#allocation2 + $0x3e0] sm:$0xff] %v3630
      %3887 = vst [vmem:[#allocation2 + $0x3e8] sm:$0xff] %v3631
      %3888 = vst [vmem:[#allocation2 + $0x3f0] sm:$0xff] %v3632
      %3889 = vst [vmem:[#allocation2 + $0x3f8] sm:$0xff] %v3633
      %v3890 = vld [vmem:[%s3] sm:$0xf]
      %v3891 = vld [vmem:[%s3 + $0x4] sm:$0xf]
      %v3892 = vld [vmem:[%s3 + $0x8] sm:$0xf]
      %v3893 = vld [vmem:[%s3 + $0xc] sm:$0xf]
      %v3894 = vld [vmem:[#allocation2] sm:$0xff]
      %v3895 = vld [vmem:[#allocation2 + $0x8] sm:$0xff]
      %v3896 = vld [vmem:[#allocation2 + $0x10] sm:$0xff]
      %v3897 = vld [vmem:[#allocation2 + $0x18] sm:$0xff]
      %v3898 = vld [vmem:[#allocation2 + $0x20] sm:$0xff]
      %v3899 = vld [vmem:[#allocation2 + $0x28] sm:$0xff]
      %v3900 = vld [vmem:[#allocation2 + $0x30] sm:$0xff]
      %v3901 = vld [vmem:[#allocation2 + $0x38] sm:$0xff]
      %v3902 = vld [vmem:[#allocation2 + $0x40] sm:$0xff]
      %v3903 = vld [vmem:[#allocation2 + $0x48] sm:$0xff]
      %v3904 = vld [vmem:[#allocation2 + $0x50] sm:$0xff]
      %v3905 = vld [vmem:[#allocation2 + $0x58] sm:$0xff]
      %v3906 = vld [vmem:[#allocation2 + $0x60] sm:$0xff]
      %v3907 = vld [vmem:[#allocation2 + $0x68] sm:$0xff]
      %v3908 = vld [vmem:[#allocation2 + $0x70] sm:$0xff]
      %v3909 = vld [vmem:[#allocation2 + $0x78] sm:$0xff]
      %v3910 = vld [vmem:[#allocation2 + $0x80] sm:$0xff]
      %v3911 = vld [vmem:[#allocation2 + $0x88] sm:$0xff]
      %v3912 = vld [vmem:[#allocation2 + $0x90] sm:$0xff]
      %v3913 = vld [vmem:[#allocation2 + $0x98] sm:$0xff]
      %v3914 = vld [vmem:[#allocation2 + $0xa0] sm:$0xff]
      %v3915 = vld [vmem:[#allocation2 + $0xa8] sm:$0xff]
      %v3916 = vld [vmem:[#allocation2 + $0xb0] sm:$0xff]
      %v3917 = vld [vmem:[#allocation2 + $0xb8] sm:$0xff]
      %v3918 = vld [vmem:[#allocation2 + $0xc0] sm:$0xff]
      %v3919 = vld [vmem:[#allocation2 + $0xc8] sm:$0xff]
      %v3920 = vld [vmem:[#allocation2 + $0xd0] sm:$0xff]
      %v3921 = vld [vmem:[#allocation2 + $0xd8] sm:$0xff]
      %v3922 = vld [vmem:[#allocation2 + $0xe0] sm:$0xff]
      %v3923 = vld [vmem:[#allocation2 + $0xe8] sm:$0xff]
      %v3924 = vld [vmem:[#allocation2 + $0xf0] sm:$0xff]
      %v3925 = vld [vmem:[#allocation2 + $0xf8] sm:$0xff]
      %v3926 = vld [vmem:[#allocation2 + $0x100] sm:$0xff]
      %v3927 = vld [vmem:[#allocation2 + $0x108] sm:$0xff]
      %v3928 = vld [vmem:[#allocation2 + $0x110] sm:$0xff]
      %v3929 = vld [vmem:[#allocation2 + $0x118] sm:$0xff]
      %v3930 = vld [vmem:[#allocation2 + $0x120] sm:$0xff]
      %v3931 = vld [vmem:[#allocation2 + $0x128] sm:$0xff]
      %v3932 = vld [vmem:[#allocation2 + $0x130] sm:$0xff]
      %v3933 = vld [vmem:[#allocation2 + $0x138] sm:$0xff]
      %v3934 = vld [vmem:[#allocation2 + $0x140] sm:$0xff]
      %v3935 = vld [vmem:[#allocation2 + $0x148] sm:$0xff]
      %v3936 = vld [vmem:[#allocation2 + $0x150] sm:$0xff]
      %v3937 = vld [vmem:[#allocation2 + $0x158] sm:$0xff]
      %v3938 = vld [vmem:[#allocation2 + $0x160] sm:$0xff]
      %v3939 = vld [vmem:[#allocation2 + $0x168] sm:$0xff]
      %v3940 = vld [vmem:[#allocation2 + $0x170] sm:$0xff]
      %v3941 = vld [vmem:[#allocation2 + $0x178] sm:$0xff]
      %v3942 = vld [vmem:[#allocation2 + $0x180] sm:$0xff]
      %v3943 = vld [vmem:[#allocation2 + $0x188] sm:$0xff]
      %v3944 = vld [vmem:[#allocation2 + $0x190] sm:$0xff]
      %v3945 = vld [vmem:[#allocation2 + $0x198] sm:$0xff]
      %v3946 = vld [vmem:[#allocation2 + $0x1a0] sm:$0xff]
      %v3947 = vld [vmem:[#allocation2 + $0x1a8] sm:$0xff]
      %v3948 = vld [vmem:[#allocation2 + $0x1b0] sm:$0xff]
      %v3949 = vld [vmem:[#allocation2 + $0x1b8] sm:$0xff]
      %v3950 = vld [vmem:[#allocation2 + $0x1c0] sm:$0xff]
      %v3951 = vld [vmem:[#allocation2 + $0x1c8] sm:$0xff]
      %v3952 = vld [vmem:[#allocation2 + $0x1d0] sm:$0xff]
      %v3953 = vld [vmem:[#allocation2 + $0x1d8] sm:$0xff]
      %v3954 = vld [vmem:[#allocation2 + $0x1e0] sm:$0xff]
      %v3955 = vld [vmem:[#allocation2 + $0x1e8] sm:$0xff]
      %v3956 = vld [vmem:[#allocation2 + $0x1f0] sm:$0xff]
      %v3957 = vld [vmem:[#allocation2 + $0x1f8] sm:$0xff]
      %v3958 = vld [vmem:[#allocation2 + $0x200] sm:$0xff]
      %v3959 = vld [vmem:[#allocation2 + $0x208] sm:$0xff]
      %v3960 = vld [vmem:[#allocation2 + $0x210] sm:$0xff]
      %v3961 = vld [vmem:[#allocation2 + $0x218] sm:$0xff]
      %v3962 = vld [vmem:[#allocation2 + $0x220] sm:$0xff]
      %v3963 = vld [vmem:[#allocation2 + $0x228] sm:$0xff]
      %v3964 = vld [vmem:[#allocation2 + $0x230] sm:$0xff]
      %v3965 = vld [vmem:[#allocation2 + $0x238] sm:$0xff]
      %v3966 = vld [vmem:[#allocation2 + $0x240] sm:$0xff]
      %v3967 = vld [vmem:[#allocation2 + $0x248] sm:$0xff]
      %v3968 = vld [vmem:[#allocation2 + $0x250] sm:$0xff]
      %v3969 = vld [vmem:[#allocation2 + $0x258] sm:$0xff]
      %v3970 = vld [vmem:[#allocation2 + $0x260] sm:$0xff]
      %v3971 = vld [vmem:[#allocation2 + $0x268] sm:$0xff]
      %v3972 = vld [vmem:[#allocation2 + $0x270] sm:$0xff]
      %v3973 = vld [vmem:[#allocation2 + $0x278] sm:$0xff]
      %v3974 = vld [vmem:[#allocation2 + $0x280] sm:$0xff]
      %v3975 = vld [vmem:[#allocation2 + $0x288] sm:$0xff]
      %v3976 = vld [vmem:[#allocation2 + $0x290] sm:$0xff]
      %v3977 = vld [vmem:[#allocation2 + $0x298] sm:$0xff]
      %v3978 = vld [vmem:[#allocation2 + $0x2a0] sm:$0xff]
      %v3979 = vld [vmem:[#allocation2 + $0x2a8] sm:$0xff]
      %v3980 = vld [vmem:[#allocation2 + $0x2b0] sm:$0xff]
      %v3981 = vld [vmem:[#allocation2 + $0x2b8] sm:$0xff]
      %v3982 = vld [vmem:[#allocation2 + $0x2c0] sm:$0xff]
      %v3983 = vld [vmem:[#allocation2 + $0x2c8] sm:$0xff]
      %v3984 = vld [vmem:[#allocation2 + $0x2d0] sm:$0xff]
      %v3985 = vld [vmem:[#allocation2 + $0x2d8] sm:$0xff]
      %v3986 = vld [vmem:[#allocation2 + $0x2e0] sm:$0xff]
      %v3987 = vld [vmem:[#allocation2 + $0x2e8] sm:$0xff]
      %v3988 = vld [vmem:[#allocation2 + $0x2f0] sm:$0xff]
      %v3989 = vld [vmem:[#allocation2 + $0x2f8] sm:$0xff]
      %v3990 = vld [vmem:[#allocation2 + $0x300] sm:$0xff]
      %v3991 = vld [vmem:[#allocation2 + $0x308] sm:$0xff]
      %v3992 = vld [vmem:[#allocation2 + $0x310] sm:$0xff]
      %v3993 = vld [vmem:[#allocation2 + $0x318] sm:$0xff]
      %v3994 = vld [vmem:[#allocation2 + $0x320] sm:$0xff]
      %v3995 = vld [vmem:[#allocation2 + $0x328] sm:$0xff]
      %v3996 = vld [vmem:[#allocation2 + $0x330] sm:$0xff]
      %v3997 = vld [vmem:[#allocation2 + $0x338] sm:$0xff]
      %v3998 = vld [vmem:[#allocation2 + $0x340] sm:$0xff]
      %v3999 = vld [vmem:[#allocation2 + $0x348] sm:$0xff]
      %v4000 = vld [vmem:[#allocation2 + $0x350] sm:$0xff]
      %v4001 = vld [vmem:[#allocation2 + $0x358] sm:$0xff]
      %v4002 = vld [vmem:[#allocation2 + $0x360] sm:$0xff]
      %v4003 = vld [vmem:[#allocation2 + $0x368] sm:$0xff]
      %v4004 = vld [vmem:[#allocation2 + $0x370] sm:$0xff]
      %v4005 = vld [vmem:[#allocation2 + $0x378] sm:$0xff]
      %v4006 = vld [vmem:[#allocation2 + $0x380] sm:$0xff]
      %v4007 = vld [vmem:[#allocation2 + $0x388] sm:$0xff]
      %v4008 = vld [vmem:[#allocation2 + $0x390] sm:$0xff]
      %v4009 = vld [vmem:[#allocation2 + $0x398] sm:$0xff]
      %v4010 = vld [vmem:[#allocation2 + $0x3a0] sm:$0xff]
      %v4011 = vld [vmem:[#allocation2 + $0x3a8] sm:$0xff]
      %v4012 = vld [vmem:[#allocation2 + $0x3b0] sm:$0xff]
      %v4013 = vld [vmem:[#allocation2 + $0x3b8] sm:$0xff]
      %v4014 = vld [vmem:[#allocation2 + $0x3c0] sm:$0xff]
      %v4015 = vld [vmem:[#allocation2 + $0x3c8] sm:$0xff]
      %v4016 = vld [vmem:[#allocation2 + $0x3d0] sm:$0xff]
      %v4017 = vld [vmem:[#allocation2 + $0x3d8] sm:$0xff]
      %v4018 = vld [vmem:[#allocation2 + $0x3e0] sm:$0xff]
      %v4019 = vld [vmem:[#allocation2 + $0x3e8] sm:$0xff]
      %v4020 = vld [vmem:[#allocation2 + $0x3f0] sm:$0xff]
      %v4021 = vld [vmem:[#allocation2 + $0x3f8] sm:$0xff]
      %v4022 = vld [vmem:[%s4] sm:$0xff]
      %v4023 = vld [vmem:[%s4 + $0x8] sm:$0xff]
      %v4024 = vld [vmem:[%s4 + $0x10] sm:$0xff]
      %v4025 = vld [vmem:[%s4 + $0x18] sm:$0xff]
      %4027 = vset.pattern.permute.xlu0 0
      %4028 = vperm.xlu0 %4027, %v4022
      %v4029 = vpop.permute.xlu0 %4028
      %4032 = vset.pattern.permute.xlu0 0
      %4033 = vperm.xlu0 %4032, %v4023
      %v4034 = vpop.permute.xlu0 %4033
      %4037 = vset.pattern.permute.xlu0 0
      %4038 = vperm.xlu0 %4037, %v4024
      %v4039 = vpop.permute.xlu0 %4038
      %4042 = vset.pattern.permute.xlu0 0
      %4043 = vperm.xlu0 %4042, %v4025
      %v4044 = vpop.permute.xlu0 %4043
      %v4050 = vunpack.c.l.b16 %v3890
      %v4051 = vunpack.c.l.b16 %v3891
      %v4052 = vunpack.c.l.b16 %v3892
      %v4053 = vunpack.c.l.b16 %v3893
      %v4054 = vpack.c.b16 %v4051, %v4050
      %v4055 = vpack.c.b16 %v4053, %v4052
      %v4184 = vunpack.c.l.b16 %v3894
      %v4185 = vunpack.c.h.b16 %v3894
      %v4186 = vunpack.c.l.b16 %v3895
      %v4187 = vunpack.c.h.b16 %v3895
      %v4188 = vunpack.c.l.b16 %v3896
      %v4189 = vunpack.c.h.b16 %v3896
      %v4190 = vunpack.c.l.b16 %v3897
      %v4191 = vunpack.c.h.b16 %v3897
      %v4192 = vunpack.c.l.b16 %v3898
      %v4193 = vunpack.c.h.b16 %v3898
      %v4194 = vunpack.c.l.b16 %v3899
      %v4195 = vunpack.c.h.b16 %v3899
      %v4196 = vunpack.c.l.b16 %v3900
      %v4197 = vunpack.c.h.b16 %v3900
      %v4198 = vunpack.c.l.b16 %v3901
      %v4199 = vunpack.c.h.b16 %v3901
      %v4200 = vunpack.c.l.b16 %v3902
      %v4201 = vunpack.c.h.b16 %v3902
      %v4202 = vunpack.c.l.b16 %v3903
      %v4203 = vunpack.c.h.b16 %v3903
      %v4204 = vunpack.c.l.b16 %v3904
      %v4205 = vunpack.c.h.b16 %v3904
      %v4206 = vunpack.c.l.b16 %v3905
      %v4207 = vunpack.c.h.b16 %v3905
      %v4208 = vunpack.c.l.b16 %v3906
      %v4209 = vunpack.c.h.b16 %v3906
      %v4210 = vunpack.c.l.b16 %v3907
      %v4211 = vunpack.c.h.b16 %v3907
      %v4212 = vunpack.c.l.b16 %v3908
      %v4213 = vunpack.c.h.b16 %v3908
      %v4214 = vunpack.c.l.b16 %v3909
      %v4215 = vunpack.c.h.b16 %v3909
      %v4216 = vunpack.c.l.b16 %v3910
      %v4217 = vunpack.c.h.b16 %v3910
      %v4218 = vunpack.c.l.b16 %v3911
      %v4219 = vunpack.c.h.b16 %v3911
      %v4220 = vunpack.c.l.b16 %v3912
      %v4221 = vunpack.c.h.b16 %v3912
      %v4222 = vunpack.c.l.b16 %v3913
      %v4223 = vunpack.c.h.b16 %v3913
      %v4224 = vunpack.c.l.b16 %v3914
      %v4225 = vunpack.c.h.b16 %v3914
      %v4226 = vunpack.c.l.b16 %v3915
      %v4227 = vunpack.c.h.b16 %v3915
      %v4228 = vunpack.c.l.b16 %v3916
      %v4229 = vunpack.c.h.b16 %v3916
      %v4230 = vunpack.c.l.b16 %v3917
      %v4231 = vunpack.c.h.b16 %v3917
      %v4232 = vunpack.c.l.b16 %v3918
      %v4233 = vunpack.c.h.b16 %v3918
      %v4234 = vunpack.c.l.b16 %v3919
      %v4235 = vunpack.c.h.b16 %v3919
      %v4236 = vunpack.c.l.b16 %v3920
      %v4237 = vunpack.c.h.b16 %v3920
      %v4238 = vunpack.c.l.b16 %v3921
      %v4239 = vunpack.c.h.b16 %v3921
      %v4240 = vunpack.c.l.b16 %v3922
      %v4241 = vunpack.c.h.b16 %v3922
      %v4242 = vunpack.c.l.b16 %v3923
      %v4243 = vunpack.c.h.b16 %v3923
      %v4244 = vunpack.c.l.b16 %v3924
      %v4245 = vunpack.c.h.b16 %v3924
      %v4246 = vunpack.c.l.b16 %v3925
      %v4247 = vunpack.c.h.b16 %v3925
      %v4248 = vunpack.c.l.b16 %v3926
      %v4249 = vunpack.c.h.b16 %v3926
      %v4250 = vunpack.c.l.b16 %v3927
      %v4251 = vunpack.c.h.b16 %v3927
      %v4252 = vunpack.c.l.b16 %v3928
      %v4253 = vunpack.c.h.b16 %v3928
      %v4254 = vunpack.c.l.b16 %v3929
      %v4255 = vunpack.c.h.b16 %v3929
      %v4256 = vunpack.c.l.b16 %v3930
      %v4257 = vunpack.c.h.b16 %v3930
      %v4258 = vunpack.c.l.b16 %v3931
      %v4259 = vunpack.c.h.b16 %v3931
      %v4260 = vunpack.c.l.b16 %v3932
      %v4261 = vunpack.c.h.b16 %v3932
      %v4262 = vunpack.c.l.b16 %v3933
      %v4263 = vunpack.c.h.b16 %v3933
      %v4264 = vunpack.c.l.b16 %v3934
      %v4265 = vunpack.c.h.b16 %v3934
      %v4266 = vunpack.c.l.b16 %v3935
      %v4267 = vunpack.c.h.b16 %v3935
      %v4268 = vunpack.c.l.b16 %v3936
      %v4269 = vunpack.c.h.b16 %v3936
      %v4270 = vunpack.c.l.b16 %v3937
      %v4271 = vunpack.c.h.b16 %v3937
      %v4272 = vunpack.c.l.b16 %v3938
      %v4273 = vunpack.c.h.b16 %v3938
      %v4274 = vunpack.c.l.b16 %v3939
      %v4275 = vunpack.c.h.b16 %v3939
      %v4276 = vunpack.c.l.b16 %v3940
      %v4277 = vunpack.c.h.b16 %v3940
      %v4278 = vunpack.c.l.b16 %v3941
      %v4279 = vunpack.c.h.b16 %v3941
      %v4280 = vunpack.c.l.b16 %v3942
      %v4281 = vunpack.c.h.b16 %v3942
      %v4282 = vunpack.c.l.b16 %v3943
      %v4283 = vunpack.c.h.b16 %v3943
      %v4284 = vunpack.c.l.b16 %v3944
      %v4285 = vunpack.c.h.b16 %v3944
      %v4286 = vunpack.c.l.b16 %v3945
      %v4287 = vunpack.c.h.b16 %v3945
      %v4288 = vunpack.c.l.b16 %v3946
      %v4289 = vunpack.c.h.b16 %v3946
      %v4290 = vunpack.c.l.b16 %v3947
      %v4291 = vunpack.c.h.b16 %v3947
      %v4292 = vunpack.c.l.b16 %v3948
      %v4293 = vunpack.c.h.b16 %v3948
      %v4294 = vunpack.c.l.b16 %v3949
      %v4295 = vunpack.c.h.b16 %v3949
      %v4296 = vunpack.c.l.b16 %v3950
      %v4297 = vunpack.c.h.b16 %v3950
      %v4298 = vunpack.c.l.b16 %v3951
      %v4299 = vunpack.c.h.b16 %v3951
      %v4300 = vunpack.c.l.b16 %v3952
      %v4301 = vunpack.c.h.b16 %v3952
      %v4302 = vunpack.c.l.b16 %v3953
      %v4303 = vunpack.c.h.b16 %v3953
      %v4304 = vunpack.c.l.b16 %v3954
      %v4305 = vunpack.c.h.b16 %v3954
      %v4306 = vunpack.c.l.b16 %v3955
      %v4307 = vunpack.c.h.b16 %v3955
      %v4308 = vunpack.c.l.b16 %v3956
      %v4309 = vunpack.c.h.b16 %v3956
      %v4310 = vunpack.c.l.b16 %v3957
      %v4311 = vunpack.c.h.b16 %v3957
      %v4312 = vunpack.c.l.b16 %v3958
      %v4313 = vunpack.c.h.b16 %v3958
      %v4314 = vunpack.c.l.b16 %v3959
      %v4315 = vunpack.c.h.b16 %v3959
      %v4316 = vunpack.c.l.b16 %v3960
      %v4317 = vunpack.c.h.b16 %v3960
      %v4318 = vunpack.c.l.b16 %v3961
      %v4319 = vunpack.c.h.b16 %v3961
      %v4320 = vunpack.c.l.b16 %v3962
      %v4321 = vunpack.c.h.b16 %v3962
      %v4322 = vunpack.c.l.b16 %v3963
      %v4323 = vunpack.c.h.b16 %v3963
      %v4324 = vunpack.c.l.b16 %v3964
      %v4325 = vunpack.c.h.b16 %v3964
      %v4326 = vunpack.c.l.b16 %v3965
      %v4327 = vunpack.c.h.b16 %v3965
      %v4328 = vunpack.c.l.b16 %v3966
      %v4329 = vunpack.c.h.b16 %v3966
      %v4330 = vunpack.c.l.b16 %v3967
      %v4331 = vunpack.c.h.b16 %v3967
      %v4332 = vunpack.c.l.b16 %v3968
      %v4333 = vunpack.c.h.b16 %v3968
      %v4334 = vunpack.c.l.b16 %v3969
      %v4335 = vunpack.c.h.b16 %v3969
      %v4336 = vunpack.c.l.b16 %v3970
      %v4337 = vunpack.c.h.b16 %v3970
      %v4338 = vunpack.c.l.b16 %v3971
      %v4339 = vunpack.c.h.b16 %v3971
      %v4340 = vunpack.c.l.b16 %v3972
      %v4341 = vunpack.c.h.b16 %v3972
      %v4342 = vunpack.c.l.b16 %v3973
      %v4343 = vunpack.c.h.b16 %v3973
      %v4344 = vunpack.c.l.b16 %v3974
      %v4345 = vunpack.c.h.b16 %v3974
      %v4346 = vunpack.c.l.b16 %v3975
      %v4347 = vunpack.c.h.b16 %v3975
      %v4348 = vunpack.c.l.b16 %v3976
      %v4349 = vunpack.c.h.b16 %v3976
      %v4350 = vunpack.c.l.b16 %v3977
      %v4351 = vunpack.c.h.b16 %v3977
      %v4352 = vunpack.c.l.b16 %v3978
      %v4353 = vunpack.c.h.b16 %v3978
      %v4354 = vunpack.c.l.b16 %v3979
      %v4355 = vunpack.c.h.b16 %v3979
      %v4356 = vunpack.c.l.b16 %v3980
      %v4357 = vunpack.c.h.b16 %v3980
      %v4358 = vunpack.c.l.b16 %v3981
      %v4359 = vunpack.c.h.b16 %v3981
      %v4360 = vunpack.c.l.b16 %v3982
      %v4361 = vunpack.c.h.b16 %v3982
      %v4362 = vunpack.c.l.b16 %v3983
      %v4363 = vunpack.c.h.b16 %v3983
      %v4364 = vunpack.c.l.b16 %v3984
      %v4365 = vunpack.c.h.b16 %v3984
      %v4366 = vunpack.c.l.b16 %v3985
      %v4367 = vunpack.c.h.b16 %v3985
      %v4368 = vunpack.c.l.b16 %v3986
      %v4369 = vunpack.c.h.b16 %v3986
      %v4370 = vunpack.c.l.b16 %v3987
      %v4371 = vunpack.c.h.b16 %v3987
      %v4372 = vunpack.c.l.b16 %v3988
      %v4373 = vunpack.c.h.b16 %v3988
      %v4374 = vunpack.c.l.b16 %v3989
      %v4375 = vunpack.c.h.b16 %v3989
      %v4376 = vunpack.c.l.b16 %v3990
      %v4377 = vunpack.c.h.b16 %v3990
      %v4378 = vunpack.c.l.b16 %v3991
      %v4379 = vunpack.c.h.b16 %v3991
      %v4380 = vunpack.c.l.b16 %v3992
      %v4381 = vunpack.c.h.b16 %v3992
      %v4382 = vunpack.c.l.b16 %v3993
      %v4383 = vunpack.c.h.b16 %v3993
      %v4384 = vunpack.c.l.b16 %v3994
      %v4385 = vunpack.c.h.b16 %v3994
      %v4386 = vunpack.c.l.b16 %v3995
      %v4387 = vunpack.c.h.b16 %v3995
      %v4388 = vunpack.c.l.b16 %v3996
      %v4389 = vunpack.c.h.b16 %v3996
      %v4390 = vunpack.c.l.b16 %v3997
      %v4391 = vunpack.c.h.b16 %v3997
      %v4392 = vunpack.c.l.b16 %v3998
      %v4393 = vunpack.c.h.b16 %v3998
      %v4394 = vunpack.c.l.b16 %v3999
      %v4395 = vunpack.c.h.b16 %v3999
      %v4396 = vunpack.c.l.b16 %v4000
      %v4397 = vunpack.c.h.b16 %v4000
      %v4398 = vunpack.c.l.b16 %v4001
      %v4399 = vunpack.c.h.b16 %v4001
      %v4400 = vunpack.c.l.b16 %v4002
      %v4401 = vunpack.c.h.b16 %v4002
      %v4402 = vunpack.c.l.b16 %v4003
      %v4403 = vunpack.c.h.b16 %v4003
      %v4404 = vunpack.c.l.b16 %v4004
      %v4405 = vunpack.c.h.b16 %v4004
      %v4406 = vunpack.c.l.b16 %v4005
      %v4407 = vunpack.c.h.b16 %v4005
      %v4408 = vunpack.c.l.b16 %v4006
      %v4409 = vunpack.c.h.b16 %v4006
      %v4410 = vunpack.c.l.b16 %v4007
      %v4411 = vunpack.c.h.b16 %v4007
      %v4412 = vunpack.c.l.b16 %v4008
      %v4413 = vunpack.c.h.b16 %v4008
      %v4414 = vunpack.c.l.b16 %v4009
      %v4415 = vunpack.c.h.b16 %v4009
      %v4416 = vunpack.c.l.b16 %v4010
      %v4417 = vunpack.c.h.b16 %v4010
      %v4418 = vunpack.c.l.b16 %v4011
      %v4419 = vunpack.c.h.b16 %v4011
      %v4420 = vunpack.c.l.b16 %v4012
      %v4421 = vunpack.c.h.b16 %v4012
      %v4422 = vunpack.c.l.b16 %v4013
      %v4423 = vunpack.c.h.b16 %v4013
      %v4424 = vunpack.c.l.b16 %v4014
      %v4425 = vunpack.c.h.b16 %v4014
      %v4426 = vunpack.c.l.b16 %v4015
      %v4427 = vunpack.c.h.b16 %v4015
      %v4428 = vunpack.c.l.b16 %v4016
      %v4429 = vunpack.c.h.b16 %v4016
      %v4430 = vunpack.c.l.b16 %v4017
      %v4431 = vunpack.c.h.b16 %v4017
      %v4432 = vunpack.c.l.b16 %v4018
      %v4433 = vunpack.c.h.b16 %v4018
      %v4434 = vunpack.c.l.b16 %v4019
      %v4435 = vunpack.c.h.b16 %v4019
      %v4436 = vunpack.c.l.b16 %v4020
      %v4437 = vunpack.c.h.b16 %v4020
      %v4438 = vunpack.c.l.b16 %v4021
      %v4439 = vunpack.c.h.b16 %v4021
      %v4440 = vpack.c.b16 %v4216, %v4184
      %v4441 = vpack.c.b16 %v4217, %v4185
      %v4442 = vpack.c.b16 %v4218, %v4186
      %v4443 = vpack.c.b16 %v4219, %v4187
      %v4444 = vpack.c.b16 %v4220, %v4188
      %v4445 = vpack.c.b16 %v4221, %v4189
      %v4446 = vpack.c.b16 %v4222, %v4190
      %v4447 = vpack.c.b16 %v4223, %v4191
      %v4448 = vpack.c.b16 %v4224, %v4192
      %v4449 = vpack.c.b16 %v4225, %v4193
      %v4450 = vpack.c.b16 %v4226, %v4194
      %v4451 = vpack.c.b16 %v4227, %v4195
      %v4452 = vpack.c.b16 %v4228, %v4196
      %v4453 = vpack.c.b16 %v4229, %v4197
      %v4454 = vpack.c.b16 %v4230, %v4198
      %v4455 = vpack.c.b16 %v4231, %v4199
      %v4456 = vpack.c.b16 %v4232, %v4200
      %v4457 = vpack.c.b16 %v4233, %v4201
      %v4458 = vpack.c.b16 %v4234, %v4202
      %v4459 = vpack.c.b16 %v4235, %v4203
      %v4460 = vpack.c.b16 %v4236, %v4204
      %v4461 = vpack.c.b16 %v4237, %v4205
      %v4462 = vpack.c.b16 %v4238, %v4206
      %v4463 = vpack.c.b16 %v4239, %v4207
      %v4464 = vpack.c.b16 %v4240, %v4208
      %v4465 = vpack.c.b16 %v4241, %v4209
      %v4466 = vpack.c.b16 %v4242, %v4210
      %v4467 = vpack.c.b16 %v4243, %v4211
      %v4468 = vpack.c.b16 %v4244, %v4212
      %v4469 = vpack.c.b16 %v4245, %v4213
      %v4470 = vpack.c.b16 %v4246, %v4214
      %v4471 = vpack.c.b16 %v4247, %v4215
      %v4472 = vpack.c.b16 %v4280, %v4248
      %v4473 = vpack.c.b16 %v4281, %v4249
      %v4474 = vpack.c.b16 %v4282, %v4250
      %v4475 = vpack.c.b16 %v4283, %v4251
      %v4476 = vpack.c.b16 %v4284, %v4252
      %v4477 = vpack.c.b16 %v4285, %v4253
      %v4478 = vpack.c.b16 %v4286, %v4254
      %v4479 = vpack.c.b16 %v4287, %v4255
      %v4480 = vpack.c.b16 %v4288, %v4256
      %v4481 = vpack.c.b16 %v4289, %v4257
      %v4482 = vpack.c.b16 %v4290, %v4258
      %v4483 = vpack.c.b16 %v4291, %v4259
      %v4484 = vpack.c.b16 %v4292, %v4260
      %v4485 = vpack.c.b16 %v4293, %v4261
      %v4486 = vpack.c.b16 %v4294, %v4262
      %v4487 = vpack.c.b16 %v4295, %v4263
      %v4488 = vpack.c.b16 %v4296, %v4264
      %v4489 = vpack.c.b16 %v4297, %v4265
      %v4490 = vpack.c.b16 %v4298, %v4266
      %v4491 = vpack.c.b16 %v4299, %v4267
      %v4492 = vpack.c.b16 %v4300, %v4268
      %v4493 = vpack.c.b16 %v4301, %v4269
      %v4494 = vpack.c.b16 %v4302, %v4270
      %v4495 = vpack.c.b16 %v4303, %v4271
      %v4496 = vpack.c.b16 %v4304, %v4272
      %v4497 = vpack.c.b16 %v4305, %v4273
      %v4498 = vpack.c.b16 %v4306, %v4274
      %v4499 = vpack.c.b16 %v4307, %v4275
      %v4500 = vpack.c.b16 %v4308, %v4276
      %v4501 = vpack.c.b16 %v4309, %v4277
      %v4502 = vpack.c.b16 %v4310, %v4278
      %v4503 = vpack.c.b16 %v4311, %v4279
      %v4504 = vpack.c.b16 %v4344, %v4312
      %v4505 = vpack.c.b16 %v4345, %v4313
      %v4506 = vpack.c.b16 %v4346, %v4314
      %v4507 = vpack.c.b16 %v4347, %v4315
      %v4508 = vpack.c.b16 %v4348, %v4316
      %v4509 = vpack.c.b16 %v4349, %v4317
      %v4510 = vpack.c.b16 %v4350, %v4318
      %v4511 = vpack.c.b16 %v4351, %v4319
      %v4512 = vpack.c.b16 %v4352, %v4320
      %v4513 = vpack.c.b16 %v4353, %v4321
      %v4514 = vpack.c.b16 %v4354, %v4322
      %v4515 = vpack.c.b16 %v4355, %v4323
      %v4516 = vpack.c.b16 %v4356, %v4324
      %v4517 = vpack.c.b16 %v4357, %v4325
      %v4518 = vpack.c.b16 %v4358, %v4326
      %v4519 = vpack.c.b16 %v4359, %v4327
      %v4520 = vpack.c.b16 %v4360, %v4328
      %v4521 = vpack.c.b16 %v4361, %v4329
      %v4522 = vpack.c.b16 %v4362, %v4330
      %v4523 = vpack.c.b16 %v4363, %v4331
      %v4524 = vpack.c.b16 %v4364, %v4332
      %v4525 = vpack.c.b16 %v4365, %v4333
      %v4526 = vpack.c.b16 %v4366, %v4334
      %v4527 = vpack.c.b16 %v4367, %v4335
      %v4528 = vpack.c.b16 %v4368, %v4336
      %v4529 = vpack.c.b16 %v4369, %v4337
      %v4530 = vpack.c.b16 %v4370, %v4338
      %v4531 = vpack.c.b16 %v4371, %v4339
      %v4532 = vpack.c.b16 %v4372, %v4340
      %v4533 = vpack.c.b16 %v4373, %v4341
      %v4534 = vpack.c.b16 %v4374, %v4342
      %v4535 = vpack.c.b16 %v4375, %v4343
      %v4536 = vpack.c.b16 %v4408, %v4376
      %v4537 = vpack.c.b16 %v4409, %v4377
      %v4538 = vpack.c.b16 %v4410, %v4378
      %v4539 = vpack.c.b16 %v4411, %v4379
      %v4540 = vpack.c.b16 %v4412, %v4380
      %v4541 = vpack.c.b16 %v4413, %v4381
      %v4542 = vpack.c.b16 %v4414, %v4382
      %v4543 = vpack.c.b16 %v4415, %v4383
      %v4544 = vpack.c.b16 %v4416, %v4384
      %v4545 = vpack.c.b16 %v4417, %v4385
      %v4546 = vpack.c.b16 %v4418, %v4386
      %v4547 = vpack.c.b16 %v4419, %v4387
      %v4548 = vpack.c.b16 %v4420, %v4388
      %v4549 = vpack.c.b16 %v4421, %v4389
      %v4550 = vpack.c.b16 %v4422, %v4390
      %v4551 = vpack.c.b16 %v4423, %v4391
      %v4552 = vpack.c.b16 %v4424, %v4392
      %v4553 = vpack.c.b16 %v4425, %v4393
      %v4554 = vpack.c.b16 %v4426, %v4394
      %v4555 = vpack.c.b16 %v4427, %v4395
      %v4556 = vpack.c.b16 %v4428, %v4396
      %v4557 = vpack.c.b16 %v4429, %v4397
      %v4558 = vpack.c.b16 %v4430, %v4398
      %v4559 = vpack.c.b16 %v4431, %v4399
      %v4560 = vpack.c.b16 %v4432, %v4400
      %v4561 = vpack.c.b16 %v4433, %v4401
      %v4562 = vpack.c.b16 %v4434, %v4402
      %v4563 = vpack.c.b16 %v4435, %v4403
      %v4564 = vpack.c.b16 %v4436, %v4404
      %v4565 = vpack.c.b16 %v4437, %v4405
      %v4566 = vpack.c.b16 %v4438, %v4406
      %v4567 = vpack.c.b16 %v4439, %v4407
      %vm4696 = vcmask 523264
      %v4698 = vsel %vm4696, %v4054, 0
      %v4701 = vsel %vm4696, %v4055, 0
      %4703 = vmatprep.subr.bf16.mxu0 0
      %4704 = vmatpush1.bf16.msra.mxu0 0
      %4705 = vmatprep.subr.bf16.mxu0 0
      %4706 = vmatpush1.bf16.msra.mxu0 0
      %4707 = vmatprep.subr.bf16.mxu0 0
      %4708 = vmatpush1.bf16.msra.mxu0 0
      %4709 = vmatprep.subr.bf16.mxu0 0
      %4710 = vmatpush1.bf16.msra.mxu0 0
      %4711 = vmatprep.subr.bf16.mxu0 %v4537
      %4712 = vmatpush1.bf16.msra.mxu0 %v4536
      %4713 = vmatprep.subr.bf16.mxu0 %v4505
      %4714 = vmatpush1.bf16.msra.mxu0 %v4504
      %4715 = vmatprep.subr.bf16.mxu0 %v4473
      %4716 = vmatpush1.bf16.msra.mxu0 %v4472
      %4717 = vmatprep.subr.bf16.mxu0 %v4441
      %4718 = vmatpush1.bf16.msra.mxu0 %v4440
      %4719 = vmatprep.subr.bf16.mxu0 0
      %4720 = vmatpush2.bf16.msra.mxu0 0
      %4721 = vmatprep.subr.bf16.mxu0 0
      %4722 = vmatpush2.bf16.msra.mxu0 0
      %4723 = vmatprep.subr.bf16.mxu0 0
      %4724 = vmatpush2.bf16.msra.mxu0 0
      %4725 = vmatprep.subr.bf16.mxu0 0
      %4726 = vmatpush2.bf16.msra.mxu0 0
      %4727 = vmatprep.subr.bf16.mxu0 0
      %4728 = vmatpush2.bf16.msra.mxu0 0
      %4729 = vmatprep.subr.bf16.mxu0 0
      %4730 = vmatpush2.bf16.msra.mxu0 0
      %4731 = vmatprep.subr.bf16.mxu0 0
      %4732 = vmatpush2.bf16.msra.mxu0 0
      %4733 = vmatprep.subr.bf16.mxu0 0
      %4734 = vmatpush2.bf16.msra.mxu0 0
      %4735 = vmatprep.mubr.bf16.mxu0 0
      %4736 = vmatmul.mubr.bf16.gmra.mxu0 %v4698
      %v4737 = vpop.f32.mrf.mxu0
      %v4738 = vadd.f32 %v4029, %v4737
      %v4739 = vpop.f32.mrf.mxu0
      %v4740 = vadd.f32 %v4029, %v4739
      %v4741 = vpop.f32.mrf.mxu0
      %v4742 = vadd.f32 %v4034, %v4741
      %v4743 = vpop.f32.mrf.mxu0
      %v4744 = vadd.f32 %v4034, %v4743
      %4745 = vmatprep.mubr.bf16.mxu0 0
      %4746 = vmatmul.mubr.bf16.gmra.mxu0 %v4701
      %v4747 = vpop.f32.mrf.mxu0
      %v4748 = vadd.f32 %v4039, %v4747
      %v4749 = vpop.f32.mrf.mxu0
      %v4750 = vadd.f32 %v4039, %v4749
      %v4751 = vpop.f32.mrf.mxu0
      %v4752 = vadd.f32 %v4044, %v4751
      %v4753 = vpop.f32.mrf.mxu0
      %v4754 = vadd.f32 %v4044, %v4753
      %4755 = vdwg.mxu0
      %4756 = vmatprep.subr.bf16.mxu0 0
      %4757 = vmatpush1.bf16.msra.mxu0 0
      %4758 = vmatprep.subr.bf16.mxu0 0
      %4759 = vmatpush1.bf16.msra.mxu0 0
      %4760 = vmatprep.subr.bf16.mxu0 0
      %4761 = vmatpush1.bf16.msra.mxu0 0
      %4762 = vmatprep.subr.bf16.mxu0 0
      %4763 = vmatpush1.bf16.msra.mxu0 0
      %4764 = vmatprep.subr.bf16.mxu0 %v4539
      %4765 = vmatpush1.bf16.msra.mxu0 %v4538
      %4766 = vmatprep.subr.bf16.mxu0 %v4507
      %4767 = vmatpush1.bf16.msra.mxu0 %v4506
      %4768 = vmatprep.subr.bf16.mxu0 %v4475
      %4769 = vmatpush1.bf16.msra.mxu0 %v4474
      %4770 = vmatprep.subr.bf16.mxu0 %v4443
      %4771 = vmatpush1.bf16.msra.mxu0 %v4442
      %4772 = vmatprep.subr.bf16.mxu0 0
      %4773 = vmatpush2.bf16.msra.mxu0 0
      %4774 = vmatprep.subr.bf16.mxu0 0
      %4775 = vmatpush2.bf16.msra.mxu0 0
      %4776 = vmatprep.subr.bf16.mxu0 0
      %4777 = vmatpush2.bf16.msra.mxu0 0
      %4778 = vmatprep.subr.bf16.mxu0 0
      %4779 = vmatpush2.bf16.msra.mxu0 0
      %4780 = vmatprep.subr.bf16.mxu0 0
      %4781 = vmatpush2.bf16.msra.mxu0 0
      %4782 = vmatprep.subr.bf16.mxu0 0
      %4783 = vmatpush2.bf16.msra.mxu0 0
      %4784 = vmatprep.subr.bf16.mxu0 0
      %4785 = vmatpush2.bf16.msra.mxu0 0
      %4786 = vmatprep.subr.bf16.mxu0 0
      %4787 = vmatpush2.bf16.msra.mxu0 0
      %4788 = vmatprep.mubr.bf16.mxu0 0
      %4789 = vmatmul.mubr.bf16.gmra.mxu0 %v4698
      %v4790 = vpop.f32.mrf.mxu0
      %v4791 = vadd.f32 %v4029, %v4790
      %v4792 = vpop.f32.mrf.mxu0
      %v4793 = vadd.f32 %v4029, %v4792
      %v4794 = vpop.f32.mrf.mxu0
      %v4795 = vadd.f32 %v4034, %v4794
      %v4796 = vpop.f32.mrf.mxu0
      %v4797 = vadd.f32 %v4034, %v4796
      %4798 = vmatprep.mubr.bf16.mxu0 0
      %4799 = vmatmul.mubr.bf16.gmra.mxu0 %v4701
      %v4800 = vpop.f32.mrf.mxu0
      %v4801 = vadd.f32 %v4039, %v4800
      %v4802 = vpop.f32.mrf.mxu0
      %v4803 = vadd.f32 %v4039, %v4802
      %v4804 = vpop.f32.mrf.mxu0
      %v4805 = vadd.f32 %v4044, %v4804
      %v4806 = vpop.f32.mrf.mxu0
      %v4807 = vadd.f32 %v4044, %v4806
      %4808 = vdwg.mxu0
      %4809 = vmatprep.subr.bf16.mxu0 0
      %4810 = vmatpush1.bf16.msra.mxu0 0
      %4811 = vmatprep.subr.bf16.mxu0 0
      %4812 = vmatpush1.bf16.msra.mxu0 0
      %4813 = vmatprep.subr.bf16.mxu0 0
      %4814 = vmatpush1.bf16.msra.mxu0 0
      %4815 = vmatprep.subr.bf16.mxu0 0
      %4816 = vmatpush1.bf16.msra.mxu0 0
      %4817 = vmatprep.subr.bf16.mxu0 %v4541
      %4818 = vmatpush1.bf16.msra.mxu0 %v4540
      %4819 = vmatprep.subr.bf16.mxu0 %v4509
      %4820 = vmatpush1.bf16.msra.mxu0 %v4508
      %4821 = vmatprep.subr.bf16.mxu0 %v4477
      %4822 = vmatpush1.bf16.msra.mxu0 %v4476
      %4823 = vmatprep.subr.bf16.mxu0 %v4445
      %4824 = vmatpush1.bf16.msra.mxu0 %v4444
      %4825 = vmatprep.subr.bf16.mxu0 0
      %4826 = vmatpush2.bf16.msra.mxu0 0
      %4827 = vmatprep.subr.bf16.mxu0 0
      %4828 = vmatpush2.bf16.msra.mxu0 0
      %4829 = vmatprep.subr.bf16.mxu0 0
      %4830 = vmatpush2.bf16.msra.mxu0 0
      %4831 = vmatprep.subr.bf16.mxu0 0
      %4832 = vmatpush2.bf16.msra.mxu0 0
      %4833 = vmatprep.subr.bf16.mxu0 0
      %4834 = vmatpush2.bf16.msra.mxu0 0
      %4835 = vmatprep.subr.bf16.mxu0 0
      %4836 = vmatpush2.bf16.msra.mxu0 0
      %4837 = vmatprep.subr.bf16.mxu0 0
      %4838 = vmatpush2.bf16.msra.mxu0 0
      %4839 = vmatprep.subr.bf16.mxu0 0
      %4840 = vmatpush2.bf16.msra.mxu0 0
      %4841 = vmatprep.mubr.bf16.mxu0 0
      %4842 = vmatmul.mubr.bf16.gmra.mxu0 %v4698
      %v4843 = vpop.f32.mrf.mxu0
      %v4844 = vadd.f32 %v4029, %v4843
      %v4845 = vpop.f32.mrf.mxu0
      %v4846 = vadd.f32 %v4029, %v4845
      %v4847 = vpop.f32.mrf.mxu0
      %v4848 = vadd.f32 %v4034, %v4847
      %v4849 = vpop.f32.mrf.mxu0
      %v4850 = vadd.f32 %v4034, %v4849
      %4851 = vmatprep.mubr.bf16.mxu0 0
      %4852 = vmatmul.mubr.bf16.gmra.mxu0 %v4701
      %v4853 = vpop.f32.mrf.mxu0
      %v4854 = vadd.f32 %v4039, %v4853
      %v4855 = vpop.f32.mrf.mxu0
      %v4856 = vadd.f32 %v4039, %v4855
      %v4857 = vpop.f32.mrf.mxu0
      %v4858 = vadd.f32 %v4044, %v4857
      %v4859 = vpop.f32.mrf.mxu0
      %v4860 = vadd.f32 %v4044, %v4859
      %4861 = vdwg.mxu0
      %4862 = vmatprep.subr.bf16.mxu0 0
      %4863 = vmatpush1.bf16.msra.mxu0 0
      %4864 = vmatprep.subr.bf16.mxu0 0
      %4865 = vmatpush1.bf16.msra.mxu0 0
      %4866 = vmatprep.subr.bf16.mxu0 0
      %4867 = vmatpush1.bf16.msra.mxu0 0
      %4868 = vmatprep.subr.bf16.mxu0 0
      %4869 = vmatpush1.bf16.msra.mxu0 0
      %4870 = vmatprep.subr.bf16.mxu0 %v4543
      %4871 = vmatpush1.bf16.msra.mxu0 %v4542
      %4872 = vmatprep.subr.bf16.mxu0 %v4511
      %4873 = vmatpush1.bf16.msra.mxu0 %v4510
      %4874 = vmatprep.subr.bf16.mxu0 %v4479
      %4875 = vmatpush1.bf16.msra.mxu0 %v4478
      %4876 = vmatprep.subr.bf16.mxu0 %v4447
      %4877 = vmatpush1.bf16.msra.mxu0 %v4446
      %4878 = vmatprep.subr.bf16.mxu0 0
      %4879 = vmatpush2.bf16.msra.mxu0 0
      %4880 = vmatprep.subr.bf16.mxu0 0
      %4881 = vmatpush2.bf16.msra.mxu0 0
      %4882 = vmatprep.subr.bf16.mxu0 0
      %4883 = vmatpush2.bf16.msra.mxu0 0
      %4884 = vmatprep.subr.bf16.mxu0 0
      %4885 = vmatpush2.bf16.msra.mxu0 0
      %4886 = vmatprep.subr.bf16.mxu0 0
      %4887 = vmatpush2.bf16.msra.mxu0 0
      %4888 = vmatprep.subr.bf16.mxu0 0
      %4889 = vmatpush2.bf16.msra.mxu0 0
      %4890 = vmatprep.subr.bf16.mxu0 0
      %4891 = vmatpush2.bf16.msra.mxu0 0
      %4892 = vmatprep.subr.bf16.mxu0 0
      %4893 = vmatpush2.bf16.msra.mxu0 0
      %4894 = vmatprep.mubr.bf16.mxu0 0
      %4895 = vmatmul.mubr.bf16.gmra.mxu0 %v4698
      %v4896 = vpop.f32.mrf.mxu0
      %v4897 = vadd.f32 %v4029, %v4896
      %v4898 = vpop.f32.mrf.mxu0
      %v4899 = vadd.f32 %v4029, %v4898
      %v4900 = vpop.f32.mrf.mxu0
      %v4901 = vadd.f32 %v4034, %v4900
      %v4902 = vpop.f32.mrf.mxu0
      %v4903 = vadd.f32 %v4034, %v4902
      %4904 = vmatprep.mubr.bf16.mxu0 0
      %4905 = vmatmul.mubr.bf16.gmra.mxu0 %v4701
      %v4906 = vpop.f32.mrf.mxu0
      %v4907 = vadd.f32 %v4039, %v4906
      %v4908 = vpop.f32.mrf.mxu0
      %v4909 = vadd.f32 %v4039, %v4908
      %v4910 = vpop.f32.mrf.mxu0
      %v4911 = vadd.f32 %v4044, %v4910
      %v4912 = vpop.f32.mrf.mxu0
      %v4913 = vadd.f32 %v4044, %v4912
      %4914 = vdwg.mxu0
      %4915 = vmatprep.subr.bf16.mxu0 0
      %4916 = vmatpush1.bf16.msra.mxu0 0
      %4917 = vmatprep.subr.bf16.mxu0 0
      %4918 = vmatpush1.bf16.msra.mxu0 0
      %4919 = vmatprep.subr.bf16.mxu0 0
      %4920 = vmatpush1.bf16.msra.mxu0 0
      %4921 = vmatprep.subr.bf16.mxu0 0
      %4922 = vmatpush1.bf16.msra.mxu0 0
      %4923 = vmatprep.subr.bf16.mxu0 %v4545
      %4924 = vmatpush1.bf16.msra.mxu0 %v4544
      %4925 = vmatprep.subr.bf16.mxu0 %v4513
      %4926 = vmatpush1.bf16.msra.mxu0 %v4512
      %4927 = vmatprep.subr.bf16.mxu0 %v4481
      %4928 = vmatpush1.bf16.msra.mxu0 %v4480
      %4929 = vmatprep.subr.bf16.mxu0 %v4449
      %4930 = vmatpush1.bf16.msra.mxu0 %v4448
      %4931 = vmatprep.subr.bf16.mxu0 0
      %4932 = vmatpush2.bf16.msra.mxu0 0
      %4933 = vmatprep.subr.bf16.mxu0 0
      %4934 = vmatpush2.bf16.msra.mxu0 0
      %4935 = vmatprep.subr.bf16.mxu0 0
      %4936 = vmatpush2.bf16.msra.mxu0 0
      %4937 = vmatprep.subr.bf16.mxu0 0
      %4938 = vmatpush2.bf16.msra.mxu0 0
      %4939 = vmatprep.subr.bf16.mxu0 0
      %4940 = vmatpush2.bf16.msra.mxu0 0
      %4941 = vmatprep.subr.bf16.mxu0 0
      %4942 = vmatpush2.bf16.msra.mxu0 0
      %4943 = vmatprep.subr.bf16.mxu0 0
      %4944 = vmatpush2.bf16.msra.mxu0 0
      %4945 = vmatprep.subr.bf16.mxu0 0
      %4946 = vmatpush2.bf16.msra.mxu0 0
      %4947 = vmatprep.mubr.bf16.mxu0 0
      %4948 = vmatmul.mubr.bf16.gmra.mxu0 %v4698
      %v4949 = vpop.f32.mrf.mxu0
      %v4950 = vadd.f32 %v4029, %v4949
      %v4951 = vpop.f32.mrf.mxu0
      %v4952 = vadd.f32 %v4029, %v4951
      %v4953 = vpop.f32.mrf.mxu0
      %v4954 = vadd.f32 %v4034, %v4953
      %v4955 = vpop.f32.mrf.mxu0
      %v4956 = vadd.f32 %v4034, %v4955
      %4957 = vmatprep.mubr.bf16.mxu0 0
      %4958 = vmatmul.mubr.bf16.gmra.mxu0 %v4701
      %v4959 = vpop.f32.mrf.mxu0
      %v4960 = vadd.f32 %v4039, %v4959
      %v4961 = vpop.f32.mrf.mxu0
      %v4962 = vadd.f32 %v4039, %v4961
      %v4963 = vpop.f32.mrf.mxu0
      %v4964 = vadd.f32 %v4044, %v4963
      %v4965 = vpop.f32.mrf.mxu0
      %v4966 = vadd.f32 %v4044, %v4965
      %4967 = vdwg.mxu0
      %4968 = vmatprep.subr.bf16.mxu0 0
      %4969 = vmatpush1.bf16.msra.mxu0 0
      %4970 = vmatprep.subr.bf16.mxu0 0
      %4971 = vmatpush1.bf16.msra.mxu0 0
      %4972 = vmatprep.subr.bf16.mxu0 0
      %4973 = vmatpush1.bf16.msra.mxu0 0
      %4974 = vmatprep.subr.bf16.mxu0 0
      %4975 = vmatpush1.bf16.msra.mxu0 0
      %4976 = vmatprep.subr.bf16.mxu0 %v4547
      %4977 = vmatpush1.bf16.msra.mxu0 %v4546
      %4978 = vmatprep.subr.bf16.mxu0 %v4515
      %4979 = vmatpush1.bf16.msra.mxu0 %v4514
      %4980 = vmatprep.subr.bf16.mxu0 %v4483
      %4981 = vmatpush1.bf16.msra.mxu0 %v4482
      %4982 = vmatprep.subr.bf16.mxu0 %v4451
      %4983 = vmatpush1.bf16.msra.mxu0 %v4450
      %4984 = vmatprep.subr.bf16.mxu0 0
      %4985 = vmatpush2.bf16.msra.mxu0 0
      %4986 = vmatprep.subr.bf16.mxu0 0
      %4987 = vmatpush2.bf16.msra.mxu0 0
      %4988 = vmatprep.subr.bf16.mxu0 0
      %4989 = vmatpush2.bf16.msra.mxu0 0
      %4990 = vmatprep.subr.bf16.mxu0 0
      %4991 = vmatpush2.bf16.msra.mxu0 0
      %4992 = vmatprep.subr.bf16.mxu0 0
      %4993 = vmatpush2.bf16.msra.mxu0 0
      %4994 = vmatprep.subr.bf16.mxu0 0
      %4995 = vmatpush2.bf16.msra.mxu0 0
      %4996 = vmatprep.subr.bf16.mxu0 0
      %4997 = vmatpush2.bf16.msra.mxu0 0
      %4998 = vmatprep.subr.bf16.mxu0 0
      %4999 = vmatpush2.bf16.msra.mxu0 0
      %5000 = vmatprep.mubr.bf16.mxu0 0
      %5001 = vmatmul.mubr.bf16.gmra.mxu0 %v4698
      %v5002 = vpop.f32.mrf.mxu0
      %v5003 = vadd.f32 %v4029, %v5002
      %v5004 = vpop.f32.mrf.mxu0
      %v5005 = vadd.f32 %v4029, %v5004
      %v5006 = vpop.f32.mrf.mxu0
      %v5007 = vadd.f32 %v4034, %v5006
      %v5008 = vpop.f32.mrf.mxu0
      %v5009 = vadd.f32 %v4034, %v5008
      %5010 = vmatprep.mubr.bf16.mxu0 0
      %5011 = vmatmul.mubr.bf16.gmra.mxu0 %v4701
      %v5012 = vpop.f32.mrf.mxu0
      %v5013 = vadd.f32 %v4039, %v5012
      %v5014 = vpop.f32.mrf.mxu0
      %v5015 = vadd.f32 %v4039, %v5014
      %v5016 = vpop.f32.mrf.mxu0
      %v5017 = vadd.f32 %v4044, %v5016
      %v5018 = vpop.f32.mrf.mxu0
      %v5019 = vadd.f32 %v4044, %v5018
      %5020 = vdwg.mxu0
      %5021 = vmatprep.subr.bf16.mxu0 0
      %5022 = vmatpush1.bf16.msra.mxu0 0
      %5023 = vmatprep.subr.bf16.mxu0 0
      %5024 = vmatpush1.bf16.msra.mxu0 0
      %5025 = vmatprep.subr.bf16.mxu0 0
      %5026 = vmatpush1.bf16.msra.mxu0 0
      %5027 = vmatprep.subr.bf16.mxu0 0
      %5028 = vmatpush1.bf16.msra.mxu0 0
      %5029 = vmatprep.subr.bf16.mxu0 %v4549
      %5030 = vmatpush1.bf16.msra.mxu0 %v4548
      %5031 = vmatprep.subr.bf16.mxu0 %v4517
      %5032 = vmatpush1.bf16.msra.mxu0 %v4516
      %5033 = vmatprep.subr.bf16.mxu0 %v4485
      %5034 = vmatpush1.bf16.msra.mxu0 %v4484
      %5035 = vmatprep.subr.bf16.mxu0 %v4453
      %5036 = vmatpush1.bf16.msra.mxu0 %v4452
      %5037 = vmatprep.subr.bf16.mxu0 0
      %5038 = vmatpush2.bf16.msra.mxu0 0
      %5039 = vmatprep.subr.bf16.mxu0 0
      %5040 = vmatpush2.bf16.msra.mxu0 0
      %5041 = vmatprep.subr.bf16.mxu0 0
      %5042 = vmatpush2.bf16.msra.mxu0 0
      %5043 = vmatprep.subr.bf16.mxu0 0
      %5044 = vmatpush2.bf16.msra.mxu0 0
      %5045 = vmatprep.subr.bf16.mxu0 0
      %5046 = vmatpush2.bf16.msra.mxu0 0
      %5047 = vmatprep.subr.bf16.mxu0 0
      %5048 = vmatpush2.bf16.msra.mxu0 0
      %5049 = vmatprep.subr.bf16.mxu0 0
      %5050 = vmatpush2.bf16.msra.mxu0 0
      %5051 = vmatprep.subr.bf16.mxu0 0
      %5052 = vmatpush2.bf16.msra.mxu0 0
      %5053 = vmatprep.mubr.bf16.mxu0 0
      %5054 = vmatmul.mubr.bf16.gmra.mxu0 %v4698
      %v5055 = vpop.f32.mrf.mxu0
      %v5056 = vadd.f32 %v4029, %v5055
      %v5057 = vpop.f32.mrf.mxu0
      %v5058 = vadd.f32 %v4029, %v5057
      %v5059 = vpop.f32.mrf.mxu0
      %v5060 = vadd.f32 %v4034, %v5059
      %v5061 = vpop.f32.mrf.mxu0
      %v5062 = vadd.f32 %v4034, %v5061
      %5063 = vmatprep.mubr.bf16.mxu0 0
      %5064 = vmatmul.mubr.bf16.gmra.mxu0 %v4701
      %v5065 = vpop.f32.mrf.mxu0
      %v5066 = vadd.f32 %v4039, %v5065
      %v5067 = vpop.f32.mrf.mxu0
      %v5068 = vadd.f32 %v4039, %v5067
      %v5069 = vpop.f32.mrf.mxu0
      %v5070 = vadd.f32 %v4044, %v5069
      %v5071 = vpop.f32.mrf.mxu0
      %v5072 = vadd.f32 %v4044, %v5071
      %5073 = vdwg.mxu0
      %5074 = vmatprep.subr.bf16.mxu0 0
      %5075 = vmatpush1.bf16.msra.mxu0 0
      %5076 = vmatprep.subr.bf16.mxu0 0
      %5077 = vmatpush1.bf16.msra.mxu0 0
      %5078 = vmatprep.subr.bf16.mxu0 0
      %5079 = vmatpush1.bf16.msra.mxu0 0
      %5080 = vmatprep.subr.bf16.mxu0 0
      %5081 = vmatpush1.bf16.msra.mxu0 0
      %5082 = vmatprep.subr.bf16.mxu0 %v4551
      %5083 = vmatpush1.bf16.msra.mxu0 %v4550
      %5084 = vmatprep.subr.bf16.mxu0 %v4519
      %5085 = vmatpush1.bf16.msra.mxu0 %v4518
      %5086 = vmatprep.subr.bf16.mxu0 %v4487
      %5087 = vmatpush1.bf16.msra.mxu0 %v4486
      %5088 = vmatprep.subr.bf16.mxu0 %v4455
      %5089 = vmatpush1.bf16.msra.mxu0 %v4454
      %5090 = vmatprep.subr.bf16.mxu0 0
      %5091 = vmatpush2.bf16.msra.mxu0 0
      %5092 = vmatprep.subr.bf16.mxu0 0
      %5093 = vmatpush2.bf16.msra.mxu0 0
      %5094 = vmatprep.subr.bf16.mxu0 0
      %5095 = vmatpush2.bf16.msra.mxu0 0
      %5096 = vmatprep.subr.bf16.mxu0 0
      %5097 = vmatpush2.bf16.msra.mxu0 0
      %5098 = vmatprep.subr.bf16.mxu0 0
      %5099 = vmatpush2.bf16.msra.mxu0 0
      %5100 = vmatprep.subr.bf16.mxu0 0
      %5101 = vmatpush2.bf16.msra.mxu0 0
      %5102 = vmatprep.subr.bf16.mxu0 0
      %5103 = vmatpush2.bf16.msra.mxu0 0
      %5104 = vmatprep.subr.bf16.mxu0 0
      %5105 = vmatpush2.bf16.msra.mxu0 0
      %5106 = vmatprep.mubr.bf16.mxu0 0
      %5107 = vmatmul.mubr.bf16.gmra.mxu0 %v4698
      %v5108 = vpop.f32.mrf.mxu0
      %v5109 = vadd.f32 %v4029, %v5108
      %v5110 = vpop.f32.mrf.mxu0
      %v5111 = vadd.f32 %v4029, %v5110
      %v5112 = vpop.f32.mrf.mxu0
      %v5113 = vadd.f32 %v4034, %v5112
      %v5114 = vpop.f32.mrf.mxu0
      %v5115 = vadd.f32 %v4034, %v5114
      %5116 = vmatprep.mubr.bf16.mxu0 0
      %5117 = vmatmul.mubr.bf16.gmra.mxu0 %v4701
      %v5118 = vpop.f32.mrf.mxu0
      %v5119 = vadd.f32 %v4039, %v5118
      %v5120 = vpop.f32.mrf.mxu0
      %v5121 = vadd.f32 %v4039, %v5120
      %v5122 = vpop.f32.mrf.mxu0
      %v5123 = vadd.f32 %v4044, %v5122
      %v5124 = vpop.f32.mrf.mxu0
      %v5125 = vadd.f32 %v4044, %v5124
      %5126 = vdwg.mxu0
      %5127 = vmatprep.subr.bf16.mxu0 0
      %5128 = vmatpush1.bf16.msra.mxu0 0
      %5129 = vmatprep.subr.bf16.mxu0 0
      %5130 = vmatpush1.bf16.msra.mxu0 0
      %5131 = vmatprep.subr.bf16.mxu0 0
      %5132 = vmatpush1.bf16.msra.mxu0 0
      %5133 = vmatprep.subr.bf16.mxu0 0
      %5134 = vmatpush1.bf16.msra.mxu0 0
      %5135 = vmatprep.subr.bf16.mxu0 %v4553
      %5136 = vmatpush1.bf16.msra.mxu0 %v4552
      %5137 = vmatprep.subr.bf16.mxu0 %v4521
      %5138 = vmatpush1.bf16.msra.mxu0 %v4520
      %5139 = vmatprep.subr.bf16.mxu0 %v4489
      %5140 = vmatpush1.bf16.msra.mxu0 %v4488
      %5141 = vmatprep.subr.bf16.mxu0 %v4457
      %5142 = vmatpush1.bf16.msra.mxu0 %v4456
      %5143 = vmatprep.subr.bf16.mxu0 0
      %5144 = vmatpush2.bf16.msra.mxu0 0
      %5145 = vmatprep.subr.bf16.mxu0 0
      %5146 = vmatpush2.bf16.msra.mxu0 0
      %5147 = vmatprep.subr.bf16.mxu0 0
      %5148 = vmatpush2.bf16.msra.mxu0 0
      %5149 = vmatprep.subr.bf16.mxu0 0
      %5150 = vmatpush2.bf16.msra.mxu0 0
      %5151 = vmatprep.subr.bf16.mxu0 0
      %5152 = vmatpush2.bf16.msra.mxu0 0
      %5153 = vmatprep.subr.bf16.mxu0 0
      %5154 = vmatpush2.bf16.msra.mxu0 0
      %5155 = vmatprep.subr.bf16.mxu0 0
      %5156 = vmatpush2.bf16.msra.mxu0 0
      %5157 = vmatprep.subr.bf16.mxu0 0
      %5158 = vmatpush2.bf16.msra.mxu0 0
      %5159 = vmatprep.mubr.bf16.mxu0 0
      %5160 = vmatmul.mubr.bf16.gmra.mxu0 %v4698
      %v5161 = vpop.f32.mrf.mxu0
      %v5162 = vadd.f32 %v4029, %v5161
      %v5163 = vpop.f32.mrf.mxu0
      %v5164 = vadd.f32 %v4029, %v5163
      %v5165 = vpop.f32.mrf.mxu0
      %v5166 = vadd.f32 %v4034, %v5165
      %v5167 = vpop.f32.mrf.mxu0
      %v5168 = vadd.f32 %v4034, %v5167
      %5169 = vmatprep.mubr.bf16.mxu0 0
      %5170 = vmatmul.mubr.bf16.gmra.mxu0 %v4701
      %v5171 = vpop.f32.mrf.mxu0
      %v5172 = vadd.f32 %v4039, %v5171
      %v5173 = vpop.f32.mrf.mxu0
      %v5174 = vadd.f32 %v4039, %v5173
      %v5175 = vpop.f32.mrf.mxu0
      %v5176 = vadd.f32 %v4044, %v5175
      %v5177 = vpop.f32.mrf.mxu0
      %v5178 = vadd.f32 %v4044, %v5177
      %5179 = vdwg.mxu0
      %5180 = vmatprep.subr.bf16.mxu0 0
      %5181 = vmatpush1.bf16.msra.mxu0 0
      %5182 = vmatprep.subr.bf16.mxu0 0
      %5183 = vmatpush1.bf16.msra.mxu0 0
      %5184 = vmatprep.subr.bf16.mxu0 0
      %5185 = vmatpush1.bf16.msra.mxu0 0
      %5186 = vmatprep.subr.bf16.mxu0 0
      %5187 = vmatpush1.bf16.msra.mxu0 0
      %5188 = vmatprep.subr.bf16.mxu0 %v4555
      %5189 = vmatpush1.bf16.msra.mxu0 %v4554
      %5190 = vmatprep.subr.bf16.mxu0 %v4523
      %5191 = vmatpush1.bf16.msra.mxu0 %v4522
      %5192 = vmatprep.subr.bf16.mxu0 %v4491
      %5193 = vmatpush1.bf16.msra.mxu0 %v4490
      %5194 = vmatprep.subr.bf16.mxu0 %v4459
      %5195 = vmatpush1.bf16.msra.mxu0 %v4458
      %5196 = vmatprep.subr.bf16.mxu0 0
      %5197 = vmatpush2.bf16.msra.mxu0 0
      %5198 = vmatprep.subr.bf16.mxu0 0
      %5199 = vmatpush2.bf16.msra.mxu0 0
      %5200 = vmatprep.subr.bf16.mxu0 0
      %5201 = vmatpush2.bf16.msra.mxu0 0
      %5202 = vmatprep.subr.bf16.mxu0 0
      %5203 = vmatpush2.bf16.msra.mxu0 0
      %5204 = vmatprep.subr.bf16.mxu0 0
      %5205 = vmatpush2.bf16.msra.mxu0 0
      %5206 = vmatprep.subr.bf16.mxu0 0
      %5207 = vmatpush2.bf16.msra.mxu0 0
      %5208 = vmatprep.subr.bf16.mxu0 0
      %5209 = vmatpush2.bf16.msra.mxu0 0
      %5210 = vmatprep.subr.bf16.mxu0 0
      %5211 = vmatpush2.bf16.msra.mxu0 0
      %5212 = vmatprep.mubr.bf16.mxu0 0
      %5213 = vmatmul.mubr.bf16.gmra.mxu0 %v4698
      %v5214 = vpop.f32.mrf.mxu0
      %v5215 = vadd.f32 %v4029, %v5214
      %v5216 = vpop.f32.mrf.mxu0
      %v5217 = vadd.f32 %v4029, %v5216
      %v5218 = vpop.f32.mrf.mxu0
      %v5219 = vadd.f32 %v4034, %v5218
      %v5220 = vpop.f32.mrf.mxu0
      %v5221 = vadd.f32 %v4034, %v5220
      %5222 = vmatprep.mubr.bf16.mxu0 0
      %5223 = vmatmul.mubr.bf16.gmra.mxu0 %v4701
      %v5224 = vpop.f32.mrf.mxu0
      %v5225 = vadd.f32 %v4039, %v5224
      %v5226 = vpop.f32.mrf.mxu0
      %v5227 = vadd.f32 %v4039, %v5226
      %v5228 = vpop.f32.mrf.mxu0
      %v5229 = vadd.f32 %v4044, %v5228
      %v5230 = vpop.f32.mrf.mxu0
      %v5231 = vadd.f32 %v4044, %v5230
      %5232 = vdwg.mxu0
      %5233 = vmatprep.subr.bf16.mxu0 0
      %5234 = vmatpush1.bf16.msra.mxu0 0
      %5235 = vmatprep.subr.bf16.mxu0 0
      %5236 = vmatpush1.bf16.msra.mxu0 0
      %5237 = vmatprep.subr.bf16.mxu0 0
      %5238 = vmatpush1.bf16.msra.mxu0 0
      %5239 = vmatprep.subr.bf16.mxu0 0
      %5240 = vmatpush1.bf16.msra.mxu0 0
      %5241 = vmatprep.subr.bf16.mxu0 %v4557
      %5242 = vmatpush1.bf16.msra.mxu0 %v4556
      %5243 = vmatprep.subr.bf16.mxu0 %v4525
      %5244 = vmatpush1.bf16.msra.mxu0 %v4524
      %5245 = vmatprep.subr.bf16.mxu0 %v4493
      %5246 = vmatpush1.bf16.msra.mxu0 %v4492
      %5247 = vmatprep.subr.bf16.mxu0 %v4461
      %5248 = vmatpush1.bf16.msra.mxu0 %v4460
      %5249 = vmatprep.subr.bf16.mxu0 0
      %5250 = vmatpush2.bf16.msra.mxu0 0
      %5251 = vmatprep.subr.bf16.mxu0 0
      %5252 = vmatpush2.bf16.msra.mxu0 0
      %5253 = vmatprep.subr.bf16.mxu0 0
      %5254 = vmatpush2.bf16.msra.mxu0 0
      %5255 = vmatprep.subr.bf16.mxu0 0
      %5256 = vmatpush2.bf16.msra.mxu0 0
      %5257 = vmatprep.subr.bf16.mxu0 0
      %5258 = vmatpush2.bf16.msra.mxu0 0
      %5259 = vmatprep.subr.bf16.mxu0 0
      %5260 = vmatpush2.bf16.msra.mxu0 0
      %5261 = vmatprep.subr.bf16.mxu0 0
      %5262 = vmatpush2.bf16.msra.mxu0 0
      %5263 = vmatprep.subr.bf16.mxu0 0
      %5264 = vmatpush2.bf16.msra.mxu0 0
      %5265 = vmatprep.mubr.bf16.mxu0 0
      %5266 = vmatmul.mubr.bf16.gmra.mxu0 %v4698
      %v5267 = vpop.f32.mrf.mxu0
      %v5268 = vadd.f32 %v4029, %v5267
      %v5269 = vpop.f32.mrf.mxu0
      %v5270 = vadd.f32 %v4029, %v5269
      %v5271 = vpop.f32.mrf.mxu0
      %v5272 = vadd.f32 %v4034, %v5271
      %v5273 = vpop.f32.mrf.mxu0
      %v5274 = vadd.f32 %v4034, %v5273
      %5275 = vmatprep.mubr.bf16.mxu0 0
      %5276 = vmatmul.mubr.bf16.gmra.mxu0 %v4701
      %v5277 = vpop.f32.mrf.mxu0
      %v5278 = vadd.f32 %v4039, %v5277
      %v5279 = vpop.f32.mrf.mxu0
      %v5280 = vadd.f32 %v4039, %v5279
      %v5281 = vpop.f32.mrf.mxu0
      %v5282 = vadd.f32 %v4044, %v5281
      %v5283 = vpop.f32.mrf.mxu0
      %v5284 = vadd.f32 %v4044, %v5283
      %5285 = vdwg.mxu0
      %5286 = vmatprep.subr.bf16.mxu0 0
      %5287 = vmatpush1.bf16.msra.mxu0 0
      %5288 = vmatprep.subr.bf16.mxu0 0
      %5289 = vmatpush1.bf16.msra.mxu0 0
      %5290 = vmatprep.subr.bf16.mxu0 0
      %5291 = vmatpush1.bf16.msra.mxu0 0
      %5292 = vmatprep.subr.bf16.mxu0 0
      %5293 = vmatpush1.bf16.msra.mxu0 0
      %5294 = vmatprep.subr.bf16.mxu0 %v4559
      %5295 = vmatpush1.bf16.msra.mxu0 %v4558
      %5296 = vmatprep.subr.bf16.mxu0 %v4527
      %5297 = vmatpush1.bf16.msra.mxu0 %v4526
      %5298 = vmatprep.subr.bf16.mxu0 %v4495
      %5299 = vmatpush1.bf16.msra.mxu0 %v4494
      %5300 = vmatprep.subr.bf16.mxu0 %v4463
      %5301 = vmatpush1.bf16.msra.mxu0 %v4462
      %5302 = vmatprep.subr.bf16.mxu0 0
      %5303 = vmatpush2.bf16.msra.mxu0 0
      %5304 = vmatprep.subr.bf16.mxu0 0
      %5305 = vmatpush2.bf16.msra.mxu0 0
      %5306 = vmatprep.subr.bf16.mxu0 0
      %5307 = vmatpush2.bf16.msra.mxu0 0
      %5308 = vmatprep.subr.bf16.mxu0 0
      %5309 = vmatpush2.bf16.msra.mxu0 0
      %5310 = vmatprep.subr.bf16.mxu0 0
      %5311 = vmatpush2.bf16.msra.mxu0 0
      %5312 = vmatprep.subr.bf16.mxu0 0
      %5313 = vmatpush2.bf16.msra.mxu0 0
      %5314 = vmatprep.subr.bf16.mxu0 0
      %5315 = vmatpush2.bf16.msra.mxu0 0
      %5316 = vmatprep.subr.bf16.mxu0 0
      %5317 = vmatpush2.bf16.msra.mxu0 0
      %5318 = vmatprep.mubr.bf16.mxu0 0
      %5319 = vmatmul.mubr.bf16.gmra.mxu0 %v4698
      %v5320 = vpop.f32.mrf.mxu0
      %v5321 = vadd.f32 %v4029, %v5320
      %v5322 = vpop.f32.mrf.mxu0
      %v5323 = vadd.f32 %v4029, %v5322
      %v5324 = vpop.f32.mrf.mxu0
      %v5325 = vadd.f32 %v4034, %v5324
      %v5326 = vpop.f32.mrf.mxu0
      %v5327 = vadd.f32 %v4034, %v5326
      %5328 = vmatprep.mubr.bf16.mxu0 0
      %5329 = vmatmul.mubr.bf16.gmra.mxu0 %v4701
      %v5330 = vpop.f32.mrf.mxu0
      %v5331 = vadd.f32 %v4039, %v5330
      %v5332 = vpop.f32.mrf.mxu0
      %v5333 = vadd.f32 %v4039, %v5332
      %v5334 = vpop.f32.mrf.mxu0
      %v5335 = vadd.f32 %v4044, %v5334
      %v5336 = vpop.f32.mrf.mxu0
      %v5337 = vadd.f32 %v4044, %v5336
      %5338 = vdwg.mxu0
      %5339 = vmatprep.subr.bf16.mxu0 0
      %5340 = vmatpush1.bf16.msra.mxu0 0
      %5341 = vmatprep.subr.bf16.mxu0 0
      %5342 = vmatpush1.bf16.msra.mxu0 0
      %5343 = vmatprep.subr.bf16.mxu0 0
      %5344 = vmatpush1.bf16.msra.mxu0 0
      %5345 = vmatprep.subr.bf16.mxu0 0
      %5346 = vmatpush1.bf16.msra.mxu0 0
      %5347 = vmatprep.subr.bf16.mxu0 %v4561
      %5348 = vmatpush1.bf16.msra.mxu0 %v4560
      %5349 = vmatprep.subr.bf16.mxu0 %v4529
      %5350 = vmatpush1.bf16.msra.mxu0 %v4528
      %5351 = vmatprep.subr.bf16.mxu0 %v4497
      %5352 = vmatpush1.bf16.msra.mxu0 %v4496
      %5353 = vmatprep.subr.bf16.mxu0 %v4465
      %5354 = vmatpush1.bf16.msra.mxu0 %v4464
      %5355 = vmatprep.subr.bf16.mxu0 0
      %5356 = vmatpush2.bf16.msra.mxu0 0
      %5357 = vmatprep.subr.bf16.mxu0 0
      %5358 = vmatpush2.bf16.msra.mxu0 0
      %5359 = vmatprep.subr.bf16.mxu0 0
      %5360 = vmatpush2.bf16.msra.mxu0 0
      %5361 = vmatprep.subr.bf16.mxu0 0
      %5362 = vmatpush2.bf16.msra.mxu0 0
      %5363 = vmatprep.subr.bf16.mxu0 0
      %5364 = vmatpush2.bf16.msra.mxu0 0
      %5365 = vmatprep.subr.bf16.mxu0 0
      %5366 = vmatpush2.bf16.msra.mxu0 0
      %5367 = vmatprep.subr.bf16.mxu0 0
      %5368 = vmatpush2.bf16.msra.mxu0 0
      %5369 = vmatprep.subr.bf16.mxu0 0
      %5370 = vmatpush2.bf16.msra.mxu0 0
      %5371 = vmatprep.mubr.bf16.mxu0 0
      %5372 = vmatmul.mubr.bf16.gmra.mxu0 %v4698
      %v5373 = vpop.f32.mrf.mxu0
      %v5374 = vadd.f32 %v4029, %v5373
      %v5375 = vpop.f32.mrf.mxu0
      %v5376 = vadd.f32 %v4029, %v5375
      %v5377 = vpop.f32.mrf.mxu0
      %v5378 = vadd.f32 %v4034, %v5377
      %v5379 = vpop.f32.mrf.mxu0
      %v5380 = vadd.f32 %v4034, %v5379
      %5381 = vmatprep.mubr.bf16.mxu0 0
      %5382 = vmatmul.mubr.bf16.gmra.mxu0 %v4701
      %v5383 = vpop.f32.mrf.mxu0
      %v5384 = vadd.f32 %v4039, %v5383
      %v5385 = vpop.f32.mrf.mxu0
      %v5386 = vadd.f32 %v4039, %v5385
      %v5387 = vpop.f32.mrf.mxu0
      %v5388 = vadd.f32 %v4044, %v5387
      %v5389 = vpop.f32.mrf.mxu0
      %v5390 = vadd.f32 %v4044, %v5389
      %5391 = vdwg.mxu0
      %5392 = vmatprep.subr.bf16.mxu0 0
      %5393 = vmatpush1.bf16.msra.mxu0 0
      %5394 = vmatprep.subr.bf16.mxu0 0
      %5395 = vmatpush1.bf16.msra.mxu0 0
      %5396 = vmatprep.subr.bf16.mxu0 0
      %5397 = vmatpush1.bf16.msra.mxu0 0
      %5398 = vmatprep.subr.bf16.mxu0 0
      %5399 = vmatpush1.bf16.msra.mxu0 0
      %5400 = vmatprep.subr.bf16.mxu0 %v4563
      %5401 = vmatpush1.bf16.msra.mxu0 %v4562
      %5402 = vmatprep.subr.bf16.mxu0 %v4531
      %5403 = vmatpush1.bf16.msra.mxu0 %v4530
      %5404 = vmatprep.subr.bf16.mxu0 %v4499
      %5405 = vmatpush1.bf16.msra.mxu0 %v4498
      %5406 = vmatprep.subr.bf16.mxu0 %v4467
      %5407 = vmatpush1.bf16.msra.mxu0 %v4466
      %5408 = vmatprep.subr.bf16.mxu0 0
      %5409 = vmatpush2.bf16.msra.mxu0 0
      %5410 = vmatprep.subr.bf16.mxu0 0
      %5411 = vmatpush2.bf16.msra.mxu0 0
      %5412 = vmatprep.subr.bf16.mxu0 0
      %5413 = vmatpush2.bf16.msra.mxu0 0
      %5414 = vmatprep.subr.bf16.mxu0 0
      %5415 = vmatpush2.bf16.msra.mxu0 0
      %5416 = vmatprep.subr.bf16.mxu0 0
      %5417 = vmatpush2.bf16.msra.mxu0 0
      %5418 = vmatprep.subr.bf16.mxu0 0
      %5419 = vmatpush2.bf16.msra.mxu0 0
      %5420 = vmatprep.subr.bf16.mxu0 0
      %5421 = vmatpush2.bf16.msra.mxu0 0
      %5422 = vmatprep.subr.bf16.mxu0 0
      %5423 = vmatpush2.bf16.msra.mxu0 0
      %5424 = vmatprep.mubr.bf16.mxu0 0
      %5425 = vmatmul.mubr.bf16.gmra.mxu0 %v4698
      %v5426 = vpop.f32.mrf.mxu0
      %v5427 = vadd.f32 %v4029, %v5426
      %v5428 = vpop.f32.mrf.mxu0
      %v5429 = vadd.f32 %v4029, %v5428
      %v5430 = vpop.f32.mrf.mxu0
      %v5431 = vadd.f32 %v4034, %v5430
      %v5432 = vpop.f32.mrf.mxu0
      %v5433 = vadd.f32 %v4034, %v5432
      %5434 = vmatprep.mubr.bf16.mxu0 0
      %5435 = vmatmul.mubr.bf16.gmra.mxu0 %v4701
      %v5436 = vpop.f32.mrf.mxu0
      %v5437 = vadd.f32 %v4039, %v5436
      %v5438 = vpop.f32.mrf.mxu0
      %v5439 = vadd.f32 %v4039, %v5438
      %v5440 = vpop.f32.mrf.mxu0
      %v5441 = vadd.f32 %v4044, %v5440
      %v5442 = vpop.f32.mrf.mxu0
      %v5443 = vadd.f32 %v4044, %v5442
      %5444 = vdwg.mxu0
      %5445 = vmatprep.subr.bf16.mxu0 0
      %5446 = vmatpush1.bf16.msra.mxu0 0
      %5447 = vmatprep.subr.bf16.mxu0 0
      %5448 = vmatpush1.bf16.msra.mxu0 0
      %5449 = vmatprep.subr.bf16.mxu0 0
      %5450 = vmatpush1.bf16.msra.mxu0 0
      %5451 = vmatprep.subr.bf16.mxu0 0
      %5452 = vmatpush1.bf16.msra.mxu0 0
      %5453 = vmatprep.subr.bf16.mxu0 %v4565
      %5454 = vmatpush1.bf16.msra.mxu0 %v4564
      %5455 = vmatprep.subr.bf16.mxu0 %v4533
      %5456 = vmatpush1.bf16.msra.mxu0 %v4532
      %5457 = vmatprep.subr.bf16.mxu0 %v4501
      %5458 = vmatpush1.bf16.msra.mxu0 %v4500
      %5459 = vmatprep.subr.bf16.mxu0 %v4469
      %5460 = vmatpush1.bf16.msra.mxu0 %v4468
      %5461 = vmatprep.subr.bf16.mxu0 0
      %5462 = vmatpush2.bf16.msra.mxu0 0
      %5463 = vmatprep.subr.bf16.mxu0 0
      %5464 = vmatpush2.bf16.msra.mxu0 0
      %5465 = vmatprep.subr.bf16.mxu0 0
      %5466 = vmatpush2.bf16.msra.mxu0 0
      %5467 = vmatprep.subr.bf16.mxu0 0
      %5468 = vmatpush2.bf16.msra.mxu0 0
      %5469 = vmatprep.subr.bf16.mxu0 0
      %5470 = vmatpush2.bf16.msra.mxu0 0
      %5471 = vmatprep.subr.bf16.mxu0 0
      %5472 = vmatpush2.bf16.msra.mxu0 0
      %5473 = vmatprep.subr.bf16.mxu0 0
      %5474 = vmatpush2.bf16.msra.mxu0 0
      %5475 = vmatprep.subr.bf16.mxu0 0
      %5476 = vmatpush2.bf16.msra.mxu0 0
      %5477 = vmatprep.mubr.bf16.mxu0 0
      %5478 = vmatmul.mubr.bf16.gmra.mxu0 %v4698
      %v5479 = vpop.f32.mrf.mxu0
      %v5480 = vadd.f32 %v4029, %v5479
      %v5481 = vpop.f32.mrf.mxu0
      %v5482 = vadd.f32 %v4029, %v5481
      %v5483 = vpop.f32.mrf.mxu0
      %v5484 = vadd.f32 %v4034, %v5483
      %v5485 = vpop.f32.mrf.mxu0
      %v5486 = vadd.f32 %v4034, %v5485
      %5487 = vmatprep.mubr.bf16.mxu0 0
      %5488 = vmatmul.mubr.bf16.gmra.mxu0 %v4701
      %v5489 = vpop.f32.mrf.mxu0
      %v5490 = vadd.f32 %v4039, %v5489
      %v5491 = vpop.f32.mrf.mxu0
      %v5492 = vadd.f32 %v4039, %v5491
      %v5493 = vpop.f32.mrf.mxu0
      %v5494 = vadd.f32 %v4044, %v5493
      %v5495 = vpop.f32.mrf.mxu0
      %v5496 = vadd.f32 %v4044, %v5495
      %5497 = vdwg.mxu0
      %5498 = vmatprep.subr.bf16.mxu0 0
      %5499 = vmatpush1.bf16.msra.mxu0 0
      %5500 = vmatprep.subr.bf16.mxu0 0
      %5501 = vmatpush1.bf16.msra.mxu0 0
      %5502 = vmatprep.subr.bf16.mxu0 0
      %5503 = vmatpush1.bf16.msra.mxu0 0
      %5504 = vmatprep.subr.bf16.mxu0 0
      %5505 = vmatpush1.bf16.msra.mxu0 0
      %5506 = vmatprep.subr.bf16.mxu0 %v4567
      %5507 = vmatpush1.bf16.msra.mxu0 %v4566
      %5508 = vmatprep.subr.bf16.mxu0 %v4535
      %5509 = vmatpush1.bf16.msra.mxu0 %v4534
      %5510 = vmatprep.subr.bf16.mxu0 %v4503
      %5511 = vmatpush1.bf16.msra.mxu0 %v4502
      %5512 = vmatprep.subr.bf16.mxu0 %v4471
      %5513 = vmatpush1.bf16.msra.mxu0 %v4470
      %5514 = vmatprep.subr.bf16.mxu0 0
      %5515 = vmatpush2.bf16.msra.mxu0 0
      %5516 = vmatprep.subr.bf16.mxu0 0
      %5517 = vmatpush2.bf16.msra.mxu0 0
      %5518 = vmatprep.subr.bf16.mxu0 0
      %5519 = vmatpush2.bf16.msra.mxu0 0
      %5520 = vmatprep.subr.bf16.mxu0 0
      %5521 = vmatpush2.bf16.msra.mxu0 0
      %5522 = vmatprep.subr.bf16.mxu0 0
      %5523 = vmatpush2.bf16.msra.mxu0 0
      %5524 = vmatprep.subr.bf16.mxu0 0
      %5525 = vmatpush2.bf16.msra.mxu0 0
      %5526 = vmatprep.subr.bf16.mxu0 0
      %5527 = vmatpush2.bf16.msra.mxu0 0
      %5528 = vmatprep.subr.bf16.mxu0 0
      %5529 = vmatpush2.bf16.msra.mxu0 0
      %5530 = vmatprep.mubr.bf16.mxu0 0
      %5531 = vmatmul.mubr.bf16.gmra.mxu0 %v4698
      %v5532 = vpop.f32.mrf.mxu0
      %v5533 = vadd.f32 %v4029, %v5532
      %v5534 = vpop.f32.mrf.mxu0
      %v5535 = vadd.f32 %v4029, %v5534
      %v5536 = vpop.f32.mrf.mxu0
      %v5537 = vadd.f32 %v4034, %v5536
      %v5538 = vpop.f32.mrf.mxu0
      %v5539 = vadd.f32 %v4034, %v5538
      %5540 = vmatprep.mubr.bf16.mxu0 0
      %5541 = vmatmul.mubr.bf16.gmra.mxu0 %v4701
      %v5542 = vpop.f32.mrf.mxu0
      %v5543 = vadd.f32 %v4039, %v5542
      %v5544 = vpop.f32.mrf.mxu0
      %v5545 = vadd.f32 %v4039, %v5544
      %v5546 = vpop.f32.mrf.mxu0
      %v5547 = vadd.f32 %v4044, %v5546
      %v5548 = vpop.f32.mrf.mxu0
      %v5549 = vadd.f32 %v4044, %v5548
      %5550 = vdwg.mxu0
      %5551 = vst [vmem:[%s262] sm:$0xff] %v4738
      %5552 = vst [vmem:[%s262 + $0x8] sm:$0xff] %v4740
      %5553 = vst [vmem:[%s262 + $0x10] sm:$0xff] %v4791
      %5554 = vst [vmem:[%s262 + $0x18] sm:$0xff] %v4793
      %5555 = vst [vmem:[%s262 + $0x20] sm:$0xff] %v4844
      %5556 = vst [vmem:[%s262 + $0x28] sm:$0xff] %v4846
      %5557 = vst [vmem:[%s262 + $0x30] sm:$0xff] %v4897
      %5558 = vst [vmem:[%s262 + $0x38] sm:$0xff] %v4899
      %5559 = vst [vmem:[%s262 + $0x40] sm:$0xff] %v4950
      %5560 = vst [vmem:[%s262 + $0x48] sm:$0xff] %v4952
      %5561 = vst [vmem:[%s262 + $0x50] sm:$0xff] %v5003
      %5562 = vst [vmem:[%s262 + $0x58] sm:$0xff] %v5005
      %5563 = vst [vmem:[%s262 + $0x60] sm:$0xff] %v5056
      %5564 = vst [vmem:[%s262 + $0x68] sm:$0xff] %v5058
      %5565 = vst [vmem:[%s262 + $0x70] sm:$0xff] %v5109
      %5566 = vst [vmem:[%s262 + $0x78] sm:$0xff] %v5111
      %5567 = vst [vmem:[%s262 + $0x80] sm:$0xff] %v5162
      %5568 = vst [vmem:[%s262 + $0x88] sm:$0xff] %v5164
      %5569 = vst [vmem:[%s262 + $0x90] sm:$0xff] %v5215
      %5570 = vst [vmem:[%s262 + $0x98] sm:$0xff] %v5217
      %5571 = vst [vmem:[%s262 + $0xa0] sm:$0xff] %v5268
      %5572 = vst [vmem:[%s262 + $0xa8] sm:$0xff] %v5270
      %5573 = vst [vmem:[%s262 + $0xb0] sm:$0xff] %v5321
      %5574 = vst [vmem:[%s262 + $0xb8] sm:$0xff] %v5323
      %5575 = vst [vmem:[%s262 + $0xc0] sm:$0xff] %v5374
      %5576 = vst [vmem:[%s262 + $0xc8] sm:$0xff] %v5376
      %5577 = vst [vmem:[%s262 + $0xd0] sm:$0xff] %v5427
      %5578 = vst [vmem:[%s262 + $0xd8] sm:$0xff] %v5429
      %5579 = vst [vmem:[%s262 + $0xe0] sm:$0xff] %v5480
      %5580 = vst [vmem:[%s262 + $0xe8] sm:$0xff] %v5482
      %5581 = vst [vmem:[%s262 + $0xf0] sm:$0xff] %v5533
      %5582 = vst [vmem:[%s262 + $0xf8] sm:$0xff] %v5535
      %5583 = vst [vmem:[%s262 + $0x100] sm:$0xff] %v4742
      %5584 = vst [vmem:[%s262 + $0x108] sm:$0xff] %v4744
      %5585 = vst [vmem:[%s262 + $0x110] sm:$0xff] %v4795
      %5586 = vst [vmem:[%s262 + $0x118] sm:$0xff] %v4797
      %5587 = vst [vmem:[%s262 + $0x120] sm:$0xff] %v4848
      %5588 = vst [vmem:[%s262 + $0x128] sm:$0xff] %v4850
      %5589 = vst [vmem:[%s262 + $0x130] sm:$0xff] %v4901
      %5590 = vst [vmem:[%s262 + $0x138] sm:$0xff] %v4903
      %5591 = vst [vmem:[%s262 + $0x140] sm:$0xff] %v4954
      %5592 = vst [vmem:[%s262 + $0x148] sm:$0xff] %v4956
      %5593 = vst [vmem:[%s262 + $0x150] sm:$0xff] %v5007
      %5594 = vst [vmem:[%s262 + $0x158] sm:$0xff] %v5009
      %5595 = vst [vmem:[%s262 + $0x160] sm:$0xff] %v5060
      %5596 = vst [vmem:[%s262 + $0x168] sm:$0xff] %v5062
      %5597 = vst [vmem:[%s262 + $0x170] sm:$0xff] %v5113
      %5598 = vst [vmem:[%s262 + $0x178] sm:$0xff] %v5115
      %5599 = vst [vmem:[%s262 + $0x180] sm:$0xff] %v5166
      %5600 = vst [vmem:[%s262 + $0x188] sm:$0xff] %v5168
      %5601 = vst [vmem:[%s262 + $0x190] sm:$0xff] %v5219
      %5602 = vst [vmem:[%s262 + $0x198] sm:$0xff] %v5221
      %5603 = vst [vmem:[%s262 + $0x1a0] sm:$0xff] %v5272
      %5604 = vst [vmem:[%s262 + $0x1a8] sm:$0xff] %v5274
      %5605 = vst [vmem:[%s262 + $0x1b0] sm:$0xff] %v5325
      %5606 = vst [vmem:[%s262 + $0x1b8] sm:$0xff] %v5327
      %5607 = vst [vmem:[%s262 + $0x1c0] sm:$0xff] %v5378
      %5608 = vst [vmem:[%s262 + $0x1c8] sm:$0xff] %v5380
      %5609 = vst [vmem:[%s262 + $0x1d0] sm:$0xff] %v5431
      %5610 = vst [vmem:[%s262 + $0x1d8] sm:$0xff] %v5433
      %5611 = vst [vmem:[%s262 + $0x1e0] sm:$0xff] %v5484
      %5612 = vst [vmem:[%s262 + $0x1e8] sm:$0xff] %v5486
      %5613 = vst [vmem:[%s262 + $0x1f0] sm:$0xff] %v5537
      %5614 = vst [vmem:[%s262 + $0x1f8] sm:$0xff] %v5539
      %5615 = vst [vmem:[%s262 + $0x200] sm:$0xff] %v4748
      %5616 = vst [vmem:[%s262 + $0x208] sm:$0xff] %v4750
      %5617 = vst [vmem:[%s262 + $0x210] sm:$0xff] %v4801
      %5618 = vst [vmem:[%s262 + $0x218] sm:$0xff] %v4803
      %5619 = vst [vmem:[%s262 + $0x220] sm:$0xff] %v4854
      %5620 = vst [vmem:[%s262 + $0x228] sm:$0xff] %v4856
      %5621 = vst [vmem:[%s262 + $0x230] sm:$0xff] %v4907
      %5622 = vst [vmem:[%s262 + $0x238] sm:$0xff] %v4909
      %5623 = vst [vmem:[%s262 + $0x240] sm:$0xff] %v4960
      %5624 = vst [vmem:[%s262 + $0x248] sm:$0xff] %v4962
      %5625 = vst [vmem:[%s262 + $0x250] sm:$0xff] %v5013
      %5626 = vst [vmem:[%s262 + $0x258] sm:$0xff] %v5015
      %5627 = vst [vmem:[%s262 + $0x260] sm:$0xff] %v5066
      %5628 = vst [vmem:[%s262 + $0x268] sm:$0xff] %v5068
      %5629 = vst [vmem:[%s262 + $0x270] sm:$0xff] %v5119
      %5630 = vst [vmem:[%s262 + $0x278] sm:$0xff] %v5121
      %5631 = vst [vmem:[%s262 + $0x280] sm:$0xff] %v5172
      %5632 = vst [vmem:[%s262 + $0x288] sm:$0xff] %v5174
      %5633 = vst [vmem:[%s262 + $0x290] sm:$0xff] %v5225
      %5634 = vst [vmem:[%s262 + $0x298] sm:$0xff] %v5227
      %5635 = vst [vmem:[%s262 + $0x2a0] sm:$0xff] %v5278
      %5636 = vst [vmem:[%s262 + $0x2a8] sm:$0xff] %v5280
      %5637 = vst [vmem:[%s262 + $0x2b0] sm:$0xff] %v5331
      %5638 = vst [vmem:[%s262 + $0x2b8] sm:$0xff] %v5333
      %5639 = vst [vmem:[%s262 + $0x2c0] sm:$0xff] %v5384
      %5640 = vst [vmem:[%s262 + $0x2c8] sm:$0xff] %v5386
      %5641 = vst [vmem:[%s262 + $0x2d0] sm:$0xff] %v5437
      %5642 = vst [vmem:[%s262 + $0x2d8] sm:$0xff] %v5439
      %5643 = vst [vmem:[%s262 + $0x2e0] sm:$0xff] %v5490
      %5644 = vst [vmem:[%s262 + $0x2e8] sm:$0xff] %v5492
      %5645 = vst [vmem:[%s262 + $0x2f0] sm:$0xff] %v5543
      %5646 = vst [vmem:[%s262 + $0x2f8] sm:$0xff] %v5545
      %5647 = vst [vmem:[%s262 + $0x300] sm:$0xff] %v4752
      %5648 = vst [vmem:[%s262 + $0x308] sm:$0xff] %v4754
      %5649 = vst [vmem:[%s262 + $0x310] sm:$0xff] %v4805
      %5650 = vst [vmem:[%s262 + $0x318] sm:$0xff] %v4807
      %5651 = vst [vmem:[%s262 + $0x320] sm:$0xff] %v4858
      %5652 = vst [vmem:[%s262 + $0x328] sm:$0xff] %v4860
      %5653 = vst [vmem:[%s262 + $0x330] sm:$0xff] %v4911
      %5654 = vst [vmem:[%s262 + $0x338] sm:$0xff] %v4913
      %5655 = vst [vmem:[%s262 + $0x340] sm:$0xff] %v4964
      %5656 = vst [vmem:[%s262 + $0x348] sm:$0xff] %v4966
      %5657 = vst [vmem:[%s262 + $0x350] sm:$0xff] %v5017
      %5658 = vst [vmem:[%s262 + $0x358] sm:$0xff] %v5019
      %5659 = vst [vmem:[%s262 + $0x360] sm:$0xff] %v5070
      %5660 = vst [vmem:[%s262 + $0x368] sm:$0xff] %v5072
      %5661 = vst [vmem:[%s262 + $0x370] sm:$0xff] %v5123
      %5662 = vst [vmem:[%s262 + $0x378] sm:$0xff] %v5125
      %5663 = vst [vmem:[%s262 + $0x380] sm:$0xff] %v5176
      %5664 = vst [vmem:[%s262 + $0x388] sm:$0xff] %v5178
      %5665 = vst [vmem:[%s262 + $0x390] sm:$0xff] %v5229
      %5666 = vst [vmem:[%s262 + $0x398] sm:$0xff] %v5231
      %5667 = vst [vmem:[%s262 + $0x3a0] sm:$0xff] %v5282
      %5668 = vst [vmem:[%s262 + $0x3a8] sm:$0xff] %v5284
      %5669 = vst [vmem:[%s262 + $0x3b0] sm:$0xff] %v5335
      %5670 = vst [vmem:[%s262 + $0x3b8] sm:$0xff] %v5337
      %5671 = vst [vmem:[%s262 + $0x3c0] sm:$0xff] %v5388
      %5672 = vst [vmem:[%s262 + $0x3c8] sm:$0xff] %v5390
      %5673 = vst [vmem:[%s262 + $0x3d0] sm:$0xff] %v5441
      %5674 = vst [vmem:[%s262 + $0x3d8] sm:$0xff] %v5443
      %5675 = vst [vmem:[%s262 + $0x3e0] sm:$0xff] %v5494
      %5676 = vst [vmem:[%s262 + $0x3e8] sm:$0xff] %v5496
      %5677 = vst [vmem:[%s262 + $0x3f0] sm:$0xff] %v5547
      %5678 = vst [vmem:[%s262 + $0x3f8] sm:$0xff] %v5549
      %s5679 = smul.u32 32, %s21
      %p5680 = scmp.lt.s32.totalorder %s20, 1
      %s5681 = scalar_select %p5680, %s20, 1
      %p5682 = scmp.lt.s32.totalorder %s5679, 31
      %s5683 = scalar_select %p5682, %s5679, 31
      %s5684 = smul.addr %s5681, 128
      %s5685 = sadd.s32 %s5683, %s5684
      %s5686 = smul.addr %s5685, 8
      %s5687 = scalar_lea.vmem %s5, %s5686
      // Predicated region
      $region41: #{mlp_channel.1} parent=39 // pred_check
        %p5688 = pneg %p160
      $region42: #{mlp_channel.1} parent=39 // pred_check_branch
        %5690 = sbr.rel (%p5688) target = $region44
      $region43: #{mlp_channel.1} parent=39 // pred_region
        %s5691 = smul.u32 32, %s21
      $region44: #{mlp_channel.1} parent=39 // pred_fallthru
        _
    $region40: #{mlp_channel.1} parent=5 // pred_fallthru
      _
    %p5692 = scmp.le.s32.totalorder 2, %s11
    // Predicated region
    $region45: #{mlp_channel.1} parent=5 // pred_check
      %p5693 = pneg %p5692
    $region46: #{mlp_channel.1} parent=5 // pred_check_branch
      %5695 = sbr.rel (%p5693) target = $region48
    $region47: #{mlp_channel.1} parent=5 // pred_region
      %s5696 = ssub.s32 %s11, 2
      // Predicated region
      $region49: #{mlp_channel.1} parent=47 // pred_check
        %p5697 = pneg %p166
      $region50: #{mlp_channel.1} parent=47 // pred_check_branch
        %5699 = sbr.rel (%p5697) target = $region52
      $region51: #{mlp_channel.1} parent=47 // pred_region
        %s5700 = smul.u32 32, %s23
        %p5701 = scmp.lt.s32.totalorder %s22, 1
        %s5702 = scalar_select %p5701, %s22, 1
        %p5703 = scmp.lt.s32.totalorder %s5700, 31
        %s5704 = scalar_select %p5703, %s5700, 31
        %s5705 = smul.addr %s5702, 128
        %s5706 = sadd.s32 %s5704, %s5705
        %s5707 = smul.addr %s5706, 8
        %s5708 = scalar_lea.vmem %s5, %s5707
      $region52: #{mlp_channel.1} parent=47 // pred_fallthru
        _
    $region48: #{mlp_channel.1} parent=5 // pred_fallthru
      _
  $region6: #{mlp_channel.1} parent=0 // loop_footer
    %s15 = sadd.s32 1, %s11
  $region7: #{mlp_channel.1} parent=0 // loop_footer_branch
    %10 = sbr.rel target = $region3
  $region8: #{mlp_channel.1} parent=0 // loop_exit
    _

</llo_original>
